<compile_context>
chip_gen: v6e
topology: v6e:2x2x1
jax: 0.10.0
libtpu: 0.0.40
codegen_flags: <defaults>
</compile_context>

<pallas_src>
import functools

import jax
import jax.numpy as jnp
from jax.experimental import pallas as pl
from jax.experimental.pallas import tpu as pltpu


def _vmem_limit_bytes() -> int:
    """Generation-aware scoped-VMEM limit (~75% of physical VMEM, sane bounds)."""
    cap = 64 * 1024 * 1024  # conservative default = v7x per-core VMEM
    try:
        info = pltpu.get_tpu_info()
        cap = int(getattr(info, "vmem_capacity_bytes", cap)) or cap
    except Exception:  # API drift / no TPU visible at import: keep default
        pass
    return max(32 * 1024 * 1024, min((cap * 3) // 4, 112 * 1024 * 1024))


_VMEM_LIMIT_BYTES = _vmem_limit_bytes()

# Interior origin of the padded conv plane in scratch: sublane/lane aligned so the
# plane *stores* need no data shifting; only the 49 tap *loads* are offset.
_ROW_OFF = 8     # >= pad(3), multiple of 8
_COL_OFF = 128   # >= pad(3), multiple of 128


def _pick_hw_tile(hw: int, c: int, itemsize: int) -> int:
    """Lane tile for the streaming passes: ~4-8 MiB per (C, T) block, T % 128 == 0."""
    target_bytes = max(2 << 20, min(8 << 20, _VMEM_LIMIT_BYTES // 12))
    t = (target_bytes // max(1, c * itemsize)) // 128 * 128
    t = max(t, 512)
    return hw if t >= hw else t


# ---------------------------------------------------------------------------
# Shared helper: direct 7x7 conv (pad=3) + bias + sigmoid on the VPU/EUP.
# ---------------------------------------------------------------------------
def _conv7x7_sigmoid(p_max, p_mean, w_ref, b_ref, pad_ref):
    """p_max/p_mean: (H, W) f32.  w_ref: SMEM (98,) f32 (flattened OIHW weights of
    Conv2d(2,1,7)).  b_ref: SMEM (1,) f32.  pad_ref: VMEM (2, H+_ROW_OFF+3,
    W+_COL_OFF+3) f32 scratch holding the zero-padded pooled planes."""
    h, w = p_max.shape
    # Zero border (and unused margin), then drop the planes at the aligned origin.
    pad_ref[...] = jnp.zeros_like(pad_ref)
    pad_ref[0, _ROW_OFF:_ROW_OFF + h, _COL_OFF:_COL_OFF + w] = p_max
    pad_ref[1, _ROW_OFF:_ROW_OFF + h, _COL_OFF:_COL_OFF + w] = p_mean

    acc = jnp.zeros((h, w), jnp.float32) + b_ref[0]
    for cin in range(2):                       # 98 unrolled shifted FMAs (VPU)
        for ky in range(7):
            r0 = _ROW_OFF + ky - 3
            for kx in range(7):
                c0 = _COL_OFF + kx - 3
                tap = pad_ref[cin, r0:r0 + h, c0:c0 + w]
                acc = acc + w_ref[cin * 49 + ky * 7 + kx] * tap
    return jax.nn.sigmoid(acc)                 # EUP


# ---------------------------------------------------------------------------
# Fused single-pass kernel: pool + conv + sigmoid + gate multiply, per batch.
# ---------------------------------------------------------------------------
def fused_gate_kernel(w_ref, b_ref, x_ref, o_ref, pad_ref):
    # w_ref: SMEM (98,), b_ref: SMEM (1,), x_ref/o_ref: (1, C, H, W)
    x = x_ref[0].astype(jnp.float32)                      # (C, H, W)
    c = x.shape[0]
    p_max = jnp.max(x, axis=0)                            # (H, W)
    p_mean = jnp.sum(x, axis=0) * (1.0 / c)               # multiply, not divide
    gate = _conv7x7_sigmoid(p_max, p_mean, w_ref, b_ref, pad_ref)   # (H, W) f32
    o_ref[...] = (x * gate[None, :, :])[None].astype(o_ref.dtype)


# ---------------------------------------------------------------------------
# Fallback pass 1: ChannelPool — max / mean over channels, tiled over H*W.
# ---------------------------------------------------------------------------
def channel_pool_kernel(x_ref, max_ref, mean_ref):
    # x_ref: (1, C, T); max_ref/mean_ref: (1, 1, T)
    x = x_ref[0].astype(jnp.float32)                      # (C, T)
    c = x.shape[0]
    max_ref[...] = jnp.max(x, axis=0, keepdims=True)[None]
    mean_ref[...] = (jnp.sum(x, axis=0, keepdims=True) * (1.0 / c))[None]


# ---------------------------------------------------------------------------
# Fallback pass 2: direct 7x7 conv + bias + sigmoid -> gate map (x.dtype).
# ---------------------------------------------------------------------------
def spatial_conv_kernel(w_ref, b_ref, pmax_ref, pmean_ref, s_ref, pad_ref):
    gate = _conv7x7_sigmoid(pmax_ref[0], pmean_ref[0], w_ref, b_ref, pad_ref)
    s_ref[...] = gate[None].astype(s_ref.dtype)


# ---------------------------------------------------------------------------
# Fallback pass 3: apply the gate — lane-dense tiled load / multiply / store.
# ---------------------------------------------------------------------------
def apply_gate_kernel(x_ref, s_ref, o_ref):
    # x_ref: (1, C, T); s_ref: (1, 1, T); o_ref: (1, C, T)
    x = x_ref[...].astype(jnp.float32)
    s = s_ref[...].astype(jnp.float32)
    o_ref[...] = (x * s).astype(o_ref.dtype)


@functools.partial(jax.jit, static_argnames=("force_three_pass",))
def spatial_gate(x, conv_w, conv_b, *, force_three_pass=False):
    """x: (B, C, H, W). conv_w: (1, 2, 7, 7) (PyTorch OIHW). conv_b: (1,)."""
    B, C, H, W = x.shape
    HW = H * W
    itemsize = jnp.dtype(x.dtype).itemsize
    w_flat = conv_w.reshape(98).astype(jnp.float32)
    bias = conv_b.reshape(1).astype(jnp.float32)
    pad_scratch = pltpu.VMEM((2, H + _ROW_OFF + 3, W + _COL_OFF + 3), jnp.float32)

    # Per-batch residency estimate for the fused path:
    # 2x in + 2x out BlockSpec buffers (x dtype) + ~3 f32-sized in-kernel temps.
    per_batch_est = 4 * C * HW * itemsize + 3 * C * HW * 4
    use_fused = (not force_three_pass) and per_batch_est <= int(0.6 * _VMEM_LIMIT_BYTES)

    if use_fused:
        # Note: grid has only B steps; with B >= 2 v7x's two TensorCores split it.
        return pl.pallas_call(
            fused_gate_kernel,
            out_shape=jax.ShapeDtypeStruct((B, C, H, W), x.dtype),
            grid=(B,),
            in_specs=[pl.BlockSpec(memory_space=pltpu.MemorySpace.SMEM),
                      pl.BlockSpec(memory_space=pltpu.MemorySpace.SMEM),
                      pl.BlockSpec((1, C, H, W), lambda b: (b, 0, 0, 0))],
            out_specs=pl.BlockSpec((1, C, H, W), lambda b: (b, 0, 0, 0)),
            scratch_shapes=[pad_scratch],
            compiler_params=pltpu.CompilerParams(
                dimension_semantics=("parallel",),
                vmem_limit_bytes=_VMEM_LIMIT_BYTES),
            cost_estimate=pl.CostEstimate(
                flops=int(B * HW * (3 * C + 98)),
                transcendentals=int(B * HW),
                bytes_accessed=int(2 * B * C * HW * itemsize)),
        )(w_flat, bias, x)

    # ------------------- fallback: 3 streaming passes -------------------
    T = _pick_hw_tile(HW, C, itemsize)
    n_t = pl.cdiv(HW, T)
    x_flat = x.reshape(B, C, HW)

    # pass 1: channel pooling
    pool_max, pool_mean = pl.pallas_call(
        channel_pool_kernel,
        out_shape=(jax.ShapeDtypeStruct((B, 1, HW), jnp.float32),
                   jax.ShapeDtypeStruct((B, 1, HW), jnp.float32)),
        grid=(B, n_t),
        in_specs=[pl.BlockSpec((1, C, T), lambda b, t: (b, 0, t))],
        out_specs=(pl.BlockSpec((1, 1, T), lambda b, t: (b, 0, t)),
                   pl.BlockSpec((1, 1, T), lambda b, t: (b, 0, t))),
        compiler_params=pltpu.CompilerParams(
            dimension_semantics=("parallel", "parallel"),
            vmem_limit_bytes=_VMEM_LIMIT_BYTES),
        cost_estimate=pl.CostEstimate(
            flops=int(2 * B * C * HW), transcendentals=0,
            bytes_accessed=int(B * C * HW * itemsize + 8 * B * HW)),
    )(x_flat)

    # pass 2: direct 7x7 conv + sigmoid (tiny; gate emitted in x.dtype)
    scale2d = pl.pallas_call(
        spatial_conv_kernel,
        out_shape=jax.ShapeDtypeStruct((B, H, W), x.dtype),
        grid=(B,),
        in_specs=[pl.BlockSpec(memory_space=pltpu.MemorySpace.SMEM),
                  pl.BlockSpec(memory_space=pltpu.MemorySpace.SMEM),
                  pl.BlockSpec((1, H, W), lambda b: (b, 0, 0)),
                  pl.BlockSpec((1, H, W), lambda b: (b, 0, 0))],
        out_specs=pl.BlockSpec((1, H, W), lambda b: (b, 0, 0)),
        scratch_shapes=[pad_scratch],
        compiler_params=pltpu.CompilerParams(
            dimension_semantics=("parallel",),
            vmem_limit_bytes=_VMEM_LIMIT_BYTES),
        cost_estimate=pl.CostEstimate(
            flops=int(98 * B * HW), transcendentals=int(B * HW),
            bytes_accessed=int(8 * B * HW + B * HW * itemsize)),
    )(w_flat, bias, pool_max.reshape(B, H, W), pool_mean.reshape(B, H, W))

    # pass 3: x * gate
    out_flat = pl.pallas_call(
        apply_gate_kernel,
        out_shape=jax.ShapeDtypeStruct((B, C, HW), x.dtype),
        grid=(B, n_t),
        in_specs=[pl.BlockSpec((1, C, T), lambda b, t: (b, 0, t)),
                  pl.BlockSpec((1, 1, T), lambda b, t: (b, 0, t))],
        out_specs=pl.BlockSpec((1, C, T), lambda b, t: (b, 0, t)),
        compiler_params=pltpu.CompilerParams(
            dimension_semantics=("parallel", "parallel"),
            vmem_limit_bytes=_VMEM_LIMIT_BYTES),
        cost_estimate=pl.CostEstimate(
            flops=int(B * C * HW), transcendentals=0,
            bytes_accessed=int((2 * B * C * HW + B * HW) * itemsize)),
    )(x_flat, scale2d.reshape(B, 1, HW))

    return out_flat.reshape(B, C, H, W)


def spatial_gate_ref(x, conv_w, conv_b):
    """Pure-JAX reference replicating the PyTorch SpatialGate.forward exactly."""
    B, C, H, W = x.shape
    mx = jnp.max(x, axis=1)                         # ChannelPool: [max, mean]
    mn = jnp.mean(x, axis=1)
    xc = jnp.stack([mx, mn], axis=1)                # (B, 2, H, W)
    xp = jnp.pad(xc, ((0, 0), (0, 0), (3, 3), (3, 3)))
    y = jnp.zeros((B, H, W), jnp.float32) + conv_b[0]
    for cin in range(2):
        for ky in range(7):
            for kx in range(7):
                y = y + conv_w[0, cin, ky, kx] * xp[:, cin, ky:ky + H, kx:kx + W]
    return x * jax.nn.sigmoid(y)[:, None, :, :]


if __name__ == "__main__":
    B, C, H, W = 2, 8, 16, 16
    key = jax.random.PRNGKey(0)
    kx, kw, kb = jax.random.split(key, 3)

    x = jax.random.normal(kx, (B, C, H, W), dtype=jnp.float32)
    # PyTorch Conv2d(2, 1, 7, padding=3, bias=True) parameters (OIHW layout).
    conv_w = jax.random.normal(kw, (1, 2, 7, 7), dtype=jnp.float32) * 0.1
    conv_b = jax.random.normal(kb, (1,), dtype=jnp.float32) * 0.1

    ref = spatial_gate_ref(x, conv_w, conv_b)

    # Fused single-pass path (default at these shapes).
    out_fused = jax.block_until_ready(spatial_gate(x, conv_w, conv_b))
    assert out_fused.shape == (B, C, H, W)
    assert jnp.allclose(out_fused, ref, atol=2e-3, rtol=2e-3), "fused path mismatch"

    # Fallback 3-pass streaming path (used when x[b] does not fit VMEM).
    out_3pass = jax.block_until_ready(
        spatial_gate(x, conv_w, conv_b, force_three_pass=True))
    assert jnp.allclose(out_3pass, ref, atol=2e-3, rtol=2e-3), "3-pass path mismatch"

    print("KERNEL_OK")
</pallas_src>

<mosaic_0001>
module attributes {stable_mosaic.version = 11 : i64} {
  func.func @fused_gate_kernel(%arg0: i32, %arg1: memref<98xf32, #tpu.memory_space<smem>>, %arg2: memref<1xf32, #tpu.memory_space<smem>>, %arg3: memref<1x8x16x16xf32, #tpu.memory_space<vmem>>, %arg4: memref<1x8x16x16xf32, #tpu.memory_space<vmem>>, %arg5: memref<2x27x147xf32, #tpu.memory_space<vmem>>) attributes {dimension_semantics = [#tpu.dimension_semantics<parallel>], iteration_bounds = array<i64: 2>, scalar_prefetch = 0 : i64, scratch_operands = 1 : i64, tpu.core_type = #tpu.core_type<tc>, window_params = [{transform_indices = @transform_0, window_bounds = array<i64: 98>}, {transform_indices = @transform_1, window_bounds = array<i64: 1>}, {transform_indices = @transform_2, window_bounds = array<i64: 1, 8, 16, 16>}, {transform_indices = @transform_3, window_bounds = array<i64: 1, 8, 16, 16>}]} {
    %c0 = arith.constant 0 : index
    %c0_0 = arith.constant 0 : index
    %c0_1 = arith.constant 0 : index
    %c0_2 = arith.constant 0 : index
    %0 = vector.load %arg3[%c0, %c0_0, %c0_1, %c0_2] : memref<1x8x16x16xf32, #tpu.memory_space<vmem>>, vector<1x8x16x16xf32>
    %1 = vector.shape_cast %0 : vector<1x8x16x16xf32> to vector<8x16x16xf32>
    %cst = arith.constant dense<0xFF800000> : vector<16x16xf32>
    %2 = vector.multi_reduction <maximumf>, %1, %cst [0] : vector<8x16x16xf32> to vector<16x16xf32>
    %cst_3 = arith.constant dense<0.000000e+00> : vector<16x16xf32>
    %3 = vector.multi_reduction <add>, %1, %cst_3 [0] : vector<8x16x16xf32> to vector<16x16xf32>
    %cst_4 = arith.constant 1.250000e-01 : f32
    %4 = vector.broadcast %cst_4 : f32 to vector<16x16xf32>
    %5 = arith.mulf %3, %4 : vector<16x16xf32>
    %cst_5 = arith.constant 0.000000e+00 : f32
    %6 = vector.broadcast %cst_5 : f32 to vector<2x27x147xf32>
    %c0_6 = arith.constant 0 : index
    %c0_7 = arith.constant 0 : index
    %c0_8 = arith.constant 0 : index
    %7 = vector.load %arg5[%c0_6, %c0_7, %c0_8] : memref<2x27x147xf32, #tpu.memory_space<vmem>>, vector<2x27x147xf32>
    tpu.vector_store %arg5[%c0_6, %c0_7, %c0_8], %6 {strides = array<i32>} : memref<2x27x147xf32, #tpu.memory_space<vmem>>, vector<2x27x147xf32>,
    %c0_9 = arith.constant 0 : index
    %c8 = arith.constant 8 : index
    %c128 = arith.constant 128 : index
    %8 = vector.load %arg5[%c0_9, %c8, %c128] : memref<2x27x147xf32, #tpu.memory_space<vmem>>, vector<1x16x16xf32>
    %9 = vector.shape_cast %8 : vector<1x16x16xf32> to vector<16x16xf32>
    %10 = vector.shape_cast %2 : vector<16x16xf32> to vector<1x16x16xf32>
    tpu.vector_store %arg5[%c0_9, %c8, %c128], %10 {strides = array<i32>} : memref<2x27x147xf32, #tpu.memory_space<vmem>>, vector<1x16x16xf32>,
    %c1 = arith.constant 1 : index
    %c8_10 = arith.constant 8 : index
    %c128_11 = arith.constant 128 : index
    %11 = vector.load %arg5[%c1, %c8_10, %c128_11] : memref<2x27x147xf32, #tpu.memory_space<vmem>>, vector<1x16x16xf32>
    %12 = vector.shape_cast %11 : vector<1x16x16xf32> to vector<16x16xf32>
    %13 = vector.shape_cast %5 : vector<16x16xf32> to vector<1x16x16xf32>
    tpu.vector_store %arg5[%c1, %c8_10, %c128_11], %13 {strides = array<i32>} : memref<2x27x147xf32, #tpu.memory_space<vmem>>, vector<1x16x16xf32>,
    %cst_12 = arith.constant 0.000000e+00 : f32
    %14 = vector.broadcast %cst_12 : f32 to vector<16x16xf32>
    %c0_13 = arith.constant 0 : index
    %15 = memref.load %arg2[%c0_13] : memref<1xf32, #tpu.memory_space<smem>>
    %16 = vector.broadcast %15 : f32 to vector<16x16xf32>
    %17 = arith.addf %14, %16 : vector<16x16xf32>
    %c0_14 = arith.constant 0 : index
    %c5 = arith.constant 5 : index
    %c125 = arith.constant 125 : index
    %18 = vector.load %arg5[%c0_14, %c5, %c125] : memref<2x27x147xf32, #tpu.memory_space<vmem>>, vector<1x16x16xf32>
    %19 = vector.shape_cast %18 : vector<1x16x16xf32> to vector<16x16xf32>
    %c0_15 = arith.constant 0 : index
    %20 = memref.load %arg1[%c0_15] : memref<98xf32, #tpu.memory_space<smem>>
    %21 = vector.broadcast %20 : f32 to vector<16x16xf32>
    %22 = arith.mulf %21, %19 : vector<16x16xf32>
    %23 = arith.addf %17, %22 : vector<16x16xf32>
    %c0_16 = arith.constant 0 : index
    %c5_17 = arith.constant 5 : index
    %c126 = arith.constant 126 : index
    %24 = vector.load %arg5[%c0_16, %c5_17, %c126] : memref<2x27x147xf32, #tpu.memory_space<vmem>>, vector<1x16x16xf32>
    %25 = vector.shape_cast %24 : vector<1x16x16xf32> to vector<16x16xf32>
    %c1_18 = arith.constant 1 : index
    %26 = memref.load %arg1[%c1_18] : memref<98xf32, #tpu.memory_space<smem>>
    %27 = vector.broadcast %26 : f32 to vector<16x16xf32>
    %28 = arith.mulf %27, %25 : vector<16x16xf32>
    %29 = arith.addf %23, %28 : vector<16x16xf32>
    %c0_19 = arith.constant 0 : index
    %c5_20 = arith.constant 5 : index
    %c127 = arith.constant 127 : index
    %30 = vector.load %arg5[%c0_19, %c5_20, %c127] : memref<2x27x147xf32, #tpu.memory_space<vmem>>, vector<1x16x16xf32>
    %31 = vector.shape_cast %30 : vector<1x16x16xf32> to vector<16x16xf32>
    %c2 = arith.constant 2 : index
    %32 = memref.load %arg1[%c2] : memref<98xf32, #tpu.memory_space<smem>>
    %33 = vector.broadcast %32 : f32 to vector<16x16xf32>
    %34 = arith.mulf %33, %31 : vector<16x16xf32>
    %35 = arith.addf %29, %34 : vector<16x16xf32>
    %c0_21 = arith.constant 0 : index
    %c5_22 = arith.constant 5 : index
    %c128_23 = arith.constant 128 : index
    %36 = vector.load %arg5[%c0_21, %c5_22, %c128_23] : memref<2x27x147xf32, #tpu.memory_space<vmem>>, vector<1x16x16xf32>
    %37 = vector.shape_cast %36 : vector<1x16x16xf32> to vector<16x16xf32>
    %c3 = arith.constant 3 : index
    %38 = memref.load %arg1[%c3] : memref<98xf32, #tpu.memory_space<smem>>
    %39 = vector.broadcast %38 : f32 to vector<16x16xf32>
    %40 = arith.mulf %39, %37 : vector<16x16xf32>
    %41 = arith.addf %35, %40 : vector<16x16xf32>
    %c0_24 = arith.constant 0 : index
    %c5_25 = arith.constant 5 : index
    %c129 = arith.constant 129 : index
    %42 = vector.load %arg5[%c0_24, %c5_25, %c129] : memref<2x27x147xf32, #tpu.memory_space<vmem>>, vector<1x16x16xf32>
    %43 = vector.shape_cast %42 : vector<1x16x16xf32> to vector<16x16xf32>
    %c4 = arith.constant 4 : index
    %44 = memref.load %arg1[%c4] : memref<98xf32, #tpu.memory_space<smem>>
    %45 = vector.broadcast %44 : f32 to vector<16x16xf32>
    %46 = arith.mulf %45, %43 : vector<16x16xf32>
    %47 = arith.addf %41, %46 : vector<16x16xf32>
    %c0_26 = arith.constant 0 : index
    %c5_27 = arith.constant 5 : index
    %c130 = arith.constant 130 : index
    %48 = vector.load %arg5[%c0_26, %c5_27, %c130] : memref<2x27x147xf32, #tpu.memory_space<vmem>>, vector<1x16x16xf32>
    %49 = vector.shape_cast %48 : vector<1x16x16xf32> to vector<16x16xf32>
    %c5_28 = arith.constant 5 : index
    %50 = memref.load %arg1[%c5_28] : memref<98xf32, #tpu.memory_space<smem>>
    %51 = vector.broadcast %50 : f32 to vector<16x16xf32>
    %52 = arith.mulf %51, %49 : vector<16x16xf32>
    %53 = arith.addf %47, %52 : vector<16x16xf32>
    %c0_29 = arith.constant 0 : index
    %c5_30 = arith.constant 5 : index
    %c131 = arith.constant 131 : index
    %54 = vector.load %arg5[%c0_29, %c5_30, %c131] : memref<2x27x147xf32, #tpu.memory_space<vmem>>, vector<1x16x16xf32>
    %55 = vector.shape_cast %54 : vector<1x16x16xf32> to vector<16x16xf32>
    %c6 = arith.constant 6 : index
    %56 = memref.load %arg1[%c6] : memref<98xf32, #tpu.memory_space<smem>>
    %57 = vector.broadcast %56 : f32 to vector<16x16xf32>
    %58 = arith.mulf %57, %55 : vector<16x16xf32>
    %59 = arith.addf %53, %58 : vector<16x16xf32>
    %c0_31 = arith.constant 0 : index
    %c6_32 = arith.constant 6 : index
    %c125_33 = arith.constant 125 : index
    %60 = vector.load %arg5[%c0_31, %c6_32, %c125_33] : memref<2x27x147xf32, #tpu.memory_space<vmem>>, vector<1x16x16xf32>
    %61 = vector.shape_cast %60 : vector<1x16x16xf32> to vector<16x16xf32>
    %c7 = arith.constant 7 : index
    %62 = memref.load %arg1[%c7] : memref<98xf32, #tpu.memory_space<smem>>
    %63 = vector.broadcast %62 : f32 to vector<16x16xf32>
    %64 = arith.mulf %63, %61 : vector<16x16xf32>
    %65 = arith.addf %59, %64 : vector<16x16xf32>
    %c0_34 = arith.constant 0 : index
    %c6_35 = arith.constant 6 : index
    %c126_36 = arith.constant 126 : index
    %66 = vector.load %arg5[%c0_34, %c6_35, %c126_36] : memref<2x27x147xf32, #tpu.memory_space<vmem>>, vector<1x16x16xf32>
    %67 = vector.shape_cast %66 : vector<1x16x16xf32> to vector<16x16xf32>
    %c8_37 = arith.constant 8 : index
    %68 = memref.load %arg1[%c8_37] : memref<98xf32, #tpu.memory_space<smem>>
    %69 = vector.broadcast %68 : f32 to vector<16x16xf32>
    %70 = arith.mulf %69, %67 : vector<16x16xf32>
    %71 = arith.addf %65, %70 : vector<16x16xf32>
    %c0_38 = arith.constant 0 : index
    %c6_39 = arith.constant 6 : index
    %c127_40 = arith.constant 127 : index
    %72 = vector.load %arg5[%c0_38, %c6_39, %c127_40] : memref<2x27x147xf32, #tpu.memory_space<vmem>>, vector<1x16x16xf32>
    %73 = vector.shape_cast %72 : vector<1x16x16xf32> to vector<16x16xf32>
    %c9 = arith.constant 9 : index
    %74 = memref.load %arg1[%c9] : memref<98xf32, #tpu.memory_space<smem>>
    %75 = vector.broadcast %74 : f32 to vector<16x16xf32>
    %76 = arith.mulf %75, %73 : vector<16x16xf32>
    %77 = arith.addf %71, %76 : vector<16x16xf32>
    %c0_41 = arith.constant 0 : index
    %c6_42 = arith.constant 6 : index
    %c128_43 = arith.constant 128 : index
    %78 = vector.load %arg5[%c0_41, %c6_42, %c128_43] : memref<2x27x147xf32, #tpu.memory_space<vmem>>, vector<1x16x16xf32>
    %79 = vector.shape_cast %78 : vector<1x16x16xf32> to vector<16x16xf32>
    %c10 = arith.constant 10 : index
    %80 = memref.load %arg1[%c10] : memref<98xf32, #tpu.memory_space<smem>>
    %81 = vector.broadcast %80 : f32 to vector<16x16xf32>
    %82 = arith.mulf %81, %79 : vector<16x16xf32>
    %83 = arith.addf %77, %82 : vector<16x16xf32>
    %c0_44 = arith.constant 0 : index
    %c6_45 = arith.constant 6 : index
    %c129_46 = arith.constant 129 : index
    %84 = vector.load %arg5[%c0_44, %c6_45, %c129_46] : memref<2x27x147xf32, #tpu.memory_space<vmem>>, vector<1x16x16xf32>
    %85 = vector.shape_cast %84 : vector<1x16x16xf32> to vector<16x16xf32>
    %c11 = arith.constant 11 : index
    %86 = memref.load %arg1[%c11] : memref<98xf32, #tpu.memory_space<smem>>
    %87 = vector.broadcast %86 : f32 to vector<16x16xf32>
    %88 = arith.mulf %87, %85 : vector<16x16xf32>
    %89 = arith.addf %83, %88 : vector<16x16xf32>
    %c0_47 = arith.constant 0 : index
    %c6_48 = arith.constant 6 : index
    %c130_49 = arith.constant 130 : index
    %90 = vector.load %arg5[%c0_47, %c6_48, %c130_49] : memref<2x27x147xf32, #tpu.memory_space<vmem>>, vector<1x16x16xf32>
    %91 = vector.shape_cast %90 : vector<1x16x16xf32> to vector<16x16xf32>
    %c12 = arith.constant 12 : index
    %92 = memref.load %arg1[%c12] : memref<98xf32, #tpu.memory_space<smem>>
    %93 = vector.broadcast %92 : f32 to vector<16x16xf32>
    %94 = arith.mulf %93, %91 : vector<16x16xf32>
    %95 = arith.addf %89, %94 : vector<16x16xf32>
    %c0_50 = arith.constant 0 : index
    %c6_51 = arith.constant 6 : index
    %c131_52 = arith.constant 131 : index
    %96 = vector.load %arg5[%c0_50, %c6_51, %c131_52] : memref<2x27x147xf32, #tpu.memory_space<vmem>>, vector<1x16x16xf32>
    %97 = vector.shape_cast %96 : vector<1x16x16xf32> to vector<16x16xf32>
    %c13 = arith.constant 13 : index
    %98 = memref.load %arg1[%c13] : memref<98xf32, #tpu.memory_space<smem>>
    %99 = vector.broadcast %98 : f32 to vector<16x16xf32>
    %100 = arith.mulf %99, %97 : vector<16x16xf32>
    %101 = arith.addf %95, %100 : vector<16x16xf32>
    %c0_53 = arith.constant 0 : index
    %c7_54 = arith.constant 7 : index
    %c125_55 = arith.constant 125 : index
    %102 = vector.load %arg5[%c0_53, %c7_54, %c125_55] : memref<2x27x147xf32, #tpu.memory_space<vmem>>, vector<1x16x16xf32>
    %103 = vector.shape_cast %102 : vector<1x16x16xf32> to vector<16x16xf32>
    %c14 = arith.constant 14 : index
    %104 = memref.load %arg1[%c14] : memref<98xf32, #tpu.memory_space<smem>>
    %105 = vector.broadcast %104 : f32 to vector<16x16xf32>
    %106 = arith.mulf %105, %103 : vector<16x16xf32>
    %107 = arith.addf %101, %106 : vector<16x16xf32>
    %c0_56 = arith.constant 0 : index
    %c7_57 = arith.constant 7 : index
    %c126_58 = arith.constant 126 : index
    %108 = vector.load %arg5[%c0_56, %c7_57, %c126_58] : memref<2x27x147xf32, #tpu.memory_space<vmem>>, vector<1x16x16xf32>
    %109 = vector.shape_cast %108 : vector<1x16x16xf32> to vector<16x16xf32>
    %c15 = arith.constant 15 : index
    %110 = memref.load %arg1[%c15] : memref<98xf32, #tpu.memory_space<smem>>
    %111 = vector.broadcast %110 : f32 to vector<16x16xf32>
    %112 = arith.mulf %111, %109 : vector<16x16xf32>
    %113 = arith.addf %107, %112 : vector<16x16xf32>
    %c0_59 = arith.constant 0 : index
    %c7_60 = arith.constant 7 : index
    %c127_61 = arith.constant 127 : index
    %114 = vector.load %arg5[%c0_59, %c7_60, %c127_61] : memref<2x27x147xf32, #tpu.memory_space<vmem>>, vector<1x16x16xf32>
    %115 = vector.shape_cast %114 : vector<1x16x16xf32> to vector<16x16xf32>
    %c16 = arith.constant 16 : index
    %116 = memref.load %arg1[%c16] : memref<98xf32, #tpu.memory_space<smem>>
    %117 = vector.broadcast %116 : f32 to vector<16x16xf32>
    %118 = arith.mulf %117, %115 : vector<16x16xf32>
    %119 = arith.addf %113, %118 : vector<16x16xf32>
    %c0_62 = arith.constant 0 : index
    %c7_63 = arith.constant 7 : index
    %c128_64 = arith.constant 128 : index
    %120 = vector.load %arg5[%c0_62, %c7_63, %c128_64] : memref<2x27x147xf32, #tpu.memory_space<vmem>>, vector<1x16x16xf32>
    %121 = vector.shape_cast %120 : vector<1x16x16xf32> to vector<16x16xf32>
    %c17 = arith.constant 17 : index
    %122 = memref.load %arg1[%c17] : memref<98xf32, #tpu.memory_space<smem>>
    %123 = vector.broadcast %122 : f32 to vector<16x16xf32>
    %124 = arith.mulf %123, %121 : vector<16x16xf32>
    %125 = arith.addf %119, %124 : vector<16x16xf32>
    %c0_65 = arith.constant 0 : index
    %c7_66 = arith.constant 7 : index
    %c129_67 = arith.constant 129 : index
    %126 = vector.load %arg5[%c0_65, %c7_66, %c129_67] : memref<2x27x147xf32, #tpu.memory_space<vmem>>, vector<1x16x16xf32>
    %127 = vector.shape_cast %126 : vector<1x16x16xf32> to vector<16x16xf32>
    %c18 = arith.constant 18 : index
    %128 = memref.load %arg1[%c18] : memref<98xf32, #tpu.memory_space<smem>>
    %129 = vector.broadcast %128 : f32 to vector<16x16xf32>
    %130 = arith.mulf %129, %127 : vector<16x16xf32>
    %131 = arith.addf %125, %130 : vector<16x16xf32>
    %c0_68 = arith.constant 0 : index
    %c7_69 = arith.constant 7 : index
    %c130_70 = arith.constant 130 : index
    %132 = vector.load %arg5[%c0_68, %c7_69, %c130_70] : memref<2x27x147xf32, #tpu.memory_space<vmem>>, vector<1x16x16xf32>
    %133 = vector.shape_cast %132 : vector<1x16x16xf32> to vector<16x16xf32>
    %c19 = arith.constant 19 : index
    %134 = memref.load %arg1[%c19] : memref<98xf32, #tpu.memory_space<smem>>
    %135 = vector.broadcast %134 : f32 to vector<16x16xf32>
    %136 = arith.mulf %135, %133 : vector<16x16xf32>
    %137 = arith.addf %131, %136 : vector<16x16xf32>
    %c0_71 = arith.constant 0 : index
    %c7_72 = arith.constant 7 : index
    %c131_73 = arith.constant 131 : index
    %138 = vector.load %arg5[%c0_71, %c7_72, %c131_73] : memref<2x27x147xf32, #tpu.memory_space<vmem>>, vector<1x16x16xf32>
    %139 = vector.shape_cast %138 : vector<1x16x16xf32> to vector<16x16xf32>
    %c20 = arith.constant 20 : index
    %140 = memref.load %arg1[%c20] : memref<98xf32, #tpu.memory_space<smem>>
    %141 = vector.broadcast %140 : f32 to vector<16x16xf32>
    %142 = arith.mulf %141, %139 : vector<16x16xf32>
    %143 = arith.addf %137, %142 : vector<16x16xf32>
    %c0_74 = arith.constant 0 : index
    %c8_75 = arith.constant 8 : index
    %c125_76 = arith.constant 125 : index
    %144 = vector.load %arg5[%c0_74, %c8_75, %c125_76] : memref<2x27x147xf32, #tpu.memory_space<vmem>>, vector<1x16x16xf32>
    %145 = vector.shape_cast %144 : vector<1x16x16xf32> to vector<16x16xf32>
    %c21 = arith.constant 21 : index
    %146 = memref.load %arg1[%c21] : memref<98xf32, #tpu.memory_space<smem>>
    %147 = vector.broadcast %146 : f32 to vector<16x16xf32>
    %148 = arith.mulf %147, %145 : vector<16x16xf32>
    %149 = arith.addf %143, %148 : vector<16x16xf32>
    %c0_77 = arith.constant 0 : index
    %c8_78 = arith.constant 8 : index
    %c126_79 = arith.constant 126 : index
    %150 = vector.load %arg5[%c0_77, %c8_78, %c126_79] : memref<2x27x147xf32, #tpu.memory_space<vmem>>, vector<1x16x16xf32>
    %151 = vector.shape_cast %150 : vector<1x16x16xf32> to vector<16x16xf32>
    %c22 = arith.constant 22 : index
    %152 = memref.load %arg1[%c22] : memref<98xf32, #tpu.memory_space<smem>>
    %153 = vector.broadcast %152 : f32 to vector<16x16xf32>
    %154 = arith.mulf %153, %151 : vector<16x16xf32>
    %155 = arith.addf %149, %154 : vector<16x16xf32>
    %c0_80 = arith.constant 0 : index
    %c8_81 = arith.constant 8 : index
    %c127_82 = arith.constant 127 : index
    %156 = vector.load %arg5[%c0_80, %c8_81, %c127_82] : memref<2x27x147xf32, #tpu.memory_space<vmem>>, vector<1x16x16xf32>
    %157 = vector.shape_cast %156 : vector<1x16x16xf32> to vector<16x16xf32>
    %c23 = arith.constant 23 : index
    %158 = memref.load %arg1[%c23] : memref<98xf32, #tpu.memory_space<smem>>
    %159 = vector.broadcast %158 : f32 to vector<16x16xf32>
    %160 = arith.mulf %159, %157 : vector<16x16xf32>
    %161 = arith.addf %155, %160 : vector<16x16xf32>
    %c0_83 = arith.constant 0 : index
    %c8_84 = arith.constant 8 : index
    %c128_85 = arith.constant 128 : index
    %162 = vector.load %arg5[%c0_83, %c8_84, %c128_85] : memref<2x27x147xf32, #tpu.memory_space<vmem>>, vector<1x16x16xf32>
    %163 = vector.shape_cast %162 : vector<1x16x16xf32> to vector<16x16xf32>
    %c24 = arith.constant 24 : index
    %164 = memref.load %arg1[%c24] : memref<98xf32, #tpu.memory_space<smem>>
    %165 = vector.broadcast %164 : f32 to vector<16x16xf32>
    %166 = arith.mulf %165, %163 : vector<16x16xf32>
    %167 = arith.addf %161, %166 : vector<16x16xf32>
    %c0_86 = arith.constant 0 : index
    %c8_87 = arith.constant 8 : index
    %c129_88 = arith.constant 129 : index
    %168 = vector.load %arg5[%c0_86, %c8_87, %c129_88] : memref<2x27x147xf32, #tpu.memory_space<vmem>>, vector<1x16x16xf32>
    %169 = vector.shape_cast %168 : vector<1x16x16xf32> to vector<16x16xf32>
    %c25 = arith.constant 25 : index
    %170 = memref.load %arg1[%c25] : memref<98xf32, #tpu.memory_space<smem>>
    %171 = vector.broadcast %170 : f32 to vector<16x16xf32>
    %172 = arith.mulf %171, %169 : vector<16x16xf32>
    %173 = arith.addf %167, %172 : vector<16x16xf32>
    %c0_89 = arith.constant 0 : index
    %c8_90 = arith.constant 8 : index
    %c130_91 = arith.constant 130 : index
    %174 = vector.load %arg5[%c0_89, %c8_90, %c130_91] : memref<2x27x147xf32, #tpu.memory_space<vmem>>, vector<1x16x16xf32>
    %175 = vector.shape_cast %174 : vector<1x16x16xf32> to vector<16x16xf32>
    %c26 = arith.constant 26 : index
    %176 = memref.load %arg1[%c26] : memref<98xf32, #tpu.memory_space<smem>>
    %177 = vector.broadcast %176 : f32 to vector<16x16xf32>
    %178 = arith.mulf %177, %175 : vector<16x16xf32>
    %179 = arith.addf %173, %178 : vector<16x16xf32>
    %c0_92 = arith.constant 0 : index
    %c8_93 = arith.constant 8 : index
    %c131_94 = arith.constant 131 : index
    %180 = vector.load %arg5[%c0_92, %c8_93, %c131_94] : memref<2x27x147xf32, #tpu.memory_space<vmem>>, vector<1x16x16xf32>
    %181 = vector.shape_cast %180 : vector<1x16x16xf32> to vector<16x16xf32>
    %c27 = arith.constant 27 : index
    %182 = memref.load %arg1[%c27] : memref<98xf32, #tpu.memory_space<smem>>
    %183 = vector.broadcast %182 : f32 to vector<16x16xf32>
    %184 = arith.mulf %183, %181 : vector<16x16xf32>
    %185 = arith.addf %179, %184 : vector<16x16xf32>
    %c0_95 = arith.constant 0 : index
    %c9_96 = arith.constant 9 : index
    %c125_97 = arith.constant 125 : index
    %186 = vector.load %arg5[%c0_95, %c9_96, %c125_97] : memref<2x27x147xf32, #tpu.memory_space<vmem>>, vector<1x16x16xf32>
    %187 = vector.shape_cast %186 : vector<1x16x16xf32> to vector<16x16xf32>
    %c28 = arith.constant 28 : index
    %188 = memref.load %arg1[%c28] : memref<98xf32, #tpu.memory_space<smem>>
    %189 = vector.broadcast %188 : f32 to vector<16x16xf32>
    %190 = arith.mulf %189, %187 : vector<16x16xf32>
    %191 = arith.addf %185, %190 : vector<16x16xf32>
    %c0_98 = arith.constant 0 : index
    %c9_99 = arith.constant 9 : index
    %c126_100 = arith.constant 126 : index
    %192 = vector.load %arg5[%c0_98, %c9_99, %c126_100] : memref<2x27x147xf32, #tpu.memory_space<vmem>>, vector<1x16x16xf32>
    %193 = vector.shape_cast %192 : vector<1x16x16xf32> to vector<16x16xf32>
    %c29 = arith.constant 29 : index
    %194 = memref.load %arg1[%c29] : memref<98xf32, #tpu.memory_space<smem>>
    %195 = vector.broadcast %194 : f32 to vector<16x16xf32>
    %196 = arith.mulf %195, %193 : vector<16x16xf32>
    %197 = arith.addf %191, %196 : vector<16x16xf32>
    %c0_101 = arith.constant 0 : index
    %c9_102 = arith.constant 9 : index
    %c127_103 = arith.constant 127 : index
    %198 = vector.load %arg5[%c0_101, %c9_102, %c127_103] : memref<2x27x147xf32, #tpu.memory_space<vmem>>, vector<1x16x16xf32>
    %199 = vector.shape_cast %198 : vector<1x16x16xf32> to vector<16x16xf32>
    %c30 = arith.constant 30 : index
    %200 = memref.load %arg1[%c30] : memref<98xf32, #tpu.memory_space<smem>>
    %201 = vector.broadcast %200 : f32 to vector<16x16xf32>
    %202 = arith.mulf %201, %199 : vector<16x16xf32>
    %203 = arith.addf %197, %202 : vector<16x16xf32>
    %c0_104 = arith.constant 0 : index
    %c9_105 = arith.constant 9 : index
    %c128_106 = arith.constant 128 : index
    %204 = vector.load %arg5[%c0_104, %c9_105, %c128_106] : memref<2x27x147xf32, #tpu.memory_space<vmem>>, vector<1x16x16xf32>
    %205 = vector.shape_cast %204 : vector<1x16x16xf32> to vector<16x16xf32>
    %c31 = arith.constant 31 : index
    %206 = memref.load %arg1[%c31] : memref<98xf32, #tpu.memory_space<smem>>
    %207 = vector.broadcast %206 : f32 to vector<16x16xf32>
    %208 = arith.mulf %207, %205 : vector<16x16xf32>
    %209 = arith.addf %203, %208 : vector<16x16xf32>
    %c0_107 = arith.constant 0 : index
    %c9_108 = arith.constant 9 : index
    %c129_109 = arith.constant 129 : index
    %210 = vector.load %arg5[%c0_107, %c9_108, %c129_109] : memref<2x27x147xf32, #tpu.memory_space<vmem>>, vector<1x16x16xf32>
    %211 = vector.shape_cast %210 : vector<1x16x16xf32> to vector<16x16xf32>
    %c32 = arith.constant 32 : index
    %212 = memref.load %arg1[%c32] : memref<98xf32, #tpu.memory_space<smem>>
    %213 = vector.broadcast %212 : f32 to vector<16x16xf32>
    %214 = arith.mulf %213, %211 : vector<16x16xf32>
    %215 = arith.addf %209, %214 : vector<16x16xf32>
    %c0_110 = arith.constant 0 : index
    %c9_111 = arith.constant 9 : index
    %c130_112 = arith.constant 130 : index
    %216 = vector.load %arg5[%c0_110, %c9_111, %c130_112] : memref<2x27x147xf32, #tpu.memory_space<vmem>>, vector<1x16x16xf32>
    %217 = vector.shape_cast %216 : vector<1x16x16xf32> to vector<16x16xf32>
    %c33 = arith.constant 33 : index
    %218 = memref.load %arg1[%c33] : memref<98xf32, #tpu.memory_space<smem>>
    %219 = vector.broadcast %218 : f32 to vector<16x16xf32>
    %220 = arith.mulf %219, %217 : vector<16x16xf32>
    %221 = arith.addf %215, %220 : vector<16x16xf32>
    %c0_113 = arith.constant 0 : index
    %c9_114 = arith.constant 9 : index
    %c131_115 = arith.constant 131 : index
    %222 = vector.load %arg5[%c0_113, %c9_114, %c131_115] : memref<2x27x147xf32, #tpu.memory_space<vmem>>, vector<1x16x16xf32>
    %223 = vector.shape_cast %222 : vector<1x16x16xf32> to vector<16x16xf32>
    %c34 = arith.constant 34 : index
    %224 = memref.load %arg1[%c34] : memref<98xf32, #tpu.memory_space<smem>>
    %225 = vector.broadcast %224 : f32 to vector<16x16xf32>
    %226 = arith.mulf %225, %223 : vector<16x16xf32>
    %227 = arith.addf %221, %226 : vector<16x16xf32>
    %c0_116 = arith.constant 0 : index
    %c10_117 = arith.constant 10 : index
    %c125_118 = arith.constant 125 : index
    %228 = vector.load %arg5[%c0_116, %c10_117, %c125_118] : memref<2x27x147xf32, #tpu.memory_space<vmem>>, vector<1x16x16xf32>
    %229 = vector.shape_cast %228 : vector<1x16x16xf32> to vector<16x16xf32>
    %c35 = arith.constant 35 : index
    %230 = memref.load %arg1[%c35] : memref<98xf32, #tpu.memory_space<smem>>
    %231 = vector.broadcast %230 : f32 to vector<16x16xf32>
    %232 = arith.mulf %231, %229 : vector<16x16xf32>
    %233 = arith.addf %227, %232 : vector<16x16xf32>
    %c0_119 = arith.constant 0 : index
    %c10_120 = arith.constant 10 : index
    %c126_121 = arith.constant 126 : index
    %234 = vector.load %arg5[%c0_119, %c10_120, %c126_121] : memref<2x27x147xf32, #tpu.memory_space<vmem>>, vector<1x16x16xf32>
    %235 = vector.shape_cast %234 : vector<1x16x16xf32> to vector<16x16xf32>
    %c36 = arith.constant 36 : index
    %236 = memref.load %arg1[%c36] : memref<98xf32, #tpu.memory_space<smem>>
    %237 = vector.broadcast %236 : f32 to vector<16x16xf32>
    %238 = arith.mulf %237, %235 : vector<16x16xf32>
    %239 = arith.addf %233, %238 : vector<16x16xf32>
    %c0_122 = arith.constant 0 : index
    %c10_123 = arith.constant 10 : index
    %c127_124 = arith.constant 127 : index
    %240 = vector.load %arg5[%c0_122, %c10_123, %c127_124] : memref<2x27x147xf32, #tpu.memory_space<vmem>>, vector<1x16x16xf32>
    %241 = vector.shape_cast %240 : vector<1x16x16xf32> to vector<16x16xf32>
    %c37 = arith.constant 37 : index
    %242 = memref.load %arg1[%c37] : memref<98xf32, #tpu.memory_space<smem>>
    %243 = vector.broadcast %242 : f32 to vector<16x16xf32>
    %244 = arith.mulf %243, %241 : vector<16x16xf32>
    %245 = arith.addf %239, %244 : vector<16x16xf32>
    %c0_125 = arith.constant 0 : index
    %c10_126 = arith.constant 10 : index
    %c128_127 = arith.constant 128 : index
    %246 = vector.load %arg5[%c0_125, %c10_126, %c128_127] : memref<2x27x147xf32, #tpu.memory_space<vmem>>, vector<1x16x16xf32>
    %247 = vector.shape_cast %246 : vector<1x16x16xf32> to vector<16x16xf32>
    %c38 = arith.constant 38 : index
    %248 = memref.load %arg1[%c38] : memref<98xf32, #tpu.memory_space<smem>>
    %249 = vector.broadcast %248 : f32 to vector<16x16xf32>
    %250 = arith.mulf %249, %247 : vector<16x16xf32>
    %251 = arith.addf %245, %250 : vector<16x16xf32>
    %c0_128 = arith.constant 0 : index
    %c10_129 = arith.constant 10 : index
    %c129_130 = arith.constant 129 : index
    %252 = vector.load %arg5[%c0_128, %c10_129, %c129_130] : memref<2x27x147xf32, #tpu.memory_space<vmem>>, vector<1x16x16xf32>
    %253 = vector.shape_cast %252 : vector<1x16x16xf32> to vector<16x16xf32>
    %c39 = arith.constant 39 : index
    %254 = memref.load %arg1[%c39] : memref<98xf32, #tpu.memory_space<smem>>
    %255 = vector.broadcast %254 : f32 to vector<16x16xf32>
    %256 = arith.mulf %255, %253 : vector<16x16xf32>
    %257 = arith.addf %251, %256 : vector<16x16xf32>
    %c0_131 = arith.constant 0 : index
    %c10_132 = arith.constant 10 : index
    %c130_133 = arith.constant 130 : index
    %258 = vector.load %arg5[%c0_131, %c10_132, %c130_133] : memref<2x27x147xf32, #tpu.memory_space<vmem>>, vector<1x16x16xf32>
    %259 = vector.shape_cast %258 : vector<1x16x16xf32> to vector<16x16xf32>
    %c40 = arith.constant 40 : index
    %260 = memref.load %arg1[%c40] : memref<98xf32, #tpu.memory_space<smem>>
    %261 = vector.broadcast %260 : f32 to vector<16x16xf32>
    %262 = arith.mulf %261, %259 : vector<16x16xf32>
    %263 = arith.addf %257, %262 : vector<16x16xf32>
    %c0_134 = arith.constant 0 : index
    %c10_135 = arith.constant 10 : index
    %c131_136 = arith.constant 131 : index
    %264 = vector.load %arg5[%c0_134, %c10_135, %c131_136] : memref<2x27x147xf32, #tpu.memory_space<vmem>>, vector<1x16x16xf32>
    %265 = vector.shape_cast %264 : vector<1x16x16xf32> to vector<16x16xf32>
    %c41 = arith.constant 41 : index
    %266 = memref.load %arg1[%c41] : memref<98xf32, #tpu.memory_space<smem>>
    %267 = vector.broadcast %266 : f32 to vector<16x16xf32>
    %268 = arith.mulf %267, %265 : vector<16x16xf32>
    %269 = arith.addf %263, %268 : vector<16x16xf32>
    %c0_137 = arith.constant 0 : index
    %c11_138 = arith.constant 11 : index
    %c125_139 = arith.constant 125 : index
    %270 = vector.load %arg5[%c0_137, %c11_138, %c125_139] : memref<2x27x147xf32, #tpu.memory_space<vmem>>, vector<1x16x16xf32>
    %271 = vector.shape_cast %270 : vector<1x16x16xf32> to vector<16x16xf32>
    %c42 = arith.constant 42 : index
    %272 = memref.load %arg1[%c42] : memref<98xf32, #tpu.memory_space<smem>>
    %273 = vector.broadcast %272 : f32 to vector<16x16xf32>
    %274 = arith.mulf %273, %271 : vector<16x16xf32>
    %275 = arith.addf %269, %274 : vector<16x16xf32>
    %c0_140 = arith.constant 0 : index
    %c11_141 = arith.constant 11 : index
    %c126_142 = arith.constant 126 : index
    %276 = vector.load %arg5[%c0_140, %c11_141, %c126_142] : memref<2x27x147xf32, #tpu.memory_space<vmem>>, vector<1x16x16xf32>
    %277 = vector.shape_cast %276 : vector<1x16x16xf32> to vector<16x16xf32>
    %c43 = arith.constant 43 : index
    %278 = memref.load %arg1[%c43] : memref<98xf32, #tpu.memory_space<smem>>
    %279 = vector.broadcast %278 : f32 to vector<16x16xf32>
    %280 = arith.mulf %279, %277 : vector<16x16xf32>
    %281 = arith.addf %275, %280 : vector<16x16xf32>
    %c0_143 = arith.constant 0 : index
    %c11_144 = arith.constant 11 : index
    %c127_145 = arith.constant 127 : index
    %282 = vector.load %arg5[%c0_143, %c11_144, %c127_145] : memref<2x27x147xf32, #tpu.memory_space<vmem>>, vector<1x16x16xf32>
    %283 = vector.shape_cast %282 : vector<1x16x16xf32> to vector<16x16xf32>
    %c44 = arith.constant 44 : index
    %284 = memref.load %arg1[%c44] : memref<98xf32, #tpu.memory_space<smem>>
    %285 = vector.broadcast %284 : f32 to vector<16x16xf32>
    %286 = arith.mulf %285, %283 : vector<16x16xf32>
    %287 = arith.addf %281, %286 : vector<16x16xf32>
    %c0_146 = arith.constant 0 : index
    %c11_147 = arith.constant 11 : index
    %c128_148 = arith.constant 128 : index
    %288 = vector.load %arg5[%c0_146, %c11_147, %c128_148] : memref<2x27x147xf32, #tpu.memory_space<vmem>>, vector<1x16x16xf32>
    %289 = vector.shape_cast %288 : vector<1x16x16xf32> to vector<16x16xf32>
    %c45 = arith.constant 45 : index
    %290 = memref.load %arg1[%c45] : memref<98xf32, #tpu.memory_space<smem>>
    %291 = vector.broadcast %290 : f32 to vector<16x16xf32>
    %292 = arith.mulf %291, %289 : vector<16x16xf32>
    %293 = arith.addf %287, %292 : vector<16x16xf32>
    %c0_149 = arith.constant 0 : index
    %c11_150 = arith.constant 11 : index
    %c129_151 = arith.constant 129 : index
    %294 = vector.load %arg5[%c0_149, %c11_150, %c129_151] : memref<2x27x147xf32, #tpu.memory_space<vmem>>, vector<1x16x16xf32>
    %295 = vector.shape_cast %294 : vector<1x16x16xf32> to vector<16x16xf32>
    %c46 = arith.constant 46 : index
    %296 = memref.load %arg1[%c46] : memref<98xf32, #tpu.memory_space<smem>>
    %297 = vector.broadcast %296 : f32 to vector<16x16xf32>
    %298 = arith.mulf %297, %295 : vector<16x16xf32>
    %299 = arith.addf %293, %298 : vector<16x16xf32>
    %c0_152 = arith.constant 0 : index
    %c11_153 = arith.constant 11 : index
    %c130_154 = arith.constant 130 : index
    %300 = vector.load %arg5[%c0_152, %c11_153, %c130_154] : memref<2x27x147xf32, #tpu.memory_space<vmem>>, vector<1x16x16xf32>
    %301 = vector.shape_cast %300 : vector<1x16x16xf32> to vector<16x16xf32>
    %c47 = arith.constant 47 : index
    %302 = memref.load %arg1[%c47] : memref<98xf32, #tpu.memory_space<smem>>
    %303 = vector.broadcast %302 : f32 to vector<16x16xf32>
    %304 = arith.mulf %303, %301 : vector<16x16xf32>
    %305 = arith.addf %299, %304 : vector<16x16xf32>
    %c0_155 = arith.constant 0 : index
    %c11_156 = arith.constant 11 : index
    %c131_157 = arith.constant 131 : index
    %306 = vector.load %arg5[%c0_155, %c11_156, %c131_157] : memref<2x27x147xf32, #tpu.memory_space<vmem>>, vector<1x16x16xf32>
    %307 = vector.shape_cast %306 : vector<1x16x16xf32> to vector<16x16xf32>
    %c48 = arith.constant 48 : index
    %308 = memref.load %arg1[%c48] : memref<98xf32, #tpu.memory_space<smem>>
    %309 = vector.broadcast %308 : f32 to vector<16x16xf32>
    %310 = arith.mulf %309, %307 : vector<16x16xf32>
    %311 = arith.addf %305, %310 : vector<16x16xf32>
    %c1_158 = arith.constant 1 : index
    %c5_159 = arith.constant 5 : index
    %c125_160 = arith.constant 125 : index
    %312 = vector.load %arg5[%c1_158, %c5_159, %c125_160] : memref<2x27x147xf32, #tpu.memory_space<vmem>>, vector<1x16x16xf32>
    %313 = vector.shape_cast %312 : vector<1x16x16xf32> to vector<16x16xf32>
    %c49 = arith.constant 49 : index
    %314 = memref.load %arg1[%c49] : memref<98xf32, #tpu.memory_space<smem>>
    %315 = vector.broadcast %314 : f32 to vector<16x16xf32>
    %316 = arith.mulf %315, %313 : vector<16x16xf32>
    %317 = arith.addf %311, %316 : vector<16x16xf32>
    %c1_161 = arith.constant 1 : index
    %c5_162 = arith.constant 5 : index
    %c126_163 = arith.constant 126 : index
    %318 = vector.load %arg5[%c1_161, %c5_162, %c126_163] : memref<2x27x147xf32, #tpu.memory_space<vmem>>, vector<1x16x16xf32>
    %319 = vector.shape_cast %318 : vector<1x16x16xf32> to vector<16x16xf32>
    %c50 = arith.constant 50 : index
    %320 = memref.load %arg1[%c50] : memref<98xf32, #tpu.memory_space<smem>>
    %321 = vector.broadcast %320 : f32 to vector<16x16xf32>
    %322 = arith.mulf %321, %319 : vector<16x16xf32>
    %323 = arith.addf %317, %322 : vector<16x16xf32>
    %c1_164 = arith.constant 1 : index
    %c5_165 = arith.constant 5 : index
    %c127_166 = arith.constant 127 : index
    %324 = vector.load %arg5[%c1_164, %c5_165, %c127_166] : memref<2x27x147xf32, #tpu.memory_space<vmem>>, vector<1x16x16xf32>
    %325 = vector.shape_cast %324 : vector<1x16x16xf32> to vector<16x16xf32>
    %c51 = arith.constant 51 : index
    %326 = memref.load %arg1[%c51] : memref<98xf32, #tpu.memory_space<smem>>
    %327 = vector.broadcast %326 : f32 to vector<16x16xf32>
    %328 = arith.mulf %327, %325 : vector<16x16xf32>
    %329 = arith.addf %323, %328 : vector<16x16xf32>
    %c1_167 = arith.constant 1 : index
    %c5_168 = arith.constant 5 : index
    %c128_169 = arith.constant 128 : index
    %330 = vector.load %arg5[%c1_167, %c5_168, %c128_169] : memref<2x27x147xf32, #tpu.memory_space<vmem>>, vector<1x16x16xf32>
    %331 = vector.shape_cast %330 : vector<1x16x16xf32> to vector<16x16xf32>
    %c52 = arith.constant 52 : index
    %332 = memref.load %arg1[%c52] : memref<98xf32, #tpu.memory_space<smem>>
    %333 = vector.broadcast %332 : f32 to vector<16x16xf32>
    %334 = arith.mulf %333, %331 : vector<16x16xf32>
    %335 = arith.addf %329, %334 : vector<16x16xf32>
    %c1_170 = arith.constant 1 : index
    %c5_171 = arith.constant 5 : index
    %c129_172 = arith.constant 129 : index
    %336 = vector.load %arg5[%c1_170, %c5_171, %c129_172] : memref<2x27x147xf32, #tpu.memory_space<vmem>>, vector<1x16x16xf32>
    %337 = vector.shape_cast %336 : vector<1x16x16xf32> to vector<16x16xf32>
    %c53 = arith.constant 53 : index
    %338 = memref.load %arg1[%c53] : memref<98xf32, #tpu.memory_space<smem>>
    %339 = vector.broadcast %338 : f32 to vector<16x16xf32>
    %340 = arith.mulf %339, %337 : vector<16x16xf32>
    %341 = arith.addf %335, %340 : vector<16x16xf32>
    %c1_173 = arith.constant 1 : index
    %c5_174 = arith.constant 5 : index
    %c130_175 = arith.constant 130 : index
    %342 = vector.load %arg5[%c1_173, %c5_174, %c130_175] : memref<2x27x147xf32, #tpu.memory_space<vmem>>, vector<1x16x16xf32>
    %343 = vector.shape_cast %342 : vector<1x16x16xf32> to vector<16x16xf32>
    %c54 = arith.constant 54 : index
    %344 = memref.load %arg1[%c54] : memref<98xf32, #tpu.memory_space<smem>>
    %345 = vector.broadcast %344 : f32 to vector<16x16xf32>
    %346 = arith.mulf %345, %343 : vector<16x16xf32>
    %347 = arith.addf %341, %346 : vector<16x16xf32>
    %c1_176 = arith.constant 1 : index
    %c5_177 = arith.constant 5 : index
    %c131_178 = arith.constant 131 : index
    %348 = vector.load %arg5[%c1_176, %c5_177, %c131_178] : memref<2x27x147xf32, #tpu.memory_space<vmem>>, vector<1x16x16xf32>
    %349 = vector.shape_cast %348 : vector<1x16x16xf32> to vector<16x16xf32>
    %c55 = arith.constant 55 : index
    %350 = memref.load %arg1[%c55] : memref<98xf32, #tpu.memory_space<smem>>
    %351 = vector.broadcast %350 : f32 to vector<16x16xf32>
    %352 = arith.mulf %351, %349 : vector<16x16xf32>
    %353 = arith.addf %347, %352 : vector<16x16xf32>
    %c1_179 = arith.constant 1 : index
    %c6_180 = arith.constant 6 : index
    %c125_181 = arith.constant 125 : index
    %354 = vector.load %arg5[%c1_179, %c6_180, %c125_181] : memref<2x27x147xf32, #tpu.memory_space<vmem>>, vector<1x16x16xf32>
    %355 = vector.shape_cast %354 : vector<1x16x16xf32> to vector<16x16xf32>
    %c56 = arith.constant 56 : index
    %356 = memref.load %arg1[%c56] : memref<98xf32, #tpu.memory_space<smem>>
    %357 = vector.broadcast %356 : f32 to vector<16x16xf32>
    %358 = arith.mulf %357, %355 : vector<16x16xf32>
    %359 = arith.addf %353, %358 : vector<16x16xf32>
    %c1_182 = arith.constant 1 : index
    %c6_183 = arith.constant 6 : index
    %c126_184 = arith.constant 126 : index
    %360 = vector.load %arg5[%c1_182, %c6_183, %c126_184] : memref<2x27x147xf32, #tpu.memory_space<vmem>>, vector<1x16x16xf32>
    %361 = vector.shape_cast %360 : vector<1x16x16xf32> to vector<16x16xf32>
    %c57 = arith.constant 57 : index
    %362 = memref.load %arg1[%c57] : memref<98xf32, #tpu.memory_space<smem>>
    %363 = vector.broadcast %362 : f32 to vector<16x16xf32>
    %364 = arith.mulf %363, %361 : vector<16x16xf32>
    %365 = arith.addf %359, %364 : vector<16x16xf32>
    %c1_185 = arith.constant 1 : index
    %c6_186 = arith.constant 6 : index
    %c127_187 = arith.constant 127 : index
    %366 = vector.load %arg5[%c1_185, %c6_186, %c127_187] : memref<2x27x147xf32, #tpu.memory_space<vmem>>, vector<1x16x16xf32>
    %367 = vector.shape_cast %366 : vector<1x16x16xf32> to vector<16x16xf32>
    %c58 = arith.constant 58 : index
    %368 = memref.load %arg1[%c58] : memref<98xf32, #tpu.memory_space<smem>>
    %369 = vector.broadcast %368 : f32 to vector<16x16xf32>
    %370 = arith.mulf %369, %367 : vector<16x16xf32>
    %371 = arith.addf %365, %370 : vector<16x16xf32>
    %c1_188 = arith.constant 1 : index
    %c6_189 = arith.constant 6 : index
    %c128_190 = arith.constant 128 : index
    %372 = vector.load %arg5[%c1_188, %c6_189, %c128_190] : memref<2x27x147xf32, #tpu.memory_space<vmem>>, vector<1x16x16xf32>
    %373 = vector.shape_cast %372 : vector<1x16x16xf32> to vector<16x16xf32>
    %c59 = arith.constant 59 : index
    %374 = memref.load %arg1[%c59] : memref<98xf32, #tpu.memory_space<smem>>
    %375 = vector.broadcast %374 : f32 to vector<16x16xf32>
    %376 = arith.mulf %375, %373 : vector<16x16xf32>
    %377 = arith.addf %371, %376 : vector<16x16xf32>
    %c1_191 = arith.constant 1 : index
    %c6_192 = arith.constant 6 : index
    %c129_193 = arith.constant 129 : index
    %378 = vector.load %arg5[%c1_191, %c6_192, %c129_193] : memref<2x27x147xf32, #tpu.memory_space<vmem>>, vector<1x16x16xf32>
    %379 = vector.shape_cast %378 : vector<1x16x16xf32> to vector<16x16xf32>
    %c60 = arith.constant 60 : index
    %380 = memref.load %arg1[%c60] : memref<98xf32, #tpu.memory_space<smem>>
    %381 = vector.broadcast %380 : f32 to vector<16x16xf32>
    %382 = arith.mulf %381, %379 : vector<16x16xf32>
    %383 = arith.addf %377, %382 : vector<16x16xf32>
    %c1_194 = arith.constant 1 : index
    %c6_195 = arith.constant 6 : index
    %c130_196 = arith.constant 130 : index
    %384 = vector.load %arg5[%c1_194, %c6_195, %c130_196] : memref<2x27x147xf32, #tpu.memory_space<vmem>>, vector<1x16x16xf32>
    %385 = vector.shape_cast %384 : vector<1x16x16xf32> to vector<16x16xf32>
    %c61 = arith.constant 61 : index
    %386 = memref.load %arg1[%c61] : memref<98xf32, #tpu.memory_space<smem>>
    %387 = vector.broadcast %386 : f32 to vector<16x16xf32>
    %388 = arith.mulf %387, %385 : vector<16x16xf32>
    %389 = arith.addf %383, %388 : vector<16x16xf32>
    %c1_197 = arith.constant 1 : index
    %c6_198 = arith.constant 6 : index
    %c131_199 = arith.constant 131 : index
    %390 = vector.load %arg5[%c1_197, %c6_198, %c131_199] : memref<2x27x147xf32, #tpu.memory_space<vmem>>, vector<1x16x16xf32>
    %391 = vector.shape_cast %390 : vector<1x16x16xf32> to vector<16x16xf32>
    %c62 = arith.constant 62 : index
    %392 = memref.load %arg1[%c62] : memref<98xf32, #tpu.memory_space<smem>>
    %393 = vector.broadcast %392 : f32 to vector<16x16xf32>
    %394 = arith.mulf %393, %391 : vector<16x16xf32>
    %395 = arith.addf %389, %394 : vector<16x16xf32>
    %c1_200 = arith.constant 1 : index
    %c7_201 = arith.constant 7 : index
    %c125_202 = arith.constant 125 : index
    %396 = vector.load %arg5[%c1_200, %c7_201, %c125_202] : memref<2x27x147xf32, #tpu.memory_space<vmem>>, vector<1x16x16xf32>
    %397 = vector.shape_cast %396 : vector<1x16x16xf32> to vector<16x16xf32>
    %c63 = arith.constant 63 : index
    %398 = memref.load %arg1[%c63] : memref<98xf32, #tpu.memory_space<smem>>
    %399 = vector.broadcast %398 : f32 to vector<16x16xf32>
    %400 = arith.mulf %399, %397 : vector<16x16xf32>
    %401 = arith.addf %395, %400 : vector<16x16xf32>
    %c1_203 = arith.constant 1 : index
    %c7_204 = arith.constant 7 : index
    %c126_205 = arith.constant 126 : index
    %402 = vector.load %arg5[%c1_203, %c7_204, %c126_205] : memref<2x27x147xf32, #tpu.memory_space<vmem>>, vector<1x16x16xf32>
    %403 = vector.shape_cast %402 : vector<1x16x16xf32> to vector<16x16xf32>
    %c64 = arith.constant 64 : index
    %404 = memref.load %arg1[%c64] : memref<98xf32, #tpu.memory_space<smem>>
    %405 = vector.broadcast %404 : f32 to vector<16x16xf32>
    %406 = arith.mulf %405, %403 : vector<16x16xf32>
    %407 = arith.addf %401, %406 : vector<16x16xf32>
    %c1_206 = arith.constant 1 : index
    %c7_207 = arith.constant 7 : index
    %c127_208 = arith.constant 127 : index
    %408 = vector.load %arg5[%c1_206, %c7_207, %c127_208] : memref<2x27x147xf32, #tpu.memory_space<vmem>>, vector<1x16x16xf32>
    %409 = vector.shape_cast %408 : vector<1x16x16xf32> to vector<16x16xf32>
    %c65 = arith.constant 65 : index
    %410 = memref.load %arg1[%c65] : memref<98xf32, #tpu.memory_space<smem>>
    %411 = vector.broadcast %410 : f32 to vector<16x16xf32>
    %412 = arith.mulf %411, %409 : vector<16x16xf32>
    %413 = arith.addf %407, %412 : vector<16x16xf32>
    %c1_209 = arith.constant 1 : index
    %c7_210 = arith.constant 7 : index
    %c128_211 = arith.constant 128 : index
    %414 = vector.load %arg5[%c1_209, %c7_210, %c128_211] : memref<2x27x147xf32, #tpu.memory_space<vmem>>, vector<1x16x16xf32>
    %415 = vector.shape_cast %414 : vector<1x16x16xf32> to vector<16x16xf32>
    %c66 = arith.constant 66 : index
    %416 = memref.load %arg1[%c66] : memref<98xf32, #tpu.memory_space<smem>>
    %417 = vector.broadcast %416 : f32 to vector<16x16xf32>
    %418 = arith.mulf %417, %415 : vector<16x16xf32>
    %419 = arith.addf %413, %418 : vector<16x16xf32>
    %c1_212 = arith.constant 1 : index
    %c7_213 = arith.constant 7 : index
    %c129_214 = arith.constant 129 : index
    %420 = vector.load %arg5[%c1_212, %c7_213, %c129_214] : memref<2x27x147xf32, #tpu.memory_space<vmem>>, vector<1x16x16xf32>
    %421 = vector.shape_cast %420 : vector<1x16x16xf32> to vector<16x16xf32>
    %c67 = arith.constant 67 : index
    %422 = memref.load %arg1[%c67] : memref<98xf32, #tpu.memory_space<smem>>
    %423 = vector.broadcast %422 : f32 to vector<16x16xf32>
    %424 = arith.mulf %423, %421 : vector<16x16xf32>
    %425 = arith.addf %419, %424 : vector<16x16xf32>
    %c1_215 = arith.constant 1 : index
    %c7_216 = arith.constant 7 : index
    %c130_217 = arith.constant 130 : index
    %426 = vector.load %arg5[%c1_215, %c7_216, %c130_217] : memref<2x27x147xf32, #tpu.memory_space<vmem>>, vector<1x16x16xf32>
    %427 = vector.shape_cast %426 : vector<1x16x16xf32> to vector<16x16xf32>
    %c68 = arith.constant 68 : index
    %428 = memref.load %arg1[%c68] : memref<98xf32, #tpu.memory_space<smem>>
    %429 = vector.broadcast %428 : f32 to vector<16x16xf32>
    %430 = arith.mulf %429, %427 : vector<16x16xf32>
    %431 = arith.addf %425, %430 : vector<16x16xf32>
    %c1_218 = arith.constant 1 : index
    %c7_219 = arith.constant 7 : index
    %c131_220 = arith.constant 131 : index
    %432 = vector.load %arg5[%c1_218, %c7_219, %c131_220] : memref<2x27x147xf32, #tpu.memory_space<vmem>>, vector<1x16x16xf32>
    %433 = vector.shape_cast %432 : vector<1x16x16xf32> to vector<16x16xf32>
    %c69 = arith.constant 69 : index
    %434 = memref.load %arg1[%c69] : memref<98xf32, #tpu.memory_space<smem>>
    %435 = vector.broadcast %434 : f32 to vector<16x16xf32>
    %436 = arith.mulf %435, %433 : vector<16x16xf32>
    %437 = arith.addf %431, %436 : vector<16x16xf32>
    %c1_221 = arith.constant 1 : index
    %c8_222 = arith.constant 8 : index
    %c125_223 = arith.constant 125 : index
    %438 = vector.load %arg5[%c1_221, %c8_222, %c125_223] : memref<2x27x147xf32, #tpu.memory_space<vmem>>, vector<1x16x16xf32>
    %439 = vector.shape_cast %438 : vector<1x16x16xf32> to vector<16x16xf32>
    %c70 = arith.constant 70 : index
    %440 = memref.load %arg1[%c70] : memref<98xf32, #tpu.memory_space<smem>>
    %441 = vector.broadcast %440 : f32 to vector<16x16xf32>
    %442 = arith.mulf %441, %439 : vector<16x16xf32>
    %443 = arith.addf %437, %442 : vector<16x16xf32>
    %c1_224 = arith.constant 1 : index
    %c8_225 = arith.constant 8 : index
    %c126_226 = arith.constant 126 : index
    %444 = vector.load %arg5[%c1_224, %c8_225, %c126_226] : memref<2x27x147xf32, #tpu.memory_space<vmem>>, vector<1x16x16xf32>
    %445 = vector.shape_cast %444 : vector<1x16x16xf32> to vector<16x16xf32>
    %c71 = arith.constant 71 : index
    %446 = memref.load %arg1[%c71] : memref<98xf32, #tpu.memory_space<smem>>
    %447 = vector.broadcast %446 : f32 to vector<16x16xf32>
    %448 = arith.mulf %447, %445 : vector<16x16xf32>
    %449 = arith.addf %443, %448 : vector<16x16xf32>
    %c1_227 = arith.constant 1 : index
    %c8_228 = arith.constant 8 : index
    %c127_229 = arith.constant 127 : index
    %450 = vector.load %arg5[%c1_227, %c8_228, %c127_229] : memref<2x27x147xf32, #tpu.memory_space<vmem>>, vector<1x16x16xf32>
    %451 = vector.shape_cast %450 : vector<1x16x16xf32> to vector<16x16xf32>
    %c72 = arith.constant 72 : index
    %452 = memref.load %arg1[%c72] : memref<98xf32, #tpu.memory_space<smem>>
    %453 = vector.broadcast %452 : f32 to vector<16x16xf32>
    %454 = arith.mulf %453, %451 : vector<16x16xf32>
    %455 = arith.addf %449, %454 : vector<16x16xf32>
    %c1_230 = arith.constant 1 : index
    %c8_231 = arith.constant 8 : index
    %c128_232 = arith.constant 128 : index
    %456 = vector.load %arg5[%c1_230, %c8_231, %c128_232] : memref<2x27x147xf32, #tpu.memory_space<vmem>>, vector<1x16x16xf32>
    %457 = vector.shape_cast %456 : vector<1x16x16xf32> to vector<16x16xf32>
    %c73 = arith.constant 73 : index
    %458 = memref.load %arg1[%c73] : memref<98xf32, #tpu.memory_space<smem>>
    %459 = vector.broadcast %458 : f32 to vector<16x16xf32>
    %460 = arith.mulf %459, %457 : vector<16x16xf32>
    %461 = arith.addf %455, %460 : vector<16x16xf32>
    %c1_233 = arith.constant 1 : index
    %c8_234 = arith.constant 8 : index
    %c129_235 = arith.constant 129 : index
    %462 = vector.load %arg5[%c1_233, %c8_234, %c129_235] : memref<2x27x147xf32, #tpu.memory_space<vmem>>, vector<1x16x16xf32>
    %463 = vector.shape_cast %462 : vector<1x16x16xf32> to vector<16x16xf32>
    %c74 = arith.constant 74 : index
    %464 = memref.load %arg1[%c74] : memref<98xf32, #tpu.memory_space<smem>>
    %465 = vector.broadcast %464 : f32 to vector<16x16xf32>
    %466 = arith.mulf %465, %463 : vector<16x16xf32>
    %467 = arith.addf %461, %466 : vector<16x16xf32>
    %c1_236 = arith.constant 1 : index
    %c8_237 = arith.constant 8 : index
    %c130_238 = arith.constant 130 : index
    %468 = vector.load %arg5[%c1_236, %c8_237, %c130_238] : memref<2x27x147xf32, #tpu.memory_space<vmem>>, vector<1x16x16xf32>
    %469 = vector.shape_cast %468 : vector<1x16x16xf32> to vector<16x16xf32>
    %c75 = arith.constant 75 : index
    %470 = memref.load %arg1[%c75] : memref<98xf32, #tpu.memory_space<smem>>
    %471 = vector.broadcast %470 : f32 to vector<16x16xf32>
    %472 = arith.mulf %471, %469 : vector<16x16xf32>
    %473 = arith.addf %467, %472 : vector<16x16xf32>
    %c1_239 = arith.constant 1 : index
    %c8_240 = arith.constant 8 : index
    %c131_241 = arith.constant 131 : index
    %474 = vector.load %arg5[%c1_239, %c8_240, %c131_241] : memref<2x27x147xf32, #tpu.memory_space<vmem>>, vector<1x16x16xf32>
    %475 = vector.shape_cast %474 : vector<1x16x16xf32> to vector<16x16xf32>
    %c76 = arith.constant 76 : index
    %476 = memref.load %arg1[%c76] : memref<98xf32, #tpu.memory_space<smem>>
    %477 = vector.broadcast %476 : f32 to vector<16x16xf32>
    %478 = arith.mulf %477, %475 : vector<16x16xf32>
    %479 = arith.addf %473, %478 : vector<16x16xf32>
    %c1_242 = arith.constant 1 : index
    %c9_243 = arith.constant 9 : index
    %c125_244 = arith.constant 125 : index
    %480 = vector.load %arg5[%c1_242, %c9_243, %c125_244] : memref<2x27x147xf32, #tpu.memory_space<vmem>>, vector<1x16x16xf32>
    %481 = vector.shape_cast %480 : vector<1x16x16xf32> to vector<16x16xf32>
    %c77 = arith.constant 77 : index
    %482 = memref.load %arg1[%c77] : memref<98xf32, #tpu.memory_space<smem>>
    %483 = vector.broadcast %482 : f32 to vector<16x16xf32>
    %484 = arith.mulf %483, %481 : vector<16x16xf32>
    %485 = arith.addf %479, %484 : vector<16x16xf32>
    %c1_245 = arith.constant 1 : index
    %c9_246 = arith.constant 9 : index
    %c126_247 = arith.constant 126 : index
    %486 = vector.load %arg5[%c1_245, %c9_246, %c126_247] : memref<2x27x147xf32, #tpu.memory_space<vmem>>, vector<1x16x16xf32>
    %487 = vector.shape_cast %486 : vector<1x16x16xf32> to vector<16x16xf32>
    %c78 = arith.constant 78 : index
    %488 = memref.load %arg1[%c78] : memref<98xf32, #tpu.memory_space<smem>>
    %489 = vector.broadcast %488 : f32 to vector<16x16xf32>
    %490 = arith.mulf %489, %487 : vector<16x16xf32>
    %491 = arith.addf %485, %490 : vector<16x16xf32>
    %c1_248 = arith.constant 1 : index
    %c9_249 = arith.constant 9 : index
    %c127_250 = arith.constant 127 : index
    %492 = vector.load %arg5[%c1_248, %c9_249, %c127_250] : memref<2x27x147xf32, #tpu.memory_space<vmem>>, vector<1x16x16xf32>
    %493 = vector.shape_cast %492 : vector<1x16x16xf32> to vector<16x16xf32>
    %c79 = arith.constant 79 : index
    %494 = memref.load %arg1[%c79] : memref<98xf32, #tpu.memory_space<smem>>
    %495 = vector.broadcast %494 : f32 to vector<16x16xf32>
    %496 = arith.mulf %495, %493 : vector<16x16xf32>
    %497 = arith.addf %491, %496 : vector<16x16xf32>
    %c1_251 = arith.constant 1 : index
    %c9_252 = arith.constant 9 : index
    %c128_253 = arith.constant 128 : index
    %498 = vector.load %arg5[%c1_251, %c9_252, %c128_253] : memref<2x27x147xf32, #tpu.memory_space<vmem>>, vector<1x16x16xf32>
    %499 = vector.shape_cast %498 : vector<1x16x16xf32> to vector<16x16xf32>
    %c80 = arith.constant 80 : index
    %500 = memref.load %arg1[%c80] : memref<98xf32, #tpu.memory_space<smem>>
    %501 = vector.broadcast %500 : f32 to vector<16x16xf32>
    %502 = arith.mulf %501, %499 : vector<16x16xf32>
    %503 = arith.addf %497, %502 : vector<16x16xf32>
    %c1_254 = arith.constant 1 : index
    %c9_255 = arith.constant 9 : index
    %c129_256 = arith.constant 129 : index
    %504 = vector.load %arg5[%c1_254, %c9_255, %c129_256] : memref<2x27x147xf32, #tpu.memory_space<vmem>>, vector<1x16x16xf32>
    %505 = vector.shape_cast %504 : vector<1x16x16xf32> to vector<16x16xf32>
    %c81 = arith.constant 81 : index
    %506 = memref.load %arg1[%c81] : memref<98xf32, #tpu.memory_space<smem>>
    %507 = vector.broadcast %506 : f32 to vector<16x16xf32>
    %508 = arith.mulf %507, %505 : vector<16x16xf32>
    %509 = arith.addf %503, %508 : vector<16x16xf32>
    %c1_257 = arith.constant 1 : index
    %c9_258 = arith.constant 9 : index
    %c130_259 = arith.constant 130 : index
    %510 = vector.load %arg5[%c1_257, %c9_258, %c130_259] : memref<2x27x147xf32, #tpu.memory_space<vmem>>, vector<1x16x16xf32>
    %511 = vector.shape_cast %510 : vector<1x16x16xf32> to vector<16x16xf32>
    %c82 = arith.constant 82 : index
    %512 = memref.load %arg1[%c82] : memref<98xf32, #tpu.memory_space<smem>>
    %513 = vector.broadcast %512 : f32 to vector<16x16xf32>
    %514 = arith.mulf %513, %511 : vector<16x16xf32>
    %515 = arith.addf %509, %514 : vector<16x16xf32>
    %c1_260 = arith.constant 1 : index
    %c9_261 = arith.constant 9 : index
    %c131_262 = arith.constant 131 : index
    %516 = vector.load %arg5[%c1_260, %c9_261, %c131_262] : memref<2x27x147xf32, #tpu.memory_space<vmem>>, vector<1x16x16xf32>
    %517 = vector.shape_cast %516 : vector<1x16x16xf32> to vector<16x16xf32>
    %c83 = arith.constant 83 : index
    %518 = memref.load %arg1[%c83] : memref<98xf32, #tpu.memory_space<smem>>
    %519 = vector.broadcast %518 : f32 to vector<16x16xf32>
    %520 = arith.mulf %519, %517 : vector<16x16xf32>
    %521 = arith.addf %515, %520 : vector<16x16xf32>
    %c1_263 = arith.constant 1 : index
    %c10_264 = arith.constant 10 : index
    %c125_265 = arith.constant 125 : index
    %522 = vector.load %arg5[%c1_263, %c10_264, %c125_265] : memref<2x27x147xf32, #tpu.memory_space<vmem>>, vector<1x16x16xf32>
    %523 = vector.shape_cast %522 : vector<1x16x16xf32> to vector<16x16xf32>
    %c84 = arith.constant 84 : index
    %524 = memref.load %arg1[%c84] : memref<98xf32, #tpu.memory_space<smem>>
    %525 = vector.broadcast %524 : f32 to vector<16x16xf32>
    %526 = arith.mulf %525, %523 : vector<16x16xf32>
    %527 = arith.addf %521, %526 : vector<16x16xf32>
    %c1_266 = arith.constant 1 : index
    %c10_267 = arith.constant 10 : index
    %c126_268 = arith.constant 126 : index
    %528 = vector.load %arg5[%c1_266, %c10_267, %c126_268] : memref<2x27x147xf32, #tpu.memory_space<vmem>>, vector<1x16x16xf32>
    %529 = vector.shape_cast %528 : vector<1x16x16xf32> to vector<16x16xf32>
    %c85 = arith.constant 85 : index
    %530 = memref.load %arg1[%c85] : memref<98xf32, #tpu.memory_space<smem>>
    %531 = vector.broadcast %530 : f32 to vector<16x16xf32>
    %532 = arith.mulf %531, %529 : vector<16x16xf32>
    %533 = arith.addf %527, %532 : vector<16x16xf32>
    %c1_269 = arith.constant 1 : index
    %c10_270 = arith.constant 10 : index
    %c127_271 = arith.constant 127 : index
    %534 = vector.load %arg5[%c1_269, %c10_270, %c127_271] : memref<2x27x147xf32, #tpu.memory_space<vmem>>, vector<1x16x16xf32>
    %535 = vector.shape_cast %534 : vector<1x16x16xf32> to vector<16x16xf32>
    %c86 = arith.constant 86 : index
    %536 = memref.load %arg1[%c86] : memref<98xf32, #tpu.memory_space<smem>>
    %537 = vector.broadcast %536 : f32 to vector<16x16xf32>
    %538 = arith.mulf %537, %535 : vector<16x16xf32>
    %539 = arith.addf %533, %538 : vector<16x16xf32>
    %c1_272 = arith.constant 1 : index
    %c10_273 = arith.constant 10 : index
    %c128_274 = arith.constant 128 : index
    %540 = vector.load %arg5[%c1_272, %c10_273, %c128_274] : memref<2x27x147xf32, #tpu.memory_space<vmem>>, vector<1x16x16xf32>
    %541 = vector.shape_cast %540 : vector<1x16x16xf32> to vector<16x16xf32>
    %c87 = arith.constant 87 : index
    %542 = memref.load %arg1[%c87] : memref<98xf32, #tpu.memory_space<smem>>
    %543 = vector.broadcast %542 : f32 to vector<16x16xf32>
    %544 = arith.mulf %543, %541 : vector<16x16xf32>
    %545 = arith.addf %539, %544 : vector<16x16xf32>
    %c1_275 = arith.constant 1 : index
    %c10_276 = arith.constant 10 : index
    %c129_277 = arith.constant 129 : index
    %546 = vector.load %arg5[%c1_275, %c10_276, %c129_277] : memref<2x27x147xf32, #tpu.memory_space<vmem>>, vector<1x16x16xf32>
    %547 = vector.shape_cast %546 : vector<1x16x16xf32> to vector<16x16xf32>
    %c88 = arith.constant 88 : index
    %548 = memref.load %arg1[%c88] : memref<98xf32, #tpu.memory_space<smem>>
    %549 = vector.broadcast %548 : f32 to vector<16x16xf32>
    %550 = arith.mulf %549, %547 : vector<16x16xf32>
    %551 = arith.addf %545, %550 : vector<16x16xf32>
    %c1_278 = arith.constant 1 : index
    %c10_279 = arith.constant 10 : index
    %c130_280 = arith.constant 130 : index
    %552 = vector.load %arg5[%c1_278, %c10_279, %c130_280] : memref<2x27x147xf32, #tpu.memory_space<vmem>>, vector<1x16x16xf32>
    %553 = vector.shape_cast %552 : vector<1x16x16xf32> to vector<16x16xf32>
    %c89 = arith.constant 89 : index
    %554 = memref.load %arg1[%c89] : memref<98xf32, #tpu.memory_space<smem>>
    %555 = vector.broadcast %554 : f32 to vector<16x16xf32>
    %556 = arith.mulf %555, %553 : vector<16x16xf32>
    %557 = arith.addf %551, %556 : vector<16x16xf32>
    %c1_281 = arith.constant 1 : index
    %c10_282 = arith.constant 10 : index
    %c131_283 = arith.constant 131 : index
    %558 = vector.load %arg5[%c1_281, %c10_282, %c131_283] : memref<2x27x147xf32, #tpu.memory_space<vmem>>, vector<1x16x16xf32>
    %559 = vector.shape_cast %558 : vector<1x16x16xf32> to vector<16x16xf32>
    %c90 = arith.constant 90 : index
    %560 = memref.load %arg1[%c90] : memref<98xf32, #tpu.memory_space<smem>>
    %561 = vector.broadcast %560 : f32 to vector<16x16xf32>
    %562 = arith.mulf %561, %559 : vector<16x16xf32>
    %563 = arith.addf %557, %562 : vector<16x16xf32>
    %c1_284 = arith.constant 1 : index
    %c11_285 = arith.constant 11 : index
    %c125_286 = arith.constant 125 : index
    %564 = vector.load %arg5[%c1_284, %c11_285, %c125_286] : memref<2x27x147xf32, #tpu.memory_space<vmem>>, vector<1x16x16xf32>
    %565 = vector.shape_cast %564 : vector<1x16x16xf32> to vector<16x16xf32>
    %c91 = arith.constant 91 : index
    %566 = memref.load %arg1[%c91] : memref<98xf32, #tpu.memory_space<smem>>
    %567 = vector.broadcast %566 : f32 to vector<16x16xf32>
    %568 = arith.mulf %567, %565 : vector<16x16xf32>
    %569 = arith.addf %563, %568 : vector<16x16xf32>
    %c1_287 = arith.constant 1 : index
    %c11_288 = arith.constant 11 : index
    %c126_289 = arith.constant 126 : index
    %570 = vector.load %arg5[%c1_287, %c11_288, %c126_289] : memref<2x27x147xf32, #tpu.memory_space<vmem>>, vector<1x16x16xf32>
    %571 = vector.shape_cast %570 : vector<1x16x16xf32> to vector<16x16xf32>
    %c92 = arith.constant 92 : index
    %572 = memref.load %arg1[%c92] : memref<98xf32, #tpu.memory_space<smem>>
    %573 = vector.broadcast %572 : f32 to vector<16x16xf32>
    %574 = arith.mulf %573, %571 : vector<16x16xf32>
    %575 = arith.addf %569, %574 : vector<16x16xf32>
    %c1_290 = arith.constant 1 : index
    %c11_291 = arith.constant 11 : index
    %c127_292 = arith.constant 127 : index
    %576 = vector.load %arg5[%c1_290, %c11_291, %c127_292] : memref<2x27x147xf32, #tpu.memory_space<vmem>>, vector<1x16x16xf32>
    %577 = vector.shape_cast %576 : vector<1x16x16xf32> to vector<16x16xf32>
    %c93 = arith.constant 93 : index
    %578 = memref.load %arg1[%c93] : memref<98xf32, #tpu.memory_space<smem>>
    %579 = vector.broadcast %578 : f32 to vector<16x16xf32>
    %580 = arith.mulf %579, %577 : vector<16x16xf32>
    %581 = arith.addf %575, %580 : vector<16x16xf32>
    %c1_293 = arith.constant 1 : index
    %c11_294 = arith.constant 11 : index
    %c128_295 = arith.constant 128 : index
    %582 = vector.load %arg5[%c1_293, %c11_294, %c128_295] : memref<2x27x147xf32, #tpu.memory_space<vmem>>, vector<1x16x16xf32>
    %583 = vector.shape_cast %582 : vector<1x16x16xf32> to vector<16x16xf32>
    %c94 = arith.constant 94 : index
    %584 = memref.load %arg1[%c94] : memref<98xf32, #tpu.memory_space<smem>>
    %585 = vector.broadcast %584 : f32 to vector<16x16xf32>
    %586 = arith.mulf %585, %583 : vector<16x16xf32>
    %587 = arith.addf %581, %586 : vector<16x16xf32>
    %c1_296 = arith.constant 1 : index
    %c11_297 = arith.constant 11 : index
    %c129_298 = arith.constant 129 : index
    %588 = vector.load %arg5[%c1_296, %c11_297, %c129_298] : memref<2x27x147xf32, #tpu.memory_space<vmem>>, vector<1x16x16xf32>
    %589 = vector.shape_cast %588 : vector<1x16x16xf32> to vector<16x16xf32>
    %c95 = arith.constant 95 : index
    %590 = memref.load %arg1[%c95] : memref<98xf32, #tpu.memory_space<smem>>
    %591 = vector.broadcast %590 : f32 to vector<16x16xf32>
    %592 = arith.mulf %591, %589 : vector<16x16xf32>
    %593 = arith.addf %587, %592 : vector<16x16xf32>
    %c1_299 = arith.constant 1 : index
    %c11_300 = arith.constant 11 : index
    %c130_301 = arith.constant 130 : index
    %594 = vector.load %arg5[%c1_299, %c11_300, %c130_301] : memref<2x27x147xf32, #tpu.memory_space<vmem>>, vector<1x16x16xf32>
    %595 = vector.shape_cast %594 : vector<1x16x16xf32> to vector<16x16xf32>
    %c96 = arith.constant 96 : index
    %596 = memref.load %arg1[%c96] : memref<98xf32, #tpu.memory_space<smem>>
    %597 = vector.broadcast %596 : f32 to vector<16x16xf32>
    %598 = arith.mulf %597, %595 : vector<16x16xf32>
    %599 = arith.addf %593, %598 : vector<16x16xf32>
    %c1_302 = arith.constant 1 : index
    %c11_303 = arith.constant 11 : index
    %c131_304 = arith.constant 131 : index
    %600 = vector.load %arg5[%c1_302, %c11_303, %c131_304] : memref<2x27x147xf32, #tpu.memory_space<vmem>>, vector<1x16x16xf32>
    %601 = vector.shape_cast %600 : vector<1x16x16xf32> to vector<16x16xf32>
    %c97 = arith.constant 97 : index
    %602 = memref.load %arg1[%c97] : memref<98xf32, #tpu.memory_space<smem>>
    %603 = vector.broadcast %602 : f32 to vector<16x16xf32>
    %604 = arith.mulf %603, %601 : vector<16x16xf32>
    %605 = arith.addf %599, %604 : vector<16x16xf32>
    %606 = arith.negf %605 : vector<16x16xf32>
    %607 = math.exp %606 : vector<16x16xf32>
    %cst_305 = arith.constant 1.000000e+00 : f32
    %608 = vector.broadcast %cst_305 : f32 to vector<16x16xf32>
    %609 = arith.addf %608, %607 : vector<16x16xf32>
    %610 = arith.divf %608, %609 : vector<16x16xf32>
    %611 = vector.shape_cast %610 : vector<16x16xf32> to vector<1x16x16xf32>
    %612 = vector.broadcast %611 : vector<1x16x16xf32> to vector<8x16x16xf32>
    %613 = arith.mulf %1, %612 : vector<8x16x16xf32>
    %614 = vector.shape_cast %613 : vector<8x16x16xf32> to vector<1x8x16x16xf32>
    %c0_306 = arith.constant 0 : index
    %c0_307 = arith.constant 0 : index
    %c0_308 = arith.constant 0 : index
    %c0_309 = arith.constant 0 : index
    %615 = vector.load %arg4[%c0_306, %c0_307, %c0_308, %c0_309] : memref<1x8x16x16xf32, #tpu.memory_space<vmem>>, vector<1x8x16x16xf32>
    tpu.vector_store %arg4[%c0_306, %c0_307, %c0_308, %c0_309], %614 {strides = array<i32>} : memref<1x8x16x16xf32, #tpu.memory_space<vmem>>, vector<1x8x16x16xf32>,
    return
  }
  func.func @transform_0(%arg0: i32) -> i32 {
    %c0_i32 = arith.constant 0 : i32
    %c0_i32_0 = arith.constant 0 : i32
    return %c0_i32 : i32
  }
  func.func @transform_1(%arg0: i32) -> i32 {
    %c0_i32 = arith.constant 0 : i32
    %c0_i32_0 = arith.constant 0 : i32
    return %c0_i32 : i32
  }
  func.func @transform_2(%arg0: i32) -> (i32, i32, i32, i32) {
    %c0_i32 = arith.constant 0 : i32
    %c0_i32_0 = arith.constant 0 : i32
    %c0_i32_1 = arith.constant 0 : i32
    %c0_i32_2 = arith.constant 0 : i32
    return %arg0, %c0_i32, %c0_i32_0, %c0_i32_1 : i32, i32, i32, i32
  }
  func.func @transform_3(%arg0: i32) -> (i32, i32, i32, i32) {
    %c0_i32 = arith.constant 0 : i32
    %c0_i32_0 = arith.constant 0 : i32
    %c0_i32_1 = arith.constant 0 : i32
    %c0_i32_2 = arith.constant 0 : i32
    return %arg0, %c0_i32, %c0_i32_0, %c0_i32_1 : i32, i32, i32, i32
  }
}

</mosaic_0001>

<llo_original>
// kernel: spatial_gate.1
$region0: #{spatial_gate.1}
  #allocation0 [shape = 'u32[]', space=smem, size = 0x4, offset = 0x4, fixed_abs, tag = 'smem constant byte address 0x4 - core index']
  #allocation1 [shape = 'u32[144,128]{1,0:T(1,128)}', space=vmem, size = 0x12000, scoped, tag = 'internal scratch']
  #allocation2 [shape = 'f32[2,27,147]{2,1,0:T(8,128)}', space=vmem, size = 0x10000, scoped, tag = 'scratch operand']
  #allocation3 [shape = 'f32[1]{0:T(128)S(6)}', space=smem, size = 0x200, scoped, tag = 'scoped memory for spatial_gate.1']
  %s0 = inlined_call_operand.vmem [shape: f32[98], index: 0, kind: input, shape index: {}]
  %s1 = inlined_call_operand.<no memory space> [shape: f32[1], index: 1, kind: input, shape index: {}]
  %s2 = inlined_call_operand.hbm [shape: f32[2,8,16,16], index: 2, kind: input, shape index: {}]
  %s3 = inlined_call_operand.hbm [shape: f32[2,8,16,16], index: 3, kind: output, shape index: {}]
  %s4 = sld [smem:[#allocation0]]
  $region53: #{spatial_gate.1} parent=0
    _
  %s6 = ssub.s32 1, %s4
  %s7 = scalar_select 0, %s6, %s4
  %8 = sst [smem:[#allocation3]] %s1
  $region1: #{spatial_gate.1} parent=0
    #allocation4 [shape = 'u8[512]{0}', space=smem, size = 0x200, scoped, tag = 'input window, operand 0, single buffered']
    #allocation5 [shape = 's32[2]{0}', space=sflag, size = 0x8, scoped, tag = 'scoped memory for spatial_gate.1']
    #allocation6 [shape = 's32[2]{0}', space=sflag, size = 0x8, scoped, tag = 'scoped memory for spatial_gate.1']
    #allocation7 [shape = 's32[2]{0}', space=sflag, size = 0x8, scoped, tag = 'scoped memory for spatial_gate.1']
    #allocation8 [shape = 'u8[131072]{0}', space=vmem, size = 0x20000, scoped, tag = 'input window, operand 2']
    #allocation9 [shape = 'u8[131072]{0}', space=vmem, size = 0x20000, scoped, tag = 'output window, operand 0']
    %9 = vsyncpa [#allocation7], 0
    %10 = vsyncpa [#allocation5], 0
    %s11 = scalar_lea.sflag [#allocation5], 1
    %12 = vsyncpa %s11, 0
    %13 = vsyncpa [#allocation6], 0
    %s14 = scalar_lea.sflag [#allocation6], 1
    %15 = vsyncpa %s14, 0
    loop: start=0, step=1, limit=4
    $region2: #{spatial_gate.1} parent=1 // loop_pre_header
      _
    $region3: #{spatial_gate.1} parent=1 // loop_header
      %s17 = sphi 0, %s21
      %p18 = scmp.ge.s32.totalorder %s17, 4
      %s25 = sphi 0, %s25
      %s27 = sphi 0, %s25
      %s28 = sphi 0, %s27
      %s42 = sphi 0, %s28
      %s46 = sphi 0, %s46
      %s48 = sphi 0, %s46
      %s49 = sphi 0, %s48
      %s63 = sphi 0, %s49
      %s69 = sphi 0, %s71
      %s72 = sphi 0, %s69
      %s73 = sphi 0, %s72
      %s89 = sphi 0, %s73
      %s95 = sphi 0, %s97
      %s98 = sphi 0, %s95
      %s99 = sphi 0, %s98
      %s115 = sphi 0, %s99
    $region4: #{spatial_gate.1} parent=1 // loop_header_branch
      %20 = sbr.rel (%p18) target = $region8
    $region5: #{spatial_gate.1} parent=1 // loop_body
      %s22 = ssub.s32 %s17, 1
      %s23 = ssub.s32 %s17, 2
      %s24 = sadd.s32 %s17, 1
      %s26 = sadd.s32 %s25, 1
      %p29 = scmp.eq.s32.totalorder %s17, 1
      %p30 = scmp.ne.s32.totalorder %s25, %s27
      %p31 = scmp.eq.s32.totalorder %s17, 0
      %p32 = por %p30, %p31
      %p33 = scmp.ne.s32.totalorder %s25, %s27
      %p34 = scmp.eq.s32.totalorder %s22, 1
      %p35 = por %p33, %p34
      %p36 = scmp.ne.s32.totalorder %s27, %s28
      %p37 = scmp.eq.s32.totalorder %s22, 0
      %p38 = por %p36, %p37
      %p39 = scmp.ne.s32.totalorder %s27, %s28
      %p40 = scmp.eq.s32.totalorder %s23, 1
      %p41 = por %p39, %p40
      %p43 = scmp.ne.s32.totalorder %s28, %s42
      %p44 = scmp.eq.s32.totalorder %s23, 0
      %p45 = por %p43, %p44
      %s47 = sadd.s32 %s46, 1
      %p50 = scmp.eq.s32.totalorder %s17, 1
      %p51 = scmp.ne.s32.totalorder %s46, %s48
      %p52 = scmp.eq.s32.totalorder %s17, 0
      %p53 = por %p51, %p52
      %p54 = scmp.ne.s32.totalorder %s46, %s48
      %p55 = scmp.eq.s32.totalorder %s22, 1
      %p56 = por %p54, %p55
      %p57 = scmp.ne.s32.totalorder %s48, %s49
      %p58 = scmp.eq.s32.totalorder %s22, 0
      %p59 = por %p57, %p58
      %p60 = scmp.ne.s32.totalorder %s48, %s49
      %p61 = scmp.eq.s32.totalorder %s23, 1
      %p62 = por %p60, %p61
      %p64 = scmp.ne.s32.totalorder %s49, %s63
      %p65 = scmp.eq.s32.totalorder %s23, 0
      %p66 = por %p64, %p65
      %s67 = ssub.s32 %s17, %s24
      %p68 = scmp.eq.s32.totalorder %s67, 0
      %s70 = sadd.s32 %s69, 1
      %s71 = scalar_select %p68, %s69, %s70
      %p74 = pneg %p68
      %p75 = scmp.eq.s32.totalorder %s17, 1
      %p76 = por %p74, %p75
      %p77 = scmp.ne.s32.totalorder %s69, %s72
      %p78 = scmp.eq.s32.totalorder %s17, 0
      %p79 = por %p77, %p78
      %p80 = scmp.ne.s32.totalorder %s69, %s72
      %p81 = scmp.eq.s32.totalorder %s22, 1
      %p82 = por %p80, %p81
      %p83 = scmp.ne.s32.totalorder %s72, %s73
      %p84 = scmp.eq.s32.totalorder %s22, 0
      %p85 = por %p83, %p84
      %p86 = scmp.ne.s32.totalorder %s72, %s73
      %p87 = scmp.eq.s32.totalorder %s23, 1
      %p88 = por %p86, %p87
      %p90 = scmp.ne.s32.totalorder %s73, %s89
      %p91 = scmp.eq.s32.totalorder %s23, 0
      %p92 = por %p90, %p91
      %s93 = ssub.s32 %s17, %s24
      %p94 = scmp.eq.s32.totalorder %s93, 0
      %s96 = sadd.s32 %s95, 1
      %s97 = scalar_select %p94, %s95, %s96
      %p100 = pneg %p94
      %p101 = scmp.eq.s32.totalorder %s17, 1
      %p102 = por %p100, %p101
      %p103 = scmp.ne.s32.totalorder %s95, %s98
      %p104 = scmp.eq.s32.totalorder %s17, 0
      %p105 = por %p103, %p104
      %p106 = scmp.ne.s32.totalorder %s95, %s98
      %p107 = scmp.eq.s32.totalorder %s22, 1
      %p108 = por %p106, %p107
      %p109 = scmp.ne.s32.totalorder %s98, %s99
      %p110 = scmp.eq.s32.totalorder %s22, 0
      %p111 = por %p109, %p110
      %p112 = scmp.ne.s32.totalorder %s98, %s99
      %p113 = scmp.eq.s32.totalorder %s23, 1
      %p114 = por %p112, %p113
      %p116 = scmp.ne.s32.totalorder %s99, %s115
      %p117 = scmp.eq.s32.totalorder %s23, 0
      %p118 = por %p116, %p117
      %p119 = scmp.le.s32.totalorder 1, %s17
      %p120 = scmp.lt.s32.totalorder %s17, 3
      %p121 = pnand %p119, %p120
      %p122 = pneg %p121
      // Predicated region
      $region9: #{spatial_gate.1} parent=5 // pred_check
        _
      $region10: #{spatial_gate.1} parent=5 // pred_check_branch
        %124 = sbr.rel (%p121) target = $region12
      $region11: #{spatial_gate.1} parent=5 // pred_region
        %s125 = ssub.s32 %s17, 1
        // Predicated region
        $region13: #{spatial_gate.1} parent=11 // pred_check
          %p126 = pneg %p38
        $region14: #{spatial_gate.1} parent=11 // pred_check_branch
          %128 = sbr.rel (%p126) target = $region16
        $region15: #{spatial_gate.1} parent=11 // pred_region
          %s130 = ssub.s32 16, 16
          %131 = vsyncadd [#allocation7], %s130
          %s133 = sshll.u32 %s0, 4
          %s134 = int_to_ptr.vmem [resolvable:$true] %s133
          %136 = dma.vmem_to_smem %s134, 16, [#allocation4], [#allocation7]
        $region16: #{spatial_gate.1} parent=11 // pred_fallthru
          _
        // Predicated region
        $region17: #{spatial_gate.1} parent=11 // pred_check
          %p137 = pneg %p59
        $region18: #{spatial_gate.1} parent=11 // pred_check_branch
          %139 = sbr.rel (%p137) target = $region20
        $region19: #{spatial_gate.1} parent=11 // pred_region
          _
        $region20: #{spatial_gate.1} parent=11 // pred_fallthru
          _
      $region12: #{spatial_gate.1} parent=5 // pred_fallthru
        _
      %p140 = scmp.lt.s32.totalorder %s17, 2
      // Predicated region
      $region21: #{spatial_gate.1} parent=5 // pred_check
        %p141 = pneg %p140
      $region22: #{spatial_gate.1} parent=5 // pred_check_branch
        %143 = sbr.rel (%p141) target = $region24
      $region23: #{spatial_gate.1} parent=5 // pred_region
        // Predicated region
        $region25: #{spatial_gate.1} parent=23 // pred_check
          %p144 = pneg %p79
        $region26: #{spatial_gate.1} parent=23 // pred_check_branch
          %146 = sbr.rel (%p144) target = $region28
        $region27: #{spatial_gate.1} parent=23 // pred_region
          %s147 = sand.u32 %s69, 1
          %s148 = scalar_lea.sflag [#allocation5], %s147
          %s149 = sand.u32 %s69, 1
          %s150 = smul.addr %s149, 128
          %s151 = scalar_lea.vmem [#allocation8], %s150
          %s153 = ssub.s32 2048, 2048
          %154 = vsyncadd %s148, %s153
          %s155 = smul.addr %s17, 16
          %s156 = smul.addr %s155, 128
          %s157 = scalar_lea.hbm %s2, %s156
          %s158 = sshll.u32 %s151, 4
          %s159 = int_to_ptr.vmem [resolvable:$true] %s158
          %164 = dma.hbm_to_vmem [thread:$0]  %s157, 2048, %s159, %s148, 128, 128, 8
        $region28: #{spatial_gate.1} parent=23 // pred_fallthru
          _
      $region24: #{spatial_gate.1} parent=5 // pred_fallthru
        _
      %p165 = scmp.le.s32.totalorder 1, %s17
      %p166 = scmp.lt.s32.totalorder %s17, 3
      %p167 = pnand %p165, %p166
      %p168 = pneg %p167
      // Predicated region
      $region29: #{spatial_gate.1} parent=5 // pred_check
        _
      $region30: #{spatial_gate.1} parent=5 // pred_check_branch
        %170 = sbr.rel (%p167) target = $region32
      $region31: #{spatial_gate.1} parent=5 // pred_region
        %s171 = ssub.s32 %s17, 1
        // Predicated region
        $region33: #{spatial_gate.1} parent=31 // pred_check
          %p172 = pneg %p38
        $region34: #{spatial_gate.1} parent=31 // pred_check_branch
          %174 = sbr.rel (%p172) target = $region36
        $region35: #{spatial_gate.1} parent=31 // pred_region
          %175 = dma.done [#allocation7], 16
        $region36: #{spatial_gate.1} parent=31 // pred_fallthru
          _
        %s176 = sand.u32 %s72, 1
        %s177 = scalar_lea.sflag [#allocation5], %s176
        %s178 = sand.u32 %s72, 1
        %s179 = smul.addr %s178, 128
        %s180 = scalar_lea.vmem [#allocation8], %s179
        // Predicated region
        $region37: #{spatial_gate.1} parent=31 // pred_check
          %p181 = pneg %p85
        $region38: #{spatial_gate.1} parent=31 // pred_check_branch
          %183 = sbr.rel (%p181) target = $region40
        $region39: #{spatial_gate.1} parent=31 // pred_region
          %184 = dma.done %s177, 2048
        $region40: #{spatial_gate.1} parent=31 // pred_fallthru
          _
        %185 = sfence
        %p186 = pneg %p38
        %p187 = pneg %p35
        %p188 = pneg %p59
        %p189 = pneg %p56
        %s190 = sand.u32 %s72, 1
        %s191 = scalar_lea.sflag [#allocation5], %s190
        %s192 = sand.u32 %s72, 1
        %s193 = smul.addr %s192, 128
        %s194 = scalar_lea.vmem [#allocation8], %s193
        %p195 = pneg %p85
        %p196 = pneg %p82
        %p197 = pneg %p111
        %p198 = pneg %p108
        %s199 = sand.u32 %s98, 1
        %s200 = scalar_lea.sflag [#allocation6], %s199
        %s201 = sand.u32 %s98, 1
        %s202 = smul.addr %s201, 128
        %s203 = scalar_lea.vmem [#allocation9], %s202
        %v204 = vld [vmem:[%s180] sm:$0xff]
        %v205 = vld [vmem:[%s180 + $0x8] sm:$0xff]
        %v206 = vld [vmem:[%s180 + $0x10] sm:$0xff]
        %v207 = vld [vmem:[%s180 + $0x18] sm:$0xff]
        %v208 = vld [vmem:[%s180 + $0x20] sm:$0xff]
        %v209 = vld [vmem:[%s180 + $0x28] sm:$0xff]
        %v210 = vld [vmem:[%s180 + $0x30] sm:$0xff]
        %v211 = vld [vmem:[%s180 + $0x38] sm:$0xff]
        %v212 = vld [vmem:[%s180 + $0x40] sm:$0xff]
        %v213 = vld [vmem:[%s180 + $0x48] sm:$0xff]
        %v214 = vld [vmem:[%s180 + $0x50] sm:$0xff]
        %v215 = vld [vmem:[%s180 + $0x58] sm:$0xff]
        %v216 = vld [vmem:[%s180 + $0x60] sm:$0xff]
        %v217 = vld [vmem:[%s180 + $0x68] sm:$0xff]
        %v218 = vld [vmem:[%s180 + $0x70] sm:$0xff]
        %v219 = vld [vmem:[%s180 + $0x78] sm:$0xff]
        %vm220 = vcmask 130048
        %v221 = vsel %vm220, %v204, -inf
        %v222 = vsel %vm220, %v206, -inf
        %v223 = vsel %vm220, %v208, -inf
        %v224 = vmax.f32 %v221, %v223
        %v225 = vsel %vm220, %v210, -inf
        %v226 = vmax.f32 %v222, %v225
        %v227 = vsel %vm220, %v212, -inf
        %v228 = vmax.f32 %v224, %v227
        %v229 = vsel %vm220, %v214, -inf
        %v230 = vmax.f32 %v226, %v229
        %v231 = vsel %vm220, %v216, -inf
        %v232 = vmax.f32 %v228, %v231
        %v233 = vsel %vm220, %v218, -inf
        %v234 = vmax.f32 %v230, %v233
        %v235 = vmax.f32 %v232, %v234
        %v236 = vsel %vm220, %v205, -inf
        %v237 = vsel %vm220, %v207, -inf
        %v238 = vsel %vm220, %v209, -inf
        %v239 = vmax.f32 %v236, %v238
        %v240 = vsel %vm220, %v211, -inf
        %v241 = vmax.f32 %v237, %v240
        %v242 = vsel %vm220, %v213, -inf
        %v243 = vmax.f32 %v239, %v242
        %v244 = vsel %vm220, %v215, -inf
        %v245 = vmax.f32 %v241, %v244
        %v246 = vsel %vm220, %v217, -inf
        %v247 = vmax.f32 %v243, %v246
        %v248 = vsel %vm220, %v219, -inf
        %v249 = vmax.f32 %v245, %v248
        %v250 = vmax.f32 %v247, %v249
        %v251 = vsel %vm220, %v204, 0.0
        %v252 = vsel %vm220, %v206, 0.0
        %v253 = vadd.f32 %v251, %v252
        %v254 = vsel %vm220, %v208, 0.0
        %v255 = vadd.f32 %v253, %v254
        %v256 = vsel %vm220, %v210, 0.0
        %v257 = vadd.f32 %v255, %v256
        %v258 = vsel %vm220, %v212, 0.0
        %v259 = vadd.f32 %v257, %v258
        %v260 = vsel %vm220, %v214, 0.0
        %v261 = vadd.f32 %v259, %v260
        %v262 = vsel %vm220, %v216, 0.0
        %v263 = vadd.f32 %v261, %v262
        %v264 = vsel %vm220, %v218, 0.0
        %v265 = vadd.f32 %v263, %v264
        %v266 = vsel %vm220, %v205, 0.0
        %v267 = vsel %vm220, %v207, 0.0
        %v268 = vadd.f32 %v266, %v267
        %v269 = vsel %vm220, %v209, 0.0
        %v270 = vadd.f32 %v268, %v269
        %v271 = vsel %vm220, %v211, 0.0
        %v272 = vadd.f32 %v270, %v271
        %v273 = vsel %vm220, %v213, 0.0
        %v274 = vadd.f32 %v272, %v273
        %v275 = vsel %vm220, %v215, 0.0
        %v276 = vadd.f32 %v274, %v275
        %v277 = vsel %vm220, %v217, 0.0
        %v278 = vadd.f32 %v276, %v277
        %v279 = vsel %vm220, %v219, 0.0
        %v280 = vadd.f32 %v278, %v279
        %v281 = vmul.f32 %v265, 0.125
        %v282 = vmul.f32 %v280, 0.125
        %283 = vst [vmem:[#allocation2] sm:$0xff] 0.0
        %vm284 = vcmask 154624
        %285 = vst.msk [vmem:[#allocation2 + $0x8] sm:$0xff] %vm284, 0.0
        %286 = vst [vmem:[#allocation2 + $0x10] sm:$0xff] 0.0
        %287 = vst.msk [vmem:[#allocation2 + $0x18] sm:$0xff] %vm284, 0.0
        %288 = vst [vmem:[#allocation2 + $0x20] sm:$0xff] 0.0
        %289 = vst.msk [vmem:[#allocation2 + $0x28] sm:$0xff] %vm284, 0.0
        %290 = vst [vmem:[#allocation2 + $0x30] sm:$0x7] 0.0
        %vm291 = vcmask 149504
        %292 = vst.msk [vmem:[#allocation2 + $0x38] sm:$0x7] %vm291, 0.0
        %293 = vst [vmem:[#allocation2 + $0x40] sm:$0xff] 0.0
        %294 = vst.msk [vmem:[#allocation2 + $0x48] sm:$0xff] %vm284, 0.0
        %295 = vst [vmem:[#allocation2 + $0x50] sm:$0xff] 0.0
        %296 = vst.msk [vmem:[#allocation2 + $0x58] sm:$0xff] %vm284, 0.0
        %297 = vst [vmem:[#allocation2 + $0x60] sm:$0xff] 0.0
        %298 = vst.msk [vmem:[#allocation2 + $0x68] sm:$0xff] %vm284, 0.0
        %299 = vst [vmem:[#allocation2 + $0x70] sm:$0x7] 0.0
        %300 = vst.msk [vmem:[#allocation2 + $0x78] sm:$0x7] %vm291, 0.0
        %301 = vst.msk [vmem:[#allocation2 + $0x18] sm:$0xff] %vm220, %v235
        %302 = vst.msk [vmem:[#allocation2 + $0x28] sm:$0xff] %vm220, %v250
        %s303 = scalar_lea.vmem [#allocation2], 64
        %304 = vst.msk [vmem:[%s303 + $0x18] sm:$0xff] %vm220, %v281
        %305 = vst.msk [vmem:[%s303 + $0x28] sm:$0xff] %vm220, %v282
        %s306 = sld [smem:[#allocation3]]
        %v307 = vstv %s306
        %v308 = vadd.f32 %v307, 0.0
        %v309 = vld [vmem:[#allocation2] sm:$0xe0]
        %v310 = vld [vmem:[#allocation2 + $0x8] sm:$0xe0]
        %v311 = vld [vmem:[#allocation2 + $0x10] sm:$0xff]
        %v312 = vld [vmem:[#allocation2 + $0x18] sm:$0xff]
        %v313 = vld [vmem:[#allocation2 + $0x20] sm:$0x1f]
        %v314 = vld [vmem:[#allocation2 + $0x28] sm:$0x1f]
        %s315 = sld [smem:[#allocation4]]
        %v316 = vstv %s315
        %v317 = vmul.f32 %v316, %v309
        %v318 = vmul.f32 %v316, %v310
        %v319 = vmul.f32 %v316, %v311
        %v320 = vmul.f32 %v316, %v312
        %v321 = vmul.f32 %v316, %v313
        %v322 = vmul.f32 %v316, %v314
        %v323 = vadd.f32 %v308, %v317
        %v324 = vadd.f32 %v308, %v318
        %v325 = vadd.f32 %v308, %v319
        %v326 = vadd.f32 %v308, %v320
        %v327 = vadd.f32 %v308, %v321
        %v328 = vadd.f32 %v308, %v322
        %s329 = sld [smem:[#allocation4 + $0x1]]
        %v330 = vstv %s329
        %v331 = vmul.f32 %v330, %v309
        %v332 = vmul.f32 %v330, %v310
        %v333 = vmul.f32 %v330, %v311
        %v334 = vmul.f32 %v330, %v312
        %v335 = vmul.f32 %v330, %v313
        %v336 = vmul.f32 %v330, %v314
        %343 = vrot.lane.b32.xlu0 %v331, 127
        %v344 = vpop.permute.xlu0 %343
        %345 = vrot.lane.b32.xlu0 %v332, 127
        %v346 = vpop.permute.xlu0 %345
        %347 = vrot.lane.b32.xlu0 %v333, 127
        %v348 = vpop.permute.xlu0 %347
        %349 = vrot.lane.b32.xlu0 %v334, 127
        %v350 = vpop.permute.xlu0 %349
        %351 = vrot.lane.b32.xlu0 %v335, 127
        %v352 = vpop.permute.xlu0 %351
        %353 = vrot.lane.b32.xlu0 %v336, 127
        %v354 = vpop.permute.xlu0 %353
        %vm355 = vcmask 1039360
        %v356 = vsel %vm355, %v344, %v346
        %v357 = vsel %vm355, %v348, %v350
        %v358 = vsel %vm355, %v352, %v354
        %v365 = vadd.f32 %v323, %v356
        %v366 = vadd.f32 %v324, %v346
        %v367 = vadd.f32 %v325, %v357
        %v368 = vadd.f32 %v326, %v350
        %v369 = vadd.f32 %v327, %v358
        %v370 = vadd.f32 %v328, %v354
        %s371 = sld [smem:[#allocation4 + $0x2]]
        %v372 = vstv %s371
        %v373 = vmul.f32 %v372, %v309
        %v374 = vmul.f32 %v372, %v310
        %v375 = vmul.f32 %v372, %v311
        %v376 = vmul.f32 %v372, %v312
        %v377 = vmul.f32 %v372, %v313
        %v378 = vmul.f32 %v372, %v314
        %385 = vrot.lane.b32.xlu0 %v373, 126
        %v386 = vpop.permute.xlu0 %385
        %387 = vrot.lane.b32.xlu0 %v374, 126
        %v388 = vpop.permute.xlu0 %387
        %389 = vrot.lane.b32.xlu0 %v375, 126
        %v390 = vpop.permute.xlu0 %389
        %391 = vrot.lane.b32.xlu0 %v376, 126
        %v392 = vpop.permute.xlu0 %391
        %393 = vrot.lane.b32.xlu0 %v377, 126
        %v394 = vpop.permute.xlu0 %393
        %395 = vrot.lane.b32.xlu0 %v378, 126
        %v396 = vpop.permute.xlu0 %395
        %vm397 = vcmask 1031168
        %v398 = vsel %vm397, %v386, %v388
        %v399 = vsel %vm397, %v390, %v392
        %v400 = vsel %vm397, %v394, %v396
        %v407 = vadd.f32 %v365, %v398
        %v408 = vadd.f32 %v366, %v388
        %v409 = vadd.f32 %v367, %v399
        %v410 = vadd.f32 %v368, %v392
        %v411 = vadd.f32 %v369, %v400
        %v412 = vadd.f32 %v370, %v396
        %s413 = sld [smem:[#allocation4 + $0x3]]
        %v414 = vstv %s413
        %v415 = vmul.f32 %v414, %v310
        %v416 = vmul.f32 %v414, %v312
        %v417 = vmul.f32 %v414, %v314
        %421 = vrot.lane.b32.xlu0 %v415, 125
        %v422 = vpop.permute.xlu0 %421
        %423 = vrot.lane.b32.xlu0 %v416, 125
        %v424 = vpop.permute.xlu0 %423
        %425 = vrot.lane.b32.xlu0 %v417, 125
        %v426 = vpop.permute.xlu0 %425
        %v430 = vadd.f32 %v407, %v422
        %v431 = vadd.f32 %v408, %v422
        %v432 = vadd.f32 %v409, %v424
        %v433 = vadd.f32 %v410, %v424
        %v434 = vadd.f32 %v411, %v426
        %v435 = vadd.f32 %v412, %v426
        %s436 = sld [smem:[#allocation4 + $0x4]]
        %v437 = vstv %s436
        %v438 = vmul.f32 %v437, %v310
        %v439 = vmul.f32 %v437, %v312
        %v440 = vmul.f32 %v437, %v314
        %444 = vrot.lane.b32.xlu0 %v438, 124
        %v445 = vpop.permute.xlu0 %444
        %446 = vrot.lane.b32.xlu0 %v439, 124
        %v447 = vpop.permute.xlu0 %446
        %448 = vrot.lane.b32.xlu0 %v440, 124
        %v449 = vpop.permute.xlu0 %448
        %v453 = vadd.f32 %v430, %v445
        %v454 = vadd.f32 %v431, %v445
        %v455 = vadd.f32 %v432, %v447
        %v456 = vadd.f32 %v433, %v447
        %v457 = vadd.f32 %v434, %v449
        %v458 = vadd.f32 %v435, %v449
        %s459 = sld [smem:[#allocation4 + $0x5]]
        %v460 = vstv %s459
        %v461 = vmul.f32 %v460, %v310
        %v462 = vmul.f32 %v460, %v312
        %v463 = vmul.f32 %v460, %v314
        %467 = vrot.lane.b32.xlu0 %v461, 123
        %v468 = vpop.permute.xlu0 %467
        %469 = vrot.lane.b32.xlu0 %v462, 123
        %v470 = vpop.permute.xlu0 %469
        %471 = vrot.lane.b32.xlu0 %v463, 123
        %v472 = vpop.permute.xlu0 %471
        %v476 = vadd.f32 %v453, %v468
        %v477 = vadd.f32 %v454, %v468
        %v478 = vadd.f32 %v455, %v470
        %v479 = vadd.f32 %v456, %v470
        %v480 = vadd.f32 %v457, %v472
        %v481 = vadd.f32 %v458, %v472
        %s482 = sld [smem:[#allocation4 + $0x6]]
        %v483 = vstv %s482
        %v484 = vmul.f32 %v483, %v310
        %v485 = vmul.f32 %v483, %v312
        %v486 = vmul.f32 %v483, %v314
        %490 = vrot.lane.b32.xlu0 %v484, 122
        %v491 = vpop.permute.xlu0 %490
        %492 = vrot.lane.b32.xlu0 %v485, 122
        %v493 = vpop.permute.xlu0 %492
        %494 = vrot.lane.b32.xlu0 %v486, 122
        %v495 = vpop.permute.xlu0 %494
        %v499 = vadd.f32 %v476, %v491
        %v500 = vadd.f32 %v477, %v491
        %v501 = vadd.f32 %v478, %v493
        %v502 = vadd.f32 %v479, %v493
        %v503 = vadd.f32 %v480, %v495
        %v504 = vadd.f32 %v481, %v495
        %v505 = vld [vmem:[#allocation2] sm:$0xc0]
        %v506 = vld [vmem:[#allocation2 + $0x8] sm:$0xc0]
        %v507 = vld [vmem:[#allocation2 + $0x20] sm:$0x3f]
        %v508 = vld [vmem:[#allocation2 + $0x28] sm:$0x3f]
        %s509 = sld [smem:[#allocation4 + $0x7]]
        %v510 = vstv %s509
        %v511 = vmul.f32 %v510, %v505
        %v512 = vmul.f32 %v510, %v506
        %v513 = vmul.f32 %v510, %v311
        %v514 = vmul.f32 %v510, %v312
        %v515 = vmul.f32 %v510, %v507
        %v516 = vmul.f32 %v510, %v508
        %vm523 = vcmask 1046528
        %v524 = vrot.slane %v511, 1
        %v525 = vrot.slane %v513, 1
        %v526 = vsel %vm523, %v524, %v525
        %v527 = vrot.slane %v512, 1
        %v528 = vrot.slane %v514, 1
        %v529 = vsel %vm523, %v527, %v528
        %v530 = vrot.slane %v515, 1
        %v531 = vsel %vm523, %v525, %v530
        %v532 = vrot.slane %v516, 1
        %v533 = vsel %vm523, %v528, %v532
        %v540 = vadd.f32 %v499, %v526
        %v541 = vadd.f32 %v500, %v529
        %v542 = vadd.f32 %v501, %v531
        %v543 = vadd.f32 %v502, %v533
        %v544 = vadd.f32 %v503, %v530
        %v545 = vadd.f32 %v504, %v532
        %s546 = sld [smem:[#allocation4 + $0x8]]
        %v547 = vstv %s546
        %v548 = vmul.f32 %v547, %v505
        %v549 = vmul.f32 %v547, %v506
        %v550 = vmul.f32 %v547, %v311
        %v551 = vmul.f32 %v547, %v312
        %v552 = vmul.f32 %v547, %v507
        %v553 = vmul.f32 %v547, %v508
        %v560 = vrot.slane %v548, 1
        %v561 = vrot.slane %v550, 1
        %v562 = vsel %vm523, %v560, %v561
        %v563 = vrot.slane %v549, 1
        %v564 = vrot.slane %v551, 1
        %v565 = vsel %vm523, %v563, %v564
        %v566 = vrot.slane %v552, 1
        %v567 = vsel %vm523, %v561, %v566
        %v568 = vrot.slane %v553, 1
        %v569 = vsel %vm523, %v564, %v568
        %570 = vrot.lane.b32.xlu0 %v562, 127
        %v571 = vpop.permute.xlu0 %570
        %572 = vrot.lane.b32.xlu0 %v565, 127
        %v573 = vpop.permute.xlu0 %572
        %574 = vrot.lane.b32.xlu0 %v567, 127
        %v575 = vpop.permute.xlu0 %574
        %576 = vrot.lane.b32.xlu0 %v569, 127
        %v577 = vpop.permute.xlu0 %576
        %578 = vrot.lane.b32.xlu0 %v566, 127
        %v579 = vpop.permute.xlu0 %578
        %580 = vrot.lane.b32.xlu0 %v568, 127
        %v581 = vpop.permute.xlu0 %580
        %v582 = vsel %vm355, %v571, %v573
        %v583 = vsel %vm355, %v575, %v577
        %v584 = vsel %vm355, %v579, %v581
        %v591 = vadd.f32 %v540, %v582
        %v592 = vadd.f32 %v541, %v573
        %v593 = vadd.f32 %v542, %v583
        %v594 = vadd.f32 %v543, %v577
        %v595 = vadd.f32 %v544, %v584
        %v596 = vadd.f32 %v545, %v581
        %s597 = sld [smem:[#allocation4 + $0x9]]
        %v598 = vstv %s597
        %v599 = vmul.f32 %v598, %v505
        %v600 = vmul.f32 %v598, %v506
        %v601 = vmul.f32 %v598, %v311
        %v602 = vmul.f32 %v598, %v312
        %v603 = vmul.f32 %v598, %v507
        %v604 = vmul.f32 %v598, %v508
        %v611 = vrot.slane %v599, 1
        %v612 = vrot.slane %v601, 1
        %v613 = vsel %vm523, %v611, %v612
        %v614 = vrot.slane %v600, 1
        %v615 = vrot.slane %v602, 1
        %v616 = vsel %vm523, %v614, %v615
        %v617 = vrot.slane %v603, 1
        %v618 = vsel %vm523, %v612, %v617
        %v619 = vrot.slane %v604, 1
        %v620 = vsel %vm523, %v615, %v619
        %621 = vrot.lane.b32.xlu0 %v613, 126
        %v622 = vpop.permute.xlu0 %621
        %623 = vrot.lane.b32.xlu0 %v616, 126
        %v624 = vpop.permute.xlu0 %623
        %625 = vrot.lane.b32.xlu0 %v618, 126
        %v626 = vpop.permute.xlu0 %625
        %627 = vrot.lane.b32.xlu0 %v620, 126
        %v628 = vpop.permute.xlu0 %627
        %629 = vrot.lane.b32.xlu0 %v617, 126
        %v630 = vpop.permute.xlu0 %629
        %631 = vrot.lane.b32.xlu0 %v619, 126
        %v632 = vpop.permute.xlu0 %631
        %v633 = vsel %vm397, %v622, %v624
        %v634 = vsel %vm397, %v626, %v628
        %v635 = vsel %vm397, %v630, %v632
        %v642 = vadd.f32 %v591, %v633
        %v643 = vadd.f32 %v592, %v624
        %v644 = vadd.f32 %v593, %v634
        %v645 = vadd.f32 %v594, %v628
        %v646 = vadd.f32 %v595, %v635
        %v647 = vadd.f32 %v596, %v632
        %s648 = sld [smem:[#allocation4 + $0xa]]
        %v649 = vstv %s648
        %v650 = vmul.f32 %v649, %v506
        %v651 = vmul.f32 %v649, %v312
        %v652 = vmul.f32 %v649, %v508
        %v656 = vrot.slane %v650, 1
        %v657 = vrot.slane %v651, 1
        %v658 = vsel %vm523, %v656, %v657
        %v659 = vrot.slane %v652, 1
        %v660 = vsel %vm523, %v657, %v659
        %661 = vrot.lane.b32.xlu0 %v658, 125
        %v662 = vpop.permute.xlu0 %661
        %663 = vrot.lane.b32.xlu0 %v660, 125
        %v664 = vpop.permute.xlu0 %663
        %665 = vrot.lane.b32.xlu0 %v659, 125
        %v666 = vpop.permute.xlu0 %665
        %v670 = vadd.f32 %v642, %v662
        %v671 = vadd.f32 %v643, %v662
        %v672 = vadd.f32 %v644, %v664
        %v673 = vadd.f32 %v645, %v664
        %v674 = vadd.f32 %v646, %v666
        %v675 = vadd.f32 %v647, %v666
        %s676 = sld [smem:[#allocation4 + $0xb]]
        %v677 = vstv %s676
        %v678 = vmul.f32 %v677, %v506
        %v679 = vmul.f32 %v677, %v312
        %v680 = vmul.f32 %v677, %v508
        %v684 = vrot.slane %v678, 1
        %v685 = vrot.slane %v679, 1
        %v686 = vsel %vm523, %v684, %v685
        %v687 = vrot.slane %v680, 1
        %v688 = vsel %vm523, %v685, %v687
        %689 = vrot.lane.b32.xlu0 %v686, 124
        %v690 = vpop.permute.xlu0 %689
        %691 = vrot.lane.b32.xlu0 %v688, 124
        %v692 = vpop.permute.xlu0 %691
        %693 = vrot.lane.b32.xlu0 %v687, 124
        %v694 = vpop.permute.xlu0 %693
        %v698 = vadd.f32 %v670, %v690
        %v699 = vadd.f32 %v671, %v690
        %v700 = vadd.f32 %v672, %v692
        %v701 = vadd.f32 %v673, %v692
        %v702 = vadd.f32 %v674, %v694
        %v703 = vadd.f32 %v675, %v694
        %s704 = sld [smem:[#allocation4 + $0xc]]
        %v705 = vstv %s704
        %v706 = vmul.f32 %v705, %v506
        %v707 = vmul.f32 %v705, %v312
        %v708 = vmul.f32 %v705, %v508
        %v712 = vrot.slane %v706, 1
        %v713 = vrot.slane %v707, 1
        %v714 = vsel %vm523, %v712, %v713
        %v715 = vrot.slane %v708, 1
        %v716 = vsel %vm523, %v713, %v715
        %717 = vrot.lane.b32.xlu0 %v714, 123
        %v718 = vpop.permute.xlu0 %717
        %719 = vrot.lane.b32.xlu0 %v716, 123
        %v720 = vpop.permute.xlu0 %719
        %721 = vrot.lane.b32.xlu0 %v715, 123
        %v722 = vpop.permute.xlu0 %721
        %v726 = vadd.f32 %v698, %v718
        %v727 = vadd.f32 %v699, %v718
        %v728 = vadd.f32 %v700, %v720
        %v729 = vadd.f32 %v701, %v720
        %v730 = vadd.f32 %v702, %v722
        %v731 = vadd.f32 %v703, %v722
        %s732 = sld [smem:[#allocation4 + $0xd]]
        %v733 = vstv %s732
        %v734 = vmul.f32 %v733, %v506
        %v735 = vmul.f32 %v733, %v312
        %v736 = vmul.f32 %v733, %v508
        %v740 = vrot.slane %v734, 1
        %v741 = vrot.slane %v735, 1
        %v742 = vsel %vm523, %v740, %v741
        %v743 = vrot.slane %v736, 1
        %v744 = vsel %vm523, %v741, %v743
        %745 = vrot.lane.b32.xlu0 %v742, 122
        %v746 = vpop.permute.xlu0 %745
        %747 = vrot.lane.b32.xlu0 %v744, 122
        %v748 = vpop.permute.xlu0 %747
        %749 = vrot.lane.b32.xlu0 %v743, 122
        %v750 = vpop.permute.xlu0 %749
        %v754 = vadd.f32 %v726, %v746
        %v755 = vadd.f32 %v727, %v746
        %v756 = vadd.f32 %v728, %v748
        %v757 = vadd.f32 %v729, %v748
        %v758 = vadd.f32 %v730, %v750
        %v759 = vadd.f32 %v731, %v750
        %v760 = vld [vmem:[#allocation2] sm:$0x80]
        %v761 = vld [vmem:[#allocation2 + $0x8] sm:$0x80]
        %v762 = vld [vmem:[#allocation2 + $0x20] sm:$0x7f]
        %v763 = vld [vmem:[#allocation2 + $0x28] sm:$0x7f]
        %s764 = sld [smem:[#allocation4 + $0xe]]
        %v765 = vstv %s764
        %v766 = vmul.f32 %v765, %v760
        %v767 = vmul.f32 %v765, %v761
        %v768 = vmul.f32 %v765, %v311
        %v769 = vmul.f32 %v765, %v312
        %v770 = vmul.f32 %v765, %v762
        %v771 = vmul.f32 %v765, %v763
        %vm778 = vcmask 1045504
        %v779 = vrot.slane %v766, 2
        %v780 = vrot.slane %v768, 2
        %v781 = vsel %vm778, %v779, %v780
        %v782 = vrot.slane %v767, 2
        %v783 = vrot.slane %v769, 2
        %v784 = vsel %vm778, %v782, %v783
        %v785 = vrot.slane %v770, 2
        %v786 = vsel %vm778, %v780, %v785
        %v787 = vrot.slane %v771, 2
        %v788 = vsel %vm778, %v783, %v787
        %v795 = vadd.f32 %v754, %v781
        %v796 = vadd.f32 %v755, %v784
        %v797 = vadd.f32 %v756, %v786
        %v798 = vadd.f32 %v757, %v788
        %v799 = vadd.f32 %v758, %v785
        %v800 = vadd.f32 %v759, %v787
        %s801 = sld [smem:[#allocation4 + $0xf]]
        %v802 = vstv %s801
        %v803 = vmul.f32 %v802, %v760
        %v804 = vmul.f32 %v802, %v761
        %v805 = vmul.f32 %v802, %v311
        %v806 = vmul.f32 %v802, %v312
        %v807 = vmul.f32 %v802, %v762
        %v808 = vmul.f32 %v802, %v763
        %v815 = vrot.slane %v803, 2
        %v816 = vrot.slane %v805, 2
        %v817 = vsel %vm778, %v815, %v816
        %v818 = vrot.slane %v804, 2
        %v819 = vrot.slane %v806, 2
        %v820 = vsel %vm778, %v818, %v819
        %v821 = vrot.slane %v807, 2
        %v822 = vsel %vm778, %v816, %v821
        %v823 = vrot.slane %v808, 2
        %v824 = vsel %vm778, %v819, %v823
        %825 = vrot.lane.b32.xlu0 %v817, 127
        %v826 = vpop.permute.xlu0 %825
        %827 = vrot.lane.b32.xlu0 %v820, 127
        %v828 = vpop.permute.xlu0 %827
        %829 = vrot.lane.b32.xlu0 %v822, 127
        %v830 = vpop.permute.xlu0 %829
        %831 = vrot.lane.b32.xlu0 %v824, 127
        %v832 = vpop.permute.xlu0 %831
        %833 = vrot.lane.b32.xlu0 %v821, 127
        %v834 = vpop.permute.xlu0 %833
        %835 = vrot.lane.b32.xlu0 %v823, 127
        %v836 = vpop.permute.xlu0 %835
        %v837 = vsel %vm355, %v826, %v828
        %v838 = vsel %vm355, %v830, %v832
        %v839 = vsel %vm355, %v834, %v836
        %v846 = vadd.f32 %v795, %v837
        %v847 = vadd.f32 %v796, %v828
        %v848 = vadd.f32 %v797, %v838
        %v849 = vadd.f32 %v798, %v832
        %v850 = vadd.f32 %v799, %v839
        %v851 = vadd.f32 %v800, %v836
        %s852 = sld [smem:[#allocation4 + $0x10]]
        %v853 = vstv %s852
        %v854 = vmul.f32 %v853, %v760
        %v855 = vmul.f32 %v853, %v761
        %v856 = vmul.f32 %v853, %v311
        %v857 = vmul.f32 %v853, %v312
        %v858 = vmul.f32 %v853, %v762
        %v859 = vmul.f32 %v853, %v763
        %v866 = vrot.slane %v854, 2
        %v867 = vrot.slane %v856, 2
        %v868 = vsel %vm778, %v866, %v867
        %v869 = vrot.slane %v855, 2
        %v870 = vrot.slane %v857, 2
        %v871 = vsel %vm778, %v869, %v870
        %v872 = vrot.slane %v858, 2
        %v873 = vsel %vm778, %v867, %v872
        %v874 = vrot.slane %v859, 2
        %v875 = vsel %vm778, %v870, %v874
        %876 = vrot.lane.b32.xlu0 %v868, 126
        %v877 = vpop.permute.xlu0 %876
        %878 = vrot.lane.b32.xlu0 %v871, 126
        %v879 = vpop.permute.xlu0 %878
        %880 = vrot.lane.b32.xlu0 %v873, 126
        %v881 = vpop.permute.xlu0 %880
        %882 = vrot.lane.b32.xlu0 %v875, 126
        %v883 = vpop.permute.xlu0 %882
        %884 = vrot.lane.b32.xlu0 %v872, 126
        %v885 = vpop.permute.xlu0 %884
        %886 = vrot.lane.b32.xlu0 %v874, 126
        %v887 = vpop.permute.xlu0 %886
        %v888 = vsel %vm397, %v877, %v879
        %v889 = vsel %vm397, %v881, %v883
        %v890 = vsel %vm397, %v885, %v887
        %v897 = vadd.f32 %v846, %v888
        %v898 = vadd.f32 %v847, %v879
        %v899 = vadd.f32 %v848, %v889
        %v900 = vadd.f32 %v849, %v883
        %v901 = vadd.f32 %v850, %v890
        %v902 = vadd.f32 %v851, %v887
        %s903 = sld [smem:[#allocation4 + $0x11]]
        %v904 = vstv %s903
        %v905 = vmul.f32 %v904, %v761
        %v906 = vmul.f32 %v904, %v312
        %v907 = vmul.f32 %v904, %v763
        %v911 = vrot.slane %v905, 2
        %v912 = vrot.slane %v906, 2
        %v913 = vsel %vm778, %v911, %v912
        %v914 = vrot.slane %v907, 2
        %v915 = vsel %vm778, %v912, %v914
        %916 = vrot.lane.b32.xlu0 %v913, 125
        %v917 = vpop.permute.xlu0 %916
        %918 = vrot.lane.b32.xlu0 %v915, 125
        %v919 = vpop.permute.xlu0 %918
        %920 = vrot.lane.b32.xlu0 %v914, 125
        %v921 = vpop.permute.xlu0 %920
        %v925 = vadd.f32 %v897, %v917
        %v926 = vadd.f32 %v898, %v917
        %v927 = vadd.f32 %v899, %v919
        %v928 = vadd.f32 %v900, %v919
        %v929 = vadd.f32 %v901, %v921
        %v930 = vadd.f32 %v902, %v921
        %s931 = sld [smem:[#allocation4 + $0x12]]
        %v932 = vstv %s931
        %v933 = vmul.f32 %v932, %v761
        %v934 = vmul.f32 %v932, %v312
        %v935 = vmul.f32 %v932, %v763
        %v939 = vrot.slane %v933, 2
        %v940 = vrot.slane %v934, 2
        %v941 = vsel %vm778, %v939, %v940
        %v942 = vrot.slane %v935, 2
        %v943 = vsel %vm778, %v940, %v942
        %944 = vrot.lane.b32.xlu0 %v941, 124
        %v945 = vpop.permute.xlu0 %944
        %946 = vrot.lane.b32.xlu0 %v943, 124
        %v947 = vpop.permute.xlu0 %946
        %948 = vrot.lane.b32.xlu0 %v942, 124
        %v949 = vpop.permute.xlu0 %948
        %v953 = vadd.f32 %v925, %v945
        %v954 = vadd.f32 %v926, %v945
        %v955 = vadd.f32 %v927, %v947
        %v956 = vadd.f32 %v928, %v947
        %v957 = vadd.f32 %v929, %v949
        %v958 = vadd.f32 %v930, %v949
        %s959 = sld [smem:[#allocation4 + $0x13]]
        %v960 = vstv %s959
        %v961 = vmul.f32 %v960, %v761
        %v962 = vmul.f32 %v960, %v312
        %v963 = vmul.f32 %v960, %v763
        %v967 = vrot.slane %v961, 2
        %v968 = vrot.slane %v962, 2
        %v969 = vsel %vm778, %v967, %v968
        %v970 = vrot.slane %v963, 2
        %v971 = vsel %vm778, %v968, %v970
        %972 = vrot.lane.b32.xlu0 %v969, 123
        %v973 = vpop.permute.xlu0 %972
        %974 = vrot.lane.b32.xlu0 %v971, 123
        %v975 = vpop.permute.xlu0 %974
        %976 = vrot.lane.b32.xlu0 %v970, 123
        %v977 = vpop.permute.xlu0 %976
        %v981 = vadd.f32 %v953, %v973
        %v982 = vadd.f32 %v954, %v973
        %v983 = vadd.f32 %v955, %v975
        %v984 = vadd.f32 %v956, %v975
        %v985 = vadd.f32 %v957, %v977
        %v986 = vadd.f32 %v958, %v977
        %s987 = sld [smem:[#allocation4 + $0x14]]
        %v988 = vstv %s987
        %v989 = vmul.f32 %v988, %v761
        %v990 = vmul.f32 %v988, %v312
        %v991 = vmul.f32 %v988, %v763
        %v995 = vrot.slane %v989, 2
        %v996 = vrot.slane %v990, 2
        %v997 = vsel %vm778, %v995, %v996
        %v998 = vrot.slane %v991, 2
        %v999 = vsel %vm778, %v996, %v998
        %1000 = vrot.lane.b32.xlu0 %v997, 122
        %v1001 = vpop.permute.xlu0 %1000
        %1002 = vrot.lane.b32.xlu0 %v999, 122
        %v1003 = vpop.permute.xlu0 %1002
        %1004 = vrot.lane.b32.xlu0 %v998, 122
        %v1005 = vpop.permute.xlu0 %1004
        %v1009 = vadd.f32 %v981, %v1001
        %v1010 = vadd.f32 %v982, %v1001
        %v1011 = vadd.f32 %v983, %v1003
        %v1012 = vadd.f32 %v984, %v1003
        %v1013 = vadd.f32 %v985, %v1005
        %v1014 = vadd.f32 %v986, %v1005
        %v1015 = vld [vmem:[#allocation2 + $0x20] sm:$0xff]
        %v1016 = vld [vmem:[#allocation2 + $0x28] sm:$0xff]
        %s1017 = sld [smem:[#allocation4 + $0x15]]
        %v1018 = vstv %s1017
        %v1019 = vmul.f32 %v1018, %v311
        %v1020 = vmul.f32 %v1018, %v312
        %v1021 = vmul.f32 %v1018, %v1015
        %v1022 = vmul.f32 %v1018, %v1016
        %vm1027 = vcmask 1044480
        %v1028 = vrot.slane %v1019, 3
        %v1029 = vrot.slane %v1020, 3
        %v1030 = vrot.slane %v1021, 3
        %v1031 = vsel %vm1027, %v1028, %v1030
        %v1032 = vrot.slane %v1022, 3
        %v1033 = vsel %vm1027, %v1029, %v1032
        %v1040 = vadd.f32 %v1009, %v1028
        %v1041 = vadd.f32 %v1010, %v1029
        %v1042 = vadd.f32 %v1011, %v1031
        %v1043 = vadd.f32 %v1012, %v1033
        %v1044 = vadd.f32 %v1013, %v1030
        %v1045 = vadd.f32 %v1014, %v1032
        %s1046 = sld [smem:[#allocation4 + $0x16]]
        %v1047 = vstv %s1046
        %v1048 = vmul.f32 %v1047, %v311
        %v1049 = vmul.f32 %v1047, %v312
        %v1050 = vmul.f32 %v1047, %v1015
        %v1051 = vmul.f32 %v1047, %v1016
        %v1056 = vrot.slane %v1048, 3
        %v1057 = vrot.slane %v1049, 3
        %v1058 = vrot.slane %v1050, 3
        %v1059 = vsel %vm1027, %v1056, %v1058
        %v1060 = vrot.slane %v1051, 3
        %v1061 = vsel %vm1027, %v1057, %v1060
        %1062 = vrot.lane.b32.xlu0 %v1056, 127
        %v1063 = vpop.permute.xlu0 %1062
        %1064 = vrot.lane.b32.xlu0 %v1057, 127
        %v1065 = vpop.permute.xlu0 %1064
        %1066 = vrot.lane.b32.xlu0 %v1059, 127
        %v1067 = vpop.permute.xlu0 %1066
        %1068 = vrot.lane.b32.xlu0 %v1061, 127
        %v1069 = vpop.permute.xlu0 %1068
        %1070 = vrot.lane.b32.xlu0 %v1058, 127
        %v1071 = vpop.permute.xlu0 %1070
        %1072 = vrot.lane.b32.xlu0 %v1060, 127
        %v1073 = vpop.permute.xlu0 %1072
        %v1074 = vsel %vm355, %v1063, %v1065
        %v1075 = vsel %vm355, %v1067, %v1069
        %v1076 = vsel %vm355, %v1071, %v1073
        %v1083 = vadd.f32 %v1040, %v1074
        %v1084 = vadd.f32 %v1041, %v1065
        %v1085 = vadd.f32 %v1042, %v1075
        %v1086 = vadd.f32 %v1043, %v1069
        %v1087 = vadd.f32 %v1044, %v1076
        %v1088 = vadd.f32 %v1045, %v1073
        %s1089 = sld [smem:[#allocation4 + $0x17]]
        %v1090 = vstv %s1089
        %v1091 = vmul.f32 %v1090, %v311
        %v1092 = vmul.f32 %v1090, %v312
        %v1093 = vmul.f32 %v1090, %v1015
        %v1094 = vmul.f32 %v1090, %v1016
        %v1099 = vrot.slane %v1091, 3
        %v1100 = vrot.slane %v1092, 3
        %v1101 = vrot.slane %v1093, 3
        %v1102 = vsel %vm1027, %v1099, %v1101
        %v1103 = vrot.slane %v1094, 3
        %v1104 = vsel %vm1027, %v1100, %v1103
        %1105 = vrot.lane.b32.xlu0 %v1099, 126
        %v1106 = vpop.permute.xlu0 %1105
        %1107 = vrot.lane.b32.xlu0 %v1100, 126
        %v1108 = vpop.permute.xlu0 %1107
        %1109 = vrot.lane.b32.xlu0 %v1102, 126
        %v1110 = vpop.permute.xlu0 %1109
        %1111 = vrot.lane.b32.xlu0 %v1104, 126
        %v1112 = vpop.permute.xlu0 %1111
        %1113 = vrot.lane.b32.xlu0 %v1101, 126
        %v1114 = vpop.permute.xlu0 %1113
        %1115 = vrot.lane.b32.xlu0 %v1103, 126
        %v1116 = vpop.permute.xlu0 %1115
        %v1117 = vsel %vm397, %v1106, %v1108
        %v1118 = vsel %vm397, %v1110, %v1112
        %v1119 = vsel %vm397, %v1114, %v1116
        %v1126 = vadd.f32 %v1083, %v1117
        %v1127 = vadd.f32 %v1084, %v1108
        %v1128 = vadd.f32 %v1085, %v1118
        %v1129 = vadd.f32 %v1086, %v1112
        %v1130 = vadd.f32 %v1087, %v1119
        %v1131 = vadd.f32 %v1088, %v1116
        %s1132 = sld [smem:[#allocation4 + $0x18]]
        %v1133 = vstv %s1132
        %v1134 = vmul.f32 %v1133, %v312
        %v1135 = vmul.f32 %v1133, %v1016
        %v1138 = vrot.slane %v1134, 3
        %v1139 = vrot.slane %v1135, 3
        %v1140 = vsel %vm1027, %v1138, %v1139
        %1141 = vrot.lane.b32.xlu0 %v1138, 125
        %v1142 = vpop.permute.xlu0 %1141
        %1143 = vrot.lane.b32.xlu0 %v1140, 125
        %v1144 = vpop.permute.xlu0 %1143
        %1145 = vrot.lane.b32.xlu0 %v1139, 125
        %v1146 = vpop.permute.xlu0 %1145
        %v1150 = vadd.f32 %v1126, %v1142
        %v1151 = vadd.f32 %v1127, %v1142
        %v1152 = vadd.f32 %v1128, %v1144
        %v1153 = vadd.f32 %v1129, %v1144
        %v1154 = vadd.f32 %v1130, %v1146
        %v1155 = vadd.f32 %v1131, %v1146
        %s1156 = sld [smem:[#allocation4 + $0x19]]
        %v1157 = vstv %s1156
        %v1158 = vmul.f32 %v1157, %v312
        %v1159 = vmul.f32 %v1157, %v1016
        %v1162 = vrot.slane %v1158, 3
        %v1163 = vrot.slane %v1159, 3
        %v1164 = vsel %vm1027, %v1162, %v1163
        %1165 = vrot.lane.b32.xlu0 %v1162, 124
        %v1166 = vpop.permute.xlu0 %1165
        %1167 = vrot.lane.b32.xlu0 %v1164, 124
        %v1168 = vpop.permute.xlu0 %1167
        %1169 = vrot.lane.b32.xlu0 %v1163, 124
        %v1170 = vpop.permute.xlu0 %1169
        %v1174 = vadd.f32 %v1150, %v1166
        %v1175 = vadd.f32 %v1151, %v1166
        %v1176 = vadd.f32 %v1152, %v1168
        %v1177 = vadd.f32 %v1153, %v1168
        %v1178 = vadd.f32 %v1154, %v1170
        %v1179 = vadd.f32 %v1155, %v1170
        %s1180 = sld [smem:[#allocation4 + $0x1a]]
        %v1181 = vstv %s1180
        %v1182 = vmul.f32 %v1181, %v312
        %v1183 = vmul.f32 %v1181, %v1016
        %v1186 = vrot.slane %v1182, 3
        %v1187 = vrot.slane %v1183, 3
        %v1188 = vsel %vm1027, %v1186, %v1187
        %1189 = vrot.lane.b32.xlu0 %v1186, 123
        %v1190 = vpop.permute.xlu0 %1189
        %1191 = vrot.lane.b32.xlu0 %v1188, 123
        %v1192 = vpop.permute.xlu0 %1191
        %1193 = vrot.lane.b32.xlu0 %v1187, 123
        %v1194 = vpop.permute.xlu0 %1193
        %v1198 = vadd.f32 %v1174, %v1190
        %v1199 = vadd.f32 %v1175, %v1190
        %v1200 = vadd.f32 %v1176, %v1192
        %v1201 = vadd.f32 %v1177, %v1192
        %v1202 = vadd.f32 %v1178, %v1194
        %v1203 = vadd.f32 %v1179, %v1194
        %s1204 = sld [smem:[#allocation4 + $0x1b]]
        %v1205 = vstv %s1204
        %v1206 = vmul.f32 %v1205, %v312
        %v1207 = vmul.f32 %v1205, %v1016
        %v1210 = vrot.slane %v1206, 3
        %v1211 = vrot.slane %v1207, 3
        %v1212 = vsel %vm1027, %v1210, %v1211
        %1213 = vrot.lane.b32.xlu0 %v1210, 122
        %v1214 = vpop.permute.xlu0 %1213
        %1215 = vrot.lane.b32.xlu0 %v1212, 122
        %v1216 = vpop.permute.xlu0 %1215
        %1217 = vrot.lane.b32.xlu0 %v1211, 122
        %v1218 = vpop.permute.xlu0 %1217
        %v1222 = vadd.f32 %v1198, %v1214
        %v1223 = vadd.f32 %v1199, %v1214
        %v1224 = vadd.f32 %v1200, %v1216
        %v1225 = vadd.f32 %v1201, %v1216
        %v1226 = vadd.f32 %v1202, %v1218
        %v1227 = vadd.f32 %v1203, %v1218
        %v1228 = vld [vmem:[#allocation2 + $0x10] sm:$0xfe]
        %v1229 = vld [vmem:[#allocation2 + $0x18] sm:$0xfe]
        %v1230 = vld [vmem:[#allocation2 + $0x20] sm:$0xff]
        %v1231 = vld [vmem:[#allocation2 + $0x28] sm:$0xff]
        %v1232 = vld [vmem:[#allocation2 + $0x30] sm:$0x1]
        %v1233 = vld [vmem:[#allocation2 + $0x38] sm:$0x1]
        %s1234 = sld [smem:[#allocation4 + $0x1c]]
        %v1235 = vstv %s1234
        %v1236 = vmul.f32 %v1235, %v1228
        %v1237 = vmul.f32 %v1235, %v1229
        %v1238 = vmul.f32 %v1235, %v1230
        %v1239 = vmul.f32 %v1235, %v1231
        %v1240 = vmul.f32 %v1235, %v1232
        %v1241 = vmul.f32 %v1235, %v1233
        %vm1248 = vcmask 1043456
        %v1249 = vrot.slane %v1236, 4
        %v1250 = vrot.slane %v1237, 4
        %v1251 = vrot.slane %v1238, 4
        %v1252 = vsel %vm1248, %v1249, %v1251
        %v1253 = vrot.slane %v1239, 4
        %v1254 = vsel %vm1248, %v1250, %v1253
        %v1255 = vrot.slane %v1240, 4
        %v1256 = vsel %vm1248, %v1251, %v1255
        %v1257 = vrot.slane %v1241, 4
        %v1258 = vsel %vm1248, %v1253, %v1257
        %v1265 = vadd.f32 %v1222, %v1249
        %v1266 = vadd.f32 %v1223, %v1250
        %v1267 = vadd.f32 %v1224, %v1252
        %v1268 = vadd.f32 %v1225, %v1254
        %v1269 = vadd.f32 %v1226, %v1256
        %v1270 = vadd.f32 %v1227, %v1258
        %s1271 = sld [smem:[#allocation4 + $0x1d]]
        %v1272 = vstv %s1271
        %v1273 = vmul.f32 %v1272, %v1228
        %v1274 = vmul.f32 %v1272, %v1229
        %v1275 = vmul.f32 %v1272, %v1230
        %v1276 = vmul.f32 %v1272, %v1231
        %v1277 = vmul.f32 %v1272, %v1232
        %v1278 = vmul.f32 %v1272, %v1233
        %v1285 = vrot.slane %v1273, 4
        %v1286 = vrot.slane %v1274, 4
        %v1287 = vrot.slane %v1275, 4
        %v1288 = vsel %vm1248, %v1285, %v1287
        %v1289 = vrot.slane %v1276, 4
        %v1290 = vsel %vm1248, %v1286, %v1289
        %v1291 = vrot.slane %v1277, 4
        %v1292 = vsel %vm1248, %v1287, %v1291
        %v1293 = vrot.slane %v1278, 4
        %v1294 = vsel %vm1248, %v1289, %v1293
        %1295 = vrot.lane.b32.xlu0 %v1285, 127
        %v1296 = vpop.permute.xlu0 %1295
        %1297 = vrot.lane.b32.xlu0 %v1286, 127
        %v1298 = vpop.permute.xlu0 %1297
        %1299 = vrot.lane.b32.xlu0 %v1288, 127
        %v1300 = vpop.permute.xlu0 %1299
        %1301 = vrot.lane.b32.xlu0 %v1290, 127
        %v1302 = vpop.permute.xlu0 %1301
        %1303 = vrot.lane.b32.xlu0 %v1292, 127
        %v1304 = vpop.permute.xlu0 %1303
        %1305 = vrot.lane.b32.xlu0 %v1294, 127
        %v1306 = vpop.permute.xlu0 %1305
        %v1307 = vsel %vm355, %v1296, %v1298
        %v1308 = vsel %vm355, %v1300, %v1302
        %v1309 = vsel %vm355, %v1304, %v1306
        %v1316 = vadd.f32 %v1265, %v1307
        %v1317 = vadd.f32 %v1266, %v1298
        %v1318 = vadd.f32 %v1267, %v1308
        %v1319 = vadd.f32 %v1268, %v1302
        %v1320 = vadd.f32 %v1269, %v1309
        %v1321 = vadd.f32 %v1270, %v1306
        %s1322 = sld [smem:[#allocation4 + $0x1e]]
        %v1323 = vstv %s1322
        %v1324 = vmul.f32 %v1323, %v1228
        %v1325 = vmul.f32 %v1323, %v1229
        %v1326 = vmul.f32 %v1323, %v1230
        %v1327 = vmul.f32 %v1323, %v1231
        %v1328 = vmul.f32 %v1323, %v1232
        %v1329 = vmul.f32 %v1323, %v1233
        %v1336 = vrot.slane %v1324, 4
        %v1337 = vrot.slane %v1325, 4
        %v1338 = vrot.slane %v1326, 4
        %v1339 = vsel %vm1248, %v1336, %v1338
        %v1340 = vrot.slane %v1327, 4
        %v1341 = vsel %vm1248, %v1337, %v1340
        %v1342 = vrot.slane %v1328, 4
        %v1343 = vsel %vm1248, %v1338, %v1342
        %v1344 = vrot.slane %v1329, 4
        %v1345 = vsel %vm1248, %v1340, %v1344
        %1346 = vrot.lane.b32.xlu0 %v1336, 126
        %v1347 = vpop.permute.xlu0 %1346
        %1348 = vrot.lane.b32.xlu0 %v1337, 126
        %v1349 = vpop.permute.xlu0 %1348
        %1350 = vrot.lane.b32.xlu0 %v1339, 126
        %v1351 = vpop.permute.xlu0 %1350
        %1352 = vrot.lane.b32.xlu0 %v1341, 126
        %v1353 = vpop.permute.xlu0 %1352
        %1354 = vrot.lane.b32.xlu0 %v1343, 126
        %v1355 = vpop.permute.xlu0 %1354
        %1356 = vrot.lane.b32.xlu0 %v1345, 126
        %v1357 = vpop.permute.xlu0 %1356
        %v1358 = vsel %vm397, %v1347, %v1349
        %v1359 = vsel %vm397, %v1351, %v1353
        %v1360 = vsel %vm397, %v1355, %v1357
        %v1367 = vadd.f32 %v1316, %v1358
        %v1368 = vadd.f32 %v1317, %v1349
        %v1369 = vadd.f32 %v1318, %v1359
        %v1370 = vadd.f32 %v1319, %v1353
        %v1371 = vadd.f32 %v1320, %v1360
        %v1372 = vadd.f32 %v1321, %v1357
        %s1373 = sld [smem:[#allocation4 + $0x1f]]
        %v1374 = vstv %s1373
        %v1375 = vmul.f32 %v1374, %v1229
        %v1376 = vmul.f32 %v1374, %v1231
        %v1377 = vmul.f32 %v1374, %v1233
        %v1381 = vrot.slane %v1375, 4
        %v1382 = vrot.slane %v1376, 4
        %v1383 = vsel %vm1248, %v1381, %v1382
        %v1384 = vrot.slane %v1377, 4
        %v1385 = vsel %vm1248, %v1382, %v1384
        %1386 = vrot.lane.b32.xlu0 %v1381, 125
        %v1387 = vpop.permute.xlu0 %1386
        %1388 = vrot.lane.b32.xlu0 %v1383, 125
        %v1389 = vpop.permute.xlu0 %1388
        %1390 = vrot.lane.b32.xlu0 %v1385, 125
        %v1391 = vpop.permute.xlu0 %1390
        %v1395 = vadd.f32 %v1367, %v1387
        %v1396 = vadd.f32 %v1368, %v1387
        %v1397 = vadd.f32 %v1369, %v1389
        %v1398 = vadd.f32 %v1370, %v1389
        %v1399 = vadd.f32 %v1371, %v1391
        %v1400 = vadd.f32 %v1372, %v1391
        %s1401 = sld [smem:[#allocation4 + $0x20]]
        %v1402 = vstv %s1401
        %v1403 = vmul.f32 %v1402, %v1229
        %v1404 = vmul.f32 %v1402, %v1231
        %v1405 = vmul.f32 %v1402, %v1233
        %v1409 = vrot.slane %v1403, 4
        %v1410 = vrot.slane %v1404, 4
        %v1411 = vsel %vm1248, %v1409, %v1410
        %v1412 = vrot.slane %v1405, 4
        %v1413 = vsel %vm1248, %v1410, %v1412
        %1414 = vrot.lane.b32.xlu0 %v1409, 124
        %v1415 = vpop.permute.xlu0 %1414
        %1416 = vrot.lane.b32.xlu0 %v1411, 124
        %v1417 = vpop.permute.xlu0 %1416
        %1418 = vrot.lane.b32.xlu0 %v1413, 124
        %v1419 = vpop.permute.xlu0 %1418
        %v1423 = vadd.f32 %v1395, %v1415
        %v1424 = vadd.f32 %v1396, %v1415
        %v1425 = vadd.f32 %v1397, %v1417
        %v1426 = vadd.f32 %v1398, %v1417
        %v1427 = vadd.f32 %v1399, %v1419
        %v1428 = vadd.f32 %v1400, %v1419
        %s1429 = sld [smem:[#allocation4 + $0x21]]
        %v1430 = vstv %s1429
        %v1431 = vmul.f32 %v1430, %v1229
        %v1432 = vmul.f32 %v1430, %v1231
        %v1433 = vmul.f32 %v1430, %v1233
        %v1437 = vrot.slane %v1431, 4
        %v1438 = vrot.slane %v1432, 4
        %v1439 = vsel %vm1248, %v1437, %v1438
        %v1440 = vrot.slane %v1433, 4
        %v1441 = vsel %vm1248, %v1438, %v1440
        %1442 = vrot.lane.b32.xlu0 %v1437, 123
        %v1443 = vpop.permute.xlu0 %1442
        %1444 = vrot.lane.b32.xlu0 %v1439, 123
        %v1445 = vpop.permute.xlu0 %1444
        %1446 = vrot.lane.b32.xlu0 %v1441, 123
        %v1447 = vpop.permute.xlu0 %1446
        %v1451 = vadd.f32 %v1423, %v1443
        %v1452 = vadd.f32 %v1424, %v1443
        %v1453 = vadd.f32 %v1425, %v1445
        %v1454 = vadd.f32 %v1426, %v1445
        %v1455 = vadd.f32 %v1427, %v1447
        %v1456 = vadd.f32 %v1428, %v1447
        %s1457 = sld [smem:[#allocation4 + $0x22]]
        %v1458 = vstv %s1457
        %v1459 = vmul.f32 %v1458, %v1229
        %v1460 = vmul.f32 %v1458, %v1231
        %v1461 = vmul.f32 %v1458, %v1233
        %v1465 = vrot.slane %v1459, 4
        %v1466 = vrot.slane %v1460, 4
        %v1467 = vsel %vm1248, %v1465, %v1466
        %v1468 = vrot.slane %v1461, 4
        %v1469 = vsel %vm1248, %v1466, %v1468
        %1470 = vrot.lane.b32.xlu0 %v1465, 122
        %v1471 = vpop.permute.xlu0 %1470
        %1472 = vrot.lane.b32.xlu0 %v1467, 122
        %v1473 = vpop.permute.xlu0 %1472
        %1474 = vrot.lane.b32.xlu0 %v1469, 122
        %v1475 = vpop.permute.xlu0 %1474
        %v1479 = vadd.f32 %v1451, %v1471
        %v1480 = vadd.f32 %v1452, %v1471
        %v1481 = vadd.f32 %v1453, %v1473
        %v1482 = vadd.f32 %v1454, %v1473
        %v1483 = vadd.f32 %v1455, %v1475
        %v1484 = vadd.f32 %v1456, %v1475
        %v1485 = vld [vmem:[#allocation2 + $0x10] sm:$0xfc]
        %v1486 = vld [vmem:[#allocation2 + $0x18] sm:$0xfc]
        %v1487 = vld [vmem:[#allocation2 + $0x30] sm:$0x3]
        %v1488 = vld [vmem:[#allocation2 + $0x38] sm:$0x3]
        %s1489 = sld [smem:[#allocation4 + $0x23]]
        %v1490 = vstv %s1489
        %v1491 = vmul.f32 %v1490, %v1485
        %v1492 = vmul.f32 %v1490, %v1486
        %v1493 = vmul.f32 %v1490, %v1230
        %v1494 = vmul.f32 %v1490, %v1231
        %v1495 = vmul.f32 %v1490, %v1487
        %v1496 = vmul.f32 %v1490, %v1488
        %vm1503 = vcmask 1042432
        %v1504 = vrot.slane %v1491, 5
        %v1505 = vrot.slane %v1492, 5
        %v1506 = vrot.slane %v1493, 5
        %v1507 = vsel %vm1503, %v1504, %v1506
        %v1508 = vrot.slane %v1494, 5
        %v1509 = vsel %vm1503, %v1505, %v1508
        %v1510 = vrot.slane %v1495, 5
        %v1511 = vsel %vm1503, %v1506, %v1510
        %v1512 = vrot.slane %v1496, 5
        %v1513 = vsel %vm1503, %v1508, %v1512
        %v1520 = vadd.f32 %v1479, %v1504
        %v1521 = vadd.f32 %v1480, %v1505
        %v1522 = vadd.f32 %v1481, %v1507
        %v1523 = vadd.f32 %v1482, %v1509
        %v1524 = vadd.f32 %v1483, %v1511
        %v1525 = vadd.f32 %v1484, %v1513
        %s1526 = sld [smem:[#allocation4 + $0x24]]
        %v1527 = vstv %s1526
        %v1528 = vmul.f32 %v1527, %v1485
        %v1529 = vmul.f32 %v1527, %v1486
        %v1530 = vmul.f32 %v1527, %v1230
        %v1531 = vmul.f32 %v1527, %v1231
        %v1532 = vmul.f32 %v1527, %v1487
        %v1533 = vmul.f32 %v1527, %v1488
        %v1540 = vrot.slane %v1528, 5
        %v1541 = vrot.slane %v1529, 5
        %v1542 = vrot.slane %v1530, 5
        %v1543 = vsel %vm1503, %v1540, %v1542
        %v1544 = vrot.slane %v1531, 5
        %v1545 = vsel %vm1503, %v1541, %v1544
        %v1546 = vrot.slane %v1532, 5
        %v1547 = vsel %vm1503, %v1542, %v1546
        %v1548 = vrot.slane %v1533, 5
        %v1549 = vsel %vm1503, %v1544, %v1548
        %1550 = vrot.lane.b32.xlu0 %v1540, 127
        %v1551 = vpop.permute.xlu0 %1550
        %1552 = vrot.lane.b32.xlu0 %v1541, 127
        %v1553 = vpop.permute.xlu0 %1552
        %1554 = vrot.lane.b32.xlu0 %v1543, 127
        %v1555 = vpop.permute.xlu0 %1554
        %1556 = vrot.lane.b32.xlu0 %v1545, 127
        %v1557 = vpop.permute.xlu0 %1556
        %1558 = vrot.lane.b32.xlu0 %v1547, 127
        %v1559 = vpop.permute.xlu0 %1558
        %1560 = vrot.lane.b32.xlu0 %v1549, 127
        %v1561 = vpop.permute.xlu0 %1560
        %v1562 = vsel %vm355, %v1551, %v1553
        %v1563 = vsel %vm355, %v1555, %v1557
        %v1564 = vsel %vm355, %v1559, %v1561
        %v1571 = vadd.f32 %v1520, %v1562
        %v1572 = vadd.f32 %v1521, %v1553
        %v1573 = vadd.f32 %v1522, %v1563
        %v1574 = vadd.f32 %v1523, %v1557
        %v1575 = vadd.f32 %v1524, %v1564
        %v1576 = vadd.f32 %v1525, %v1561
        %s1577 = sld [smem:[#allocation4 + $0x25]]
        %v1578 = vstv %s1577
        %v1579 = vmul.f32 %v1578, %v1485
        %v1580 = vmul.f32 %v1578, %v1486
        %v1581 = vmul.f32 %v1578, %v1230
        %v1582 = vmul.f32 %v1578, %v1231
        %v1583 = vmul.f32 %v1578, %v1487
        %v1584 = vmul.f32 %v1578, %v1488
        %v1591 = vrot.slane %v1579, 5
        %v1592 = vrot.slane %v1580, 5
        %v1593 = vrot.slane %v1581, 5
        %v1594 = vsel %vm1503, %v1591, %v1593
        %v1595 = vrot.slane %v1582, 5
        %v1596 = vsel %vm1503, %v1592, %v1595
        %v1597 = vrot.slane %v1583, 5
        %v1598 = vsel %vm1503, %v1593, %v1597
        %v1599 = vrot.slane %v1584, 5
        %v1600 = vsel %vm1503, %v1595, %v1599
        %1601 = vrot.lane.b32.xlu0 %v1591, 126
        %v1602 = vpop.permute.xlu0 %1601
        %1603 = vrot.lane.b32.xlu0 %v1592, 126
        %v1604 = vpop.permute.xlu0 %1603
        %1605 = vrot.lane.b32.xlu0 %v1594, 126
        %v1606 = vpop.permute.xlu0 %1605
        %1607 = vrot.lane.b32.xlu0 %v1596, 126
        %v1608 = vpop.permute.xlu0 %1607
        %1609 = vrot.lane.b32.xlu0 %v1598, 126
        %v1610 = vpop.permute.xlu0 %1609
        %1611 = vrot.lane.b32.xlu0 %v1600, 126
        %v1612 = vpop.permute.xlu0 %1611
        %v1613 = vsel %vm397, %v1602, %v1604
        %v1614 = vsel %vm397, %v1606, %v1608
        %v1615 = vsel %vm397, %v1610, %v1612
        %v1622 = vadd.f32 %v1571, %v1613
        %v1623 = vadd.f32 %v1572, %v1604
        %v1624 = vadd.f32 %v1573, %v1614
        %v1625 = vadd.f32 %v1574, %v1608
        %v1626 = vadd.f32 %v1575, %v1615
        %v1627 = vadd.f32 %v1576, %v1612
        %s1628 = sld [smem:[#allocation4 + $0x26]]
        %v1629 = vstv %s1628
        %v1630 = vmul.f32 %v1629, %v1486
        %v1631 = vmul.f32 %v1629, %v1231
        %v1632 = vmul.f32 %v1629, %v1488
        %v1636 = vrot.slane %v1630, 5
        %v1637 = vrot.slane %v1631, 5
        %v1638 = vsel %vm1503, %v1636, %v1637
        %v1639 = vrot.slane %v1632, 5
        %v1640 = vsel %vm1503, %v1637, %v1639
        %1641 = vrot.lane.b32.xlu0 %v1636, 125
        %v1642 = vpop.permute.xlu0 %1641
        %1643 = vrot.lane.b32.xlu0 %v1638, 125
        %v1644 = vpop.permute.xlu0 %1643
        %1645 = vrot.lane.b32.xlu0 %v1640, 125
        %v1646 = vpop.permute.xlu0 %1645
        %v1650 = vadd.f32 %v1622, %v1642
        %v1651 = vadd.f32 %v1623, %v1642
        %v1652 = vadd.f32 %v1624, %v1644
        %v1653 = vadd.f32 %v1625, %v1644
        %v1654 = vadd.f32 %v1626, %v1646
        %v1655 = vadd.f32 %v1627, %v1646
        %s1656 = sld [smem:[#allocation4 + $0x27]]
        %v1657 = vstv %s1656
        %v1658 = vmul.f32 %v1657, %v1486
        %v1659 = vmul.f32 %v1657, %v1231
        %v1660 = vmul.f32 %v1657, %v1488
        %v1664 = vrot.slane %v1658, 5
        %v1665 = vrot.slane %v1659, 5
        %v1666 = vsel %vm1503, %v1664, %v1665
        %v1667 = vrot.slane %v1660, 5
        %v1668 = vsel %vm1503, %v1665, %v1667
        %1669 = vrot.lane.b32.xlu0 %v1664, 124
        %v1670 = vpop.permute.xlu0 %1669
        %1671 = vrot.lane.b32.xlu0 %v1666, 124
        %v1672 = vpop.permute.xlu0 %1671
        %1673 = vrot.lane.b32.xlu0 %v1668, 124
        %v1674 = vpop.permute.xlu0 %1673
        %v1678 = vadd.f32 %v1650, %v1670
        %v1679 = vadd.f32 %v1651, %v1670
        %v1680 = vadd.f32 %v1652, %v1672
        %v1681 = vadd.f32 %v1653, %v1672
        %v1682 = vadd.f32 %v1654, %v1674
        %v1683 = vadd.f32 %v1655, %v1674
        %s1684 = sld [smem:[#allocation4 + $0x28]]
        %v1685 = vstv %s1684
        %v1686 = vmul.f32 %v1685, %v1486
        %v1687 = vmul.f32 %v1685, %v1231
        %v1688 = vmul.f32 %v1685, %v1488
        %v1692 = vrot.slane %v1686, 5
        %v1693 = vrot.slane %v1687, 5
        %v1694 = vsel %vm1503, %v1692, %v1693
        %v1695 = vrot.slane %v1688, 5
        %v1696 = vsel %vm1503, %v1693, %v1695
        %1697 = vrot.lane.b32.xlu0 %v1692, 123
        %v1698 = vpop.permute.xlu0 %1697
        %1699 = vrot.lane.b32.xlu0 %v1694, 123
        %v1700 = vpop.permute.xlu0 %1699
        %1701 = vrot.lane.b32.xlu0 %v1696, 123
        %v1702 = vpop.permute.xlu0 %1701
        %v1706 = vadd.f32 %v1678, %v1698
        %v1707 = vadd.f32 %v1679, %v1698
        %v1708 = vadd.f32 %v1680, %v1700
        %v1709 = vadd.f32 %v1681, %v1700
        %v1710 = vadd.f32 %v1682, %v1702
        %v1711 = vadd.f32 %v1683, %v1702
        %s1712 = sld [smem:[#allocation4 + $0x29]]
        %v1713 = vstv %s1712
        %v1714 = vmul.f32 %v1713, %v1486
        %v1715 = vmul.f32 %v1713, %v1231
        %v1716 = vmul.f32 %v1713, %v1488
        %v1720 = vrot.slane %v1714, 5
        %v1721 = vrot.slane %v1715, 5
        %v1722 = vsel %vm1503, %v1720, %v1721
        %v1723 = vrot.slane %v1716, 5
        %v1724 = vsel %vm1503, %v1721, %v1723
        %1725 = vrot.lane.b32.xlu0 %v1720, 122
        %v1726 = vpop.permute.xlu0 %1725
        %1727 = vrot.lane.b32.xlu0 %v1722, 122
        %v1728 = vpop.permute.xlu0 %1727
        %1729 = vrot.lane.b32.xlu0 %v1724, 122
        %v1730 = vpop.permute.xlu0 %1729
        %v1734 = vadd.f32 %v1706, %v1726
        %v1735 = vadd.f32 %v1707, %v1726
        %v1736 = vadd.f32 %v1708, %v1728
        %v1737 = vadd.f32 %v1709, %v1728
        %v1738 = vadd.f32 %v1710, %v1730
        %v1739 = vadd.f32 %v1711, %v1730
        %v1740 = vld [vmem:[#allocation2 + $0x10] sm:$0xf8]
        %v1741 = vld [vmem:[#allocation2 + $0x18] sm:$0xf8]
        %v1742 = vld [vmem:[#allocation2 + $0x30] sm:$0x7]
        %v1743 = vld [vmem:[#allocation2 + $0x38] sm:$0x7]
        %s1744 = sld [smem:[#allocation4 + $0x2a]]
        %v1745 = vstv %s1744
        %v1746 = vmul.f32 %v1745, %v1740
        %v1747 = vmul.f32 %v1745, %v1741
        %v1748 = vmul.f32 %v1745, %v1230
        %v1749 = vmul.f32 %v1745, %v1231
        %v1750 = vmul.f32 %v1745, %v1742
        %v1751 = vmul.f32 %v1745, %v1743
        %vm1758 = vcmask 1041408
        %v1759 = vrot.slane %v1746, 6
        %v1760 = vrot.slane %v1747, 6
        %v1761 = vrot.slane %v1748, 6
        %v1762 = vsel %vm1758, %v1759, %v1761
        %v1763 = vrot.slane %v1749, 6
        %v1764 = vsel %vm1758, %v1760, %v1763
        %v1765 = vrot.slane %v1750, 6
        %v1766 = vsel %vm1758, %v1761, %v1765
        %v1767 = vrot.slane %v1751, 6
        %v1768 = vsel %vm1758, %v1763, %v1767
        %v1775 = vadd.f32 %v1734, %v1759
        %v1776 = vadd.f32 %v1735, %v1760
        %v1777 = vadd.f32 %v1736, %v1762
        %v1778 = vadd.f32 %v1737, %v1764
        %v1779 = vadd.f32 %v1738, %v1766
        %v1780 = vadd.f32 %v1739, %v1768
        %s1781 = sld [smem:[#allocation4 + $0x2b]]
        %v1782 = vstv %s1781
        %v1783 = vmul.f32 %v1782, %v1740
        %v1784 = vmul.f32 %v1782, %v1741
        %v1785 = vmul.f32 %v1782, %v1230
        %v1786 = vmul.f32 %v1782, %v1231
        %v1787 = vmul.f32 %v1782, %v1742
        %v1788 = vmul.f32 %v1782, %v1743
        %v1795 = vrot.slane %v1783, 6
        %v1796 = vrot.slane %v1784, 6
        %v1797 = vrot.slane %v1785, 6
        %v1798 = vsel %vm1758, %v1795, %v1797
        %v1799 = vrot.slane %v1786, 6
        %v1800 = vsel %vm1758, %v1796, %v1799
        %v1801 = vrot.slane %v1787, 6
        %v1802 = vsel %vm1758, %v1797, %v1801
        %v1803 = vrot.slane %v1788, 6
        %v1804 = vsel %vm1758, %v1799, %v1803
        %1805 = vrot.lane.b32.xlu0 %v1795, 127
        %v1806 = vpop.permute.xlu0 %1805
        %1807 = vrot.lane.b32.xlu0 %v1796, 127
        %v1808 = vpop.permute.xlu0 %1807
        %1809 = vrot.lane.b32.xlu0 %v1798, 127
        %v1810 = vpop.permute.xlu0 %1809
        %1811 = vrot.lane.b32.xlu0 %v1800, 127
        %v1812 = vpop.permute.xlu0 %1811
        %1813 = vrot.lane.b32.xlu0 %v1802, 127
        %v1814 = vpop.permute.xlu0 %1813
        %1815 = vrot.lane.b32.xlu0 %v1804, 127
        %v1816 = vpop.permute.xlu0 %1815
        %v1817 = vsel %vm355, %v1806, %v1808
        %v1818 = vsel %vm355, %v1810, %v1812
        %v1819 = vsel %vm355, %v1814, %v1816
        %v1826 = vadd.f32 %v1775, %v1817
        %v1827 = vadd.f32 %v1776, %v1808
        %v1828 = vadd.f32 %v1777, %v1818
        %v1829 = vadd.f32 %v1778, %v1812
        %v1830 = vadd.f32 %v1779, %v1819
        %v1831 = vadd.f32 %v1780, %v1816
        %s1832 = sld [smem:[#allocation4 + $0x2c]]
        %v1833 = vstv %s1832
        %v1834 = vmul.f32 %v1833, %v1740
        %v1835 = vmul.f32 %v1833, %v1741
        %v1836 = vmul.f32 %v1833, %v1230
        %v1837 = vmul.f32 %v1833, %v1231
        %v1838 = vmul.f32 %v1833, %v1742
        %v1839 = vmul.f32 %v1833, %v1743
        %v1846 = vrot.slane %v1834, 6
        %v1847 = vrot.slane %v1835, 6
        %v1848 = vrot.slane %v1836, 6
        %v1849 = vsel %vm1758, %v1846, %v1848
        %v1850 = vrot.slane %v1837, 6
        %v1851 = vsel %vm1758, %v1847, %v1850
        %v1852 = vrot.slane %v1838, 6
        %v1853 = vsel %vm1758, %v1848, %v1852
        %v1854 = vrot.slane %v1839, 6
        %v1855 = vsel %vm1758, %v1850, %v1854
        %1856 = vrot.lane.b32.xlu0 %v1846, 126
        %v1857 = vpop.permute.xlu0 %1856
        %1858 = vrot.lane.b32.xlu0 %v1847, 126
        %v1859 = vpop.permute.xlu0 %1858
        %1860 = vrot.lane.b32.xlu0 %v1849, 126
        %v1861 = vpop.permute.xlu0 %1860
        %1862 = vrot.lane.b32.xlu0 %v1851, 126
        %v1863 = vpop.permute.xlu0 %1862
        %1864 = vrot.lane.b32.xlu0 %v1853, 126
        %v1865 = vpop.permute.xlu0 %1864
        %1866 = vrot.lane.b32.xlu0 %v1855, 126
        %v1867 = vpop.permute.xlu0 %1866
        %v1868 = vsel %vm397, %v1857, %v1859
        %v1869 = vsel %vm397, %v1861, %v1863
        %v1870 = vsel %vm397, %v1865, %v1867
        %v1877 = vadd.f32 %v1826, %v1868
        %v1878 = vadd.f32 %v1827, %v1859
        %v1879 = vadd.f32 %v1828, %v1869
        %v1880 = vadd.f32 %v1829, %v1863
        %v1881 = vadd.f32 %v1830, %v1870
        %v1882 = vadd.f32 %v1831, %v1867
        %s1883 = sld [smem:[#allocation4 + $0x2d]]
        %v1884 = vstv %s1883
        %v1885 = vmul.f32 %v1884, %v1741
        %v1886 = vmul.f32 %v1884, %v1231
        %v1887 = vmul.f32 %v1884, %v1743
        %v1891 = vrot.slane %v1885, 6
        %v1892 = vrot.slane %v1886, 6
        %v1893 = vsel %vm1758, %v1891, %v1892
        %v1894 = vrot.slane %v1887, 6
        %v1895 = vsel %vm1758, %v1892, %v1894
        %1896 = vrot.lane.b32.xlu0 %v1891, 125
        %v1897 = vpop.permute.xlu0 %1896
        %1898 = vrot.lane.b32.xlu0 %v1893, 125
        %v1899 = vpop.permute.xlu0 %1898
        %1900 = vrot.lane.b32.xlu0 %v1895, 125
        %v1901 = vpop.permute.xlu0 %1900
        %v1905 = vadd.f32 %v1877, %v1897
        %v1906 = vadd.f32 %v1878, %v1897
        %v1907 = vadd.f32 %v1879, %v1899
        %v1908 = vadd.f32 %v1880, %v1899
        %v1909 = vadd.f32 %v1881, %v1901
        %v1910 = vadd.f32 %v1882, %v1901
        %s1911 = sld [smem:[#allocation4 + $0x2e]]
        %v1912 = vstv %s1911
        %v1913 = vmul.f32 %v1912, %v1741
        %v1914 = vmul.f32 %v1912, %v1231
        %v1915 = vmul.f32 %v1912, %v1743
        %v1919 = vrot.slane %v1913, 6
        %v1920 = vrot.slane %v1914, 6
        %v1921 = vsel %vm1758, %v1919, %v1920
        %v1922 = vrot.slane %v1915, 6
        %v1923 = vsel %vm1758, %v1920, %v1922
        %1924 = vrot.lane.b32.xlu0 %v1919, 124
        %v1925 = vpop.permute.xlu0 %1924
        %1926 = vrot.lane.b32.xlu0 %v1921, 124
        %v1927 = vpop.permute.xlu0 %1926
        %1928 = vrot.lane.b32.xlu0 %v1923, 124
        %v1929 = vpop.permute.xlu0 %1928
        %v1933 = vadd.f32 %v1905, %v1925
        %v1934 = vadd.f32 %v1906, %v1925
        %v1935 = vadd.f32 %v1907, %v1927
        %v1936 = vadd.f32 %v1908, %v1927
        %v1937 = vadd.f32 %v1909, %v1929
        %v1938 = vadd.f32 %v1910, %v1929
        %s1939 = sld [smem:[#allocation4 + $0x2f]]
        %v1940 = vstv %s1939
        %v1941 = vmul.f32 %v1940, %v1741
        %v1942 = vmul.f32 %v1940, %v1231
        %v1943 = vmul.f32 %v1940, %v1743
        %v1947 = vrot.slane %v1941, 6
        %v1948 = vrot.slane %v1942, 6
        %v1949 = vsel %vm1758, %v1947, %v1948
        %v1950 = vrot.slane %v1943, 6
        %v1951 = vsel %vm1758, %v1948, %v1950
        %1952 = vrot.lane.b32.xlu0 %v1947, 123
        %v1953 = vpop.permute.xlu0 %1952
        %1954 = vrot.lane.b32.xlu0 %v1949, 123
        %v1955 = vpop.permute.xlu0 %1954
        %1956 = vrot.lane.b32.xlu0 %v1951, 123
        %v1957 = vpop.permute.xlu0 %1956
        %v1961 = vadd.f32 %v1933, %v1953
        %v1962 = vadd.f32 %v1934, %v1953
        %v1963 = vadd.f32 %v1935, %v1955
        %v1964 = vadd.f32 %v1936, %v1955
        %v1965 = vadd.f32 %v1937, %v1957
        %v1966 = vadd.f32 %v1938, %v1957
        %s1967 = sld [smem:[#allocation4 + $0x30]]
        %v1968 = vstv %s1967
        %v1969 = vmul.f32 %v1968, %v1741
        %v1970 = vmul.f32 %v1968, %v1231
        %v1971 = vmul.f32 %v1968, %v1743
        %v1975 = vrot.slane %v1969, 6
        %v1976 = vrot.slane %v1970, 6
        %v1977 = vsel %vm1758, %v1975, %v1976
        %v1978 = vrot.slane %v1971, 6
        %v1979 = vsel %vm1758, %v1976, %v1978
        %1980 = vrot.lane.b32.xlu0 %v1975, 122
        %v1981 = vpop.permute.xlu0 %1980
        %1982 = vrot.lane.b32.xlu0 %v1977, 122
        %v1983 = vpop.permute.xlu0 %1982
        %1984 = vrot.lane.b32.xlu0 %v1979, 122
        %v1985 = vpop.permute.xlu0 %1984
        %v1989 = vadd.f32 %v1961, %v1981
        %v1990 = vadd.f32 %v1962, %v1981
        %v1991 = vadd.f32 %v1963, %v1983
        %v1992 = vadd.f32 %v1964, %v1983
        %v1993 = vadd.f32 %v1965, %v1985
        %v1994 = vadd.f32 %v1966, %v1985
        %v1995 = vld [vmem:[%s303] sm:$0xe0]
        %v1996 = vld [vmem:[%s303 + $0x8] sm:$0xe0]
        %v1997 = vld [vmem:[%s303 + $0x10] sm:$0xff]
        %v1998 = vld [vmem:[%s303 + $0x18] sm:$0xff]
        %v1999 = vld [vmem:[%s303 + $0x20] sm:$0x1f]
        %v2000 = vld [vmem:[%s303 + $0x28] sm:$0x1f]
        %s2001 = sld [smem:[#allocation4 + $0x31]]
        %v2002 = vstv %s2001
        %v2003 = vmul.f32 %v2002, %v1995
        %v2004 = vmul.f32 %v2002, %v1996
        %v2005 = vmul.f32 %v2002, %v1997
        %v2006 = vmul.f32 %v2002, %v1998
        %v2007 = vmul.f32 %v2002, %v1999
        %v2008 = vmul.f32 %v2002, %v2000
        %v2009 = vadd.f32 %v1989, %v2003
        %v2010 = vadd.f32 %v1990, %v2004
        %v2011 = vadd.f32 %v1991, %v2005
        %v2012 = vadd.f32 %v1992, %v2006
        %v2013 = vadd.f32 %v1993, %v2007
        %v2014 = vadd.f32 %v1994, %v2008
        %s2015 = sld [smem:[#allocation4 + $0x32]]
        %v2016 = vstv %s2015
        %v2017 = vmul.f32 %v2016, %v1995
        %v2018 = vmul.f32 %v2016, %v1996
        %v2019 = vmul.f32 %v2016, %v1997
        %v2020 = vmul.f32 %v2016, %v1998
        %v2021 = vmul.f32 %v2016, %v1999
        %v2022 = vmul.f32 %v2016, %v2000
        %2029 = vrot.lane.b32.xlu0 %v2017, 127
        %v2030 = vpop.permute.xlu0 %2029
        %2031 = vrot.lane.b32.xlu0 %v2018, 127
        %v2032 = vpop.permute.xlu0 %2031
        %2033 = vrot.lane.b32.xlu0 %v2019, 127
        %v2034 = vpop.permute.xlu0 %2033
        %2035 = vrot.lane.b32.xlu0 %v2020, 127
        %v2036 = vpop.permute.xlu0 %2035
        %2037 = vrot.lane.b32.xlu0 %v2021, 127
        %v2038 = vpop.permute.xlu0 %2037
        %2039 = vrot.lane.b32.xlu0 %v2022, 127
        %v2040 = vpop.permute.xlu0 %2039
        %v2041 = vsel %vm355, %v2030, %v2032
        %v2042 = vsel %vm355, %v2034, %v2036
        %v2043 = vsel %vm355, %v2038, %v2040
        %v2050 = vadd.f32 %v2009, %v2041
        %v2051 = vadd.f32 %v2010, %v2032
        %v2052 = vadd.f32 %v2011, %v2042
        %v2053 = vadd.f32 %v2012, %v2036
        %v2054 = vadd.f32 %v2013, %v2043
        %v2055 = vadd.f32 %v2014, %v2040
        %s2056 = sld [smem:[#allocation4 + $0x33]]
        %v2057 = vstv %s2056
        %v2058 = vmul.f32 %v2057, %v1995
        %v2059 = vmul.f32 %v2057, %v1996
        %v2060 = vmul.f32 %v2057, %v1997
        %v2061 = vmul.f32 %v2057, %v1998
        %v2062 = vmul.f32 %v2057, %v1999
        %v2063 = vmul.f32 %v2057, %v2000
        %2070 = vrot.lane.b32.xlu0 %v2058, 126
        %v2071 = vpop.permute.xlu0 %2070
        %2072 = vrot.lane.b32.xlu0 %v2059, 126
        %v2073 = vpop.permute.xlu0 %2072
        %2074 = vrot.lane.b32.xlu0 %v2060, 126
        %v2075 = vpop.permute.xlu0 %2074
        %2076 = vrot.lane.b32.xlu0 %v2061, 126
        %v2077 = vpop.permute.xlu0 %2076
        %2078 = vrot.lane.b32.xlu0 %v2062, 126
        %v2079 = vpop.permute.xlu0 %2078
        %2080 = vrot.lane.b32.xlu0 %v2063, 126
        %v2081 = vpop.permute.xlu0 %2080
        %v2082 = vsel %vm397, %v2071, %v2073
        %v2083 = vsel %vm397, %v2075, %v2077
        %v2084 = vsel %vm397, %v2079, %v2081
        %v2091 = vadd.f32 %v2050, %v2082
        %v2092 = vadd.f32 %v2051, %v2073
        %v2093 = vadd.f32 %v2052, %v2083
        %v2094 = vadd.f32 %v2053, %v2077
        %v2095 = vadd.f32 %v2054, %v2084
        %v2096 = vadd.f32 %v2055, %v2081
        %s2097 = sld [smem:[#allocation4 + $0x34]]
        %v2098 = vstv %s2097
        %v2099 = vmul.f32 %v2098, %v1996
        %v2100 = vmul.f32 %v2098, %v1998
        %v2101 = vmul.f32 %v2098, %v2000
        %2105 = vrot.lane.b32.xlu0 %v2099, 125
        %v2106 = vpop.permute.xlu0 %2105
        %2107 = vrot.lane.b32.xlu0 %v2100, 125
        %v2108 = vpop.permute.xlu0 %2107
        %2109 = vrot.lane.b32.xlu0 %v2101, 125
        %v2110 = vpop.permute.xlu0 %2109
        %v2114 = vadd.f32 %v2091, %v2106
        %v2115 = vadd.f32 %v2092, %v2106
        %v2116 = vadd.f32 %v2093, %v2108
        %v2117 = vadd.f32 %v2094, %v2108
        %v2118 = vadd.f32 %v2095, %v2110
        %v2119 = vadd.f32 %v2096, %v2110
        %s2120 = sld [smem:[#allocation4 + $0x35]]
        %v2121 = vstv %s2120
        %v2122 = vmul.f32 %v2121, %v1996
        %v2123 = vmul.f32 %v2121, %v1998
        %v2124 = vmul.f32 %v2121, %v2000
        %2128 = vrot.lane.b32.xlu0 %v2122, 124
        %v2129 = vpop.permute.xlu0 %2128
        %2130 = vrot.lane.b32.xlu0 %v2123, 124
        %v2131 = vpop.permute.xlu0 %2130
        %2132 = vrot.lane.b32.xlu0 %v2124, 124
        %v2133 = vpop.permute.xlu0 %2132
        %v2137 = vadd.f32 %v2114, %v2129
        %v2138 = vadd.f32 %v2115, %v2129
        %v2139 = vadd.f32 %v2116, %v2131
        %v2140 = vadd.f32 %v2117, %v2131
        %v2141 = vadd.f32 %v2118, %v2133
        %v2142 = vadd.f32 %v2119, %v2133
        %s2143 = sld [smem:[#allocation4 + $0x36]]
        %v2144 = vstv %s2143
        %v2145 = vmul.f32 %v2144, %v1996
        %v2146 = vmul.f32 %v2144, %v1998
        %v2147 = vmul.f32 %v2144, %v2000
        %2151 = vrot.lane.b32.xlu0 %v2145, 123
        %v2152 = vpop.permute.xlu0 %2151
        %2153 = vrot.lane.b32.xlu0 %v2146, 123
        %v2154 = vpop.permute.xlu0 %2153
        %2155 = vrot.lane.b32.xlu0 %v2147, 123
        %v2156 = vpop.permute.xlu0 %2155
        %v2160 = vadd.f32 %v2137, %v2152
        %v2161 = vadd.f32 %v2138, %v2152
        %v2162 = vadd.f32 %v2139, %v2154
        %v2163 = vadd.f32 %v2140, %v2154
        %v2164 = vadd.f32 %v2141, %v2156
        %v2165 = vadd.f32 %v2142, %v2156
        %s2166 = sld [smem:[#allocation4 + $0x37]]
        %v2167 = vstv %s2166
        %v2168 = vmul.f32 %v2167, %v1996
        %v2169 = vmul.f32 %v2167, %v1998
        %v2170 = vmul.f32 %v2167, %v2000
        %2174 = vrot.lane.b32.xlu0 %v2168, 122
        %v2175 = vpop.permute.xlu0 %2174
        %2176 = vrot.lane.b32.xlu0 %v2169, 122
        %v2177 = vpop.permute.xlu0 %2176
        %2178 = vrot.lane.b32.xlu0 %v2170, 122
        %v2179 = vpop.permute.xlu0 %2178
        %v2183 = vadd.f32 %v2160, %v2175
        %v2184 = vadd.f32 %v2161, %v2175
        %v2185 = vadd.f32 %v2162, %v2177
        %v2186 = vadd.f32 %v2163, %v2177
        %v2187 = vadd.f32 %v2164, %v2179
        %v2188 = vadd.f32 %v2165, %v2179
        %v2189 = vld [vmem:[%s303] sm:$0xc0]
        %v2190 = vld [vmem:[%s303 + $0x8] sm:$0xc0]
        %v2191 = vld [vmem:[%s303 + $0x20] sm:$0x3f]
        %v2192 = vld [vmem:[%s303 + $0x28] sm:$0x3f]
        %s2193 = sld [smem:[#allocation4 + $0x38]]
        %v2194 = vstv %s2193
        %v2195 = vmul.f32 %v2194, %v2189
        %v2196 = vmul.f32 %v2194, %v2190
        %v2197 = vmul.f32 %v2194, %v1997
        %v2198 = vmul.f32 %v2194, %v1998
        %v2199 = vmul.f32 %v2194, %v2191
        %v2200 = vmul.f32 %v2194, %v2192
        %v2207 = vrot.slane %v2195, 1
        %v2208 = vrot.slane %v2197, 1
        %v2209 = vsel %vm523, %v2207, %v2208
        %v2210 = vrot.slane %v2196, 1
        %v2211 = vrot.slane %v2198, 1
        %v2212 = vsel %vm523, %v2210, %v2211
        %v2213 = vrot.slane %v2199, 1
        %v2214 = vsel %vm523, %v2208, %v2213
        %v2215 = vrot.slane %v2200, 1
        %v2216 = vsel %vm523, %v2211, %v2215
        %v2223 = vadd.f32 %v2183, %v2209
        %v2224 = vadd.f32 %v2184, %v2212
        %v2225 = vadd.f32 %v2185, %v2214
        %v2226 = vadd.f32 %v2186, %v2216
        %v2227 = vadd.f32 %v2187, %v2213
        %v2228 = vadd.f32 %v2188, %v2215
        %s2229 = sld [smem:[#allocation4 + $0x39]]
        %v2230 = vstv %s2229
        %v2231 = vmul.f32 %v2230, %v2189
        %v2232 = vmul.f32 %v2230, %v2190
        %v2233 = vmul.f32 %v2230, %v1997
        %v2234 = vmul.f32 %v2230, %v1998
        %v2235 = vmul.f32 %v2230, %v2191
        %v2236 = vmul.f32 %v2230, %v2192
        %v2243 = vrot.slane %v2231, 1
        %v2244 = vrot.slane %v2233, 1
        %v2245 = vsel %vm523, %v2243, %v2244
        %v2246 = vrot.slane %v2232, 1
        %v2247 = vrot.slane %v2234, 1
        %v2248 = vsel %vm523, %v2246, %v2247
        %v2249 = vrot.slane %v2235, 1
        %v2250 = vsel %vm523, %v2244, %v2249
        %v2251 = vrot.slane %v2236, 1
        %v2252 = vsel %vm523, %v2247, %v2251
        %2253 = vrot.lane.b32.xlu0 %v2245, 127
        %v2254 = vpop.permute.xlu0 %2253
        %2255 = vrot.lane.b32.xlu0 %v2248, 127
        %v2256 = vpop.permute.xlu0 %2255
        %2257 = vrot.lane.b32.xlu0 %v2250, 127
        %v2258 = vpop.permute.xlu0 %2257
        %2259 = vrot.lane.b32.xlu0 %v2252, 127
        %v2260 = vpop.permute.xlu0 %2259
        %2261 = vrot.lane.b32.xlu0 %v2249, 127
        %v2262 = vpop.permute.xlu0 %2261
        %2263 = vrot.lane.b32.xlu0 %v2251, 127
        %v2264 = vpop.permute.xlu0 %2263
        %v2265 = vsel %vm355, %v2254, %v2256
        %v2266 = vsel %vm355, %v2258, %v2260
        %v2267 = vsel %vm355, %v2262, %v2264
        %v2274 = vadd.f32 %v2223, %v2265
        %v2275 = vadd.f32 %v2224, %v2256
        %v2276 = vadd.f32 %v2225, %v2266
        %v2277 = vadd.f32 %v2226, %v2260
        %v2278 = vadd.f32 %v2227, %v2267
        %v2279 = vadd.f32 %v2228, %v2264
        %s2280 = sld [smem:[#allocation4 + $0x3a]]
        %v2281 = vstv %s2280
        %v2282 = vmul.f32 %v2281, %v2189
        %v2283 = vmul.f32 %v2281, %v2190
        %v2284 = vmul.f32 %v2281, %v1997
        %v2285 = vmul.f32 %v2281, %v1998
        %v2286 = vmul.f32 %v2281, %v2191
        %v2287 = vmul.f32 %v2281, %v2192
        %v2294 = vrot.slane %v2282, 1
        %v2295 = vrot.slane %v2284, 1
        %v2296 = vsel %vm523, %v2294, %v2295
        %v2297 = vrot.slane %v2283, 1
        %v2298 = vrot.slane %v2285, 1
        %v2299 = vsel %vm523, %v2297, %v2298
        %v2300 = vrot.slane %v2286, 1
        %v2301 = vsel %vm523, %v2295, %v2300
        %v2302 = vrot.slane %v2287, 1
        %v2303 = vsel %vm523, %v2298, %v2302
        %2304 = vrot.lane.b32.xlu0 %v2296, 126
        %v2305 = vpop.permute.xlu0 %2304
        %2306 = vrot.lane.b32.xlu0 %v2299, 126
        %v2307 = vpop.permute.xlu0 %2306
        %2308 = vrot.lane.b32.xlu0 %v2301, 126
        %v2309 = vpop.permute.xlu0 %2308
        %2310 = vrot.lane.b32.xlu0 %v2303, 126
        %v2311 = vpop.permute.xlu0 %2310
        %2312 = vrot.lane.b32.xlu0 %v2300, 126
        %v2313 = vpop.permute.xlu0 %2312
        %2314 = vrot.lane.b32.xlu0 %v2302, 126
        %v2315 = vpop.permute.xlu0 %2314
        %v2316 = vsel %vm397, %v2305, %v2307
        %v2317 = vsel %vm397, %v2309, %v2311
        %v2318 = vsel %vm397, %v2313, %v2315
        %v2325 = vadd.f32 %v2274, %v2316
        %v2326 = vadd.f32 %v2275, %v2307
        %v2327 = vadd.f32 %v2276, %v2317
        %v2328 = vadd.f32 %v2277, %v2311
        %v2329 = vadd.f32 %v2278, %v2318
        %v2330 = vadd.f32 %v2279, %v2315
        %s2331 = sld [smem:[#allocation4 + $0x3b]]
        %v2332 = vstv %s2331
        %v2333 = vmul.f32 %v2332, %v2190
        %v2334 = vmul.f32 %v2332, %v1998
        %v2335 = vmul.f32 %v2332, %v2192
        %v2339 = vrot.slane %v2333, 1
        %v2340 = vrot.slane %v2334, 1
        %v2341 = vsel %vm523, %v2339, %v2340
        %v2342 = vrot.slane %v2335, 1
        %v2343 = vsel %vm523, %v2340, %v2342
        %2344 = vrot.lane.b32.xlu0 %v2341, 125
        %v2345 = vpop.permute.xlu0 %2344
        %2346 = vrot.lane.b32.xlu0 %v2343, 125
        %v2347 = vpop.permute.xlu0 %2346
        %2348 = vrot.lane.b32.xlu0 %v2342, 125
        %v2349 = vpop.permute.xlu0 %2348
        %v2353 = vadd.f32 %v2325, %v2345
        %v2354 = vadd.f32 %v2326, %v2345
        %v2355 = vadd.f32 %v2327, %v2347
        %v2356 = vadd.f32 %v2328, %v2347
        %v2357 = vadd.f32 %v2329, %v2349
        %v2358 = vadd.f32 %v2330, %v2349
        %s2359 = sld [smem:[#allocation4 + $0x3c]]
        %v2360 = vstv %s2359
        %v2361 = vmul.f32 %v2360, %v2190
        %v2362 = vmul.f32 %v2360, %v1998
        %v2363 = vmul.f32 %v2360, %v2192
        %v2367 = vrot.slane %v2361, 1
        %v2368 = vrot.slane %v2362, 1
        %v2369 = vsel %vm523, %v2367, %v2368
        %v2370 = vrot.slane %v2363, 1
        %v2371 = vsel %vm523, %v2368, %v2370
        %2372 = vrot.lane.b32.xlu0 %v2369, 124
        %v2373 = vpop.permute.xlu0 %2372
        %2374 = vrot.lane.b32.xlu0 %v2371, 124
        %v2375 = vpop.permute.xlu0 %2374
        %2376 = vrot.lane.b32.xlu0 %v2370, 124
        %v2377 = vpop.permute.xlu0 %2376
        %v2381 = vadd.f32 %v2353, %v2373
        %v2382 = vadd.f32 %v2354, %v2373
        %v2383 = vadd.f32 %v2355, %v2375
        %v2384 = vadd.f32 %v2356, %v2375
        %v2385 = vadd.f32 %v2357, %v2377
        %v2386 = vadd.f32 %v2358, %v2377
        %s2387 = sld [smem:[#allocation4 + $0x3d]]
        %v2388 = vstv %s2387
        %v2389 = vmul.f32 %v2388, %v2190
        %v2390 = vmul.f32 %v2388, %v1998
        %v2391 = vmul.f32 %v2388, %v2192
        %v2395 = vrot.slane %v2389, 1
        %v2396 = vrot.slane %v2390, 1
        %v2397 = vsel %vm523, %v2395, %v2396
        %v2398 = vrot.slane %v2391, 1
        %v2399 = vsel %vm523, %v2396, %v2398
        %2400 = vrot.lane.b32.xlu0 %v2397, 123
        %v2401 = vpop.permute.xlu0 %2400
        %2402 = vrot.lane.b32.xlu0 %v2399, 123
        %v2403 = vpop.permute.xlu0 %2402
        %2404 = vrot.lane.b32.xlu0 %v2398, 123
        %v2405 = vpop.permute.xlu0 %2404
        %v2409 = vadd.f32 %v2381, %v2401
        %v2410 = vadd.f32 %v2382, %v2401
        %v2411 = vadd.f32 %v2383, %v2403
        %v2412 = vadd.f32 %v2384, %v2403
        %v2413 = vadd.f32 %v2385, %v2405
        %v2414 = vadd.f32 %v2386, %v2405
        %s2415 = sld [smem:[#allocation4 + $0x3e]]
        %v2416 = vstv %s2415
        %v2417 = vmul.f32 %v2416, %v2190
        %v2418 = vmul.f32 %v2416, %v1998
        %v2419 = vmul.f32 %v2416, %v2192
        %v2423 = vrot.slane %v2417, 1
        %v2424 = vrot.slane %v2418, 1
        %v2425 = vsel %vm523, %v2423, %v2424
        %v2426 = vrot.slane %v2419, 1
        %v2427 = vsel %vm523, %v2424, %v2426
        %2428 = vrot.lane.b32.xlu0 %v2425, 122
        %v2429 = vpop.permute.xlu0 %2428
        %2430 = vrot.lane.b32.xlu0 %v2427, 122
        %v2431 = vpop.permute.xlu0 %2430
        %2432 = vrot.lane.b32.xlu0 %v2426, 122
        %v2433 = vpop.permute.xlu0 %2432
        %v2437 = vadd.f32 %v2409, %v2429
        %v2438 = vadd.f32 %v2410, %v2429
        %v2439 = vadd.f32 %v2411, %v2431
        %v2440 = vadd.f32 %v2412, %v2431
        %v2441 = vadd.f32 %v2413, %v2433
        %v2442 = vadd.f32 %v2414, %v2433
        %v2443 = vld [vmem:[%s303] sm:$0x80]
        %v2444 = vld [vmem:[%s303 + $0x8] sm:$0x80]
        %v2445 = vld [vmem:[%s303 + $0x20] sm:$0x7f]
        %v2446 = vld [vmem:[%s303 + $0x28] sm:$0x7f]
        %s2447 = sld [smem:[#allocation4 + $0x3f]]
        %v2448 = vstv %s2447
        %v2449 = vmul.f32 %v2448, %v2443
        %v2450 = vmul.f32 %v2448, %v2444
        %v2451 = vmul.f32 %v2448, %v1997
        %v2452 = vmul.f32 %v2448, %v1998
        %v2453 = vmul.f32 %v2448, %v2445
        %v2454 = vmul.f32 %v2448, %v2446
        %v2461 = vrot.slane %v2449, 2
        %v2462 = vrot.slane %v2451, 2
        %v2463 = vsel %vm778, %v2461, %v2462
        %v2464 = vrot.slane %v2450, 2
        %v2465 = vrot.slane %v2452, 2
        %v2466 = vsel %vm778, %v2464, %v2465
        %v2467 = vrot.slane %v2453, 2
        %v2468 = vsel %vm778, %v2462, %v2467
        %v2469 = vrot.slane %v2454, 2
        %v2470 = vsel %vm778, %v2465, %v2469
        %v2477 = vadd.f32 %v2437, %v2463
        %v2478 = vadd.f32 %v2438, %v2466
        %v2479 = vadd.f32 %v2439, %v2468
        %v2480 = vadd.f32 %v2440, %v2470
        %v2481 = vadd.f32 %v2441, %v2467
        %v2482 = vadd.f32 %v2442, %v2469
        %s2483 = sld [smem:[#allocation4 + $0x40]]
        %v2484 = vstv %s2483
        %v2485 = vmul.f32 %v2484, %v2443
        %v2486 = vmul.f32 %v2484, %v2444
        %v2487 = vmul.f32 %v2484, %v1997
        %v2488 = vmul.f32 %v2484, %v1998
        %v2489 = vmul.f32 %v2484, %v2445
        %v2490 = vmul.f32 %v2484, %v2446
        %v2497 = vrot.slane %v2485, 2
        %v2498 = vrot.slane %v2487, 2
        %v2499 = vsel %vm778, %v2497, %v2498
        %v2500 = vrot.slane %v2486, 2
        %v2501 = vrot.slane %v2488, 2
        %v2502 = vsel %vm778, %v2500, %v2501
        %v2503 = vrot.slane %v2489, 2
        %v2504 = vsel %vm778, %v2498, %v2503
        %v2505 = vrot.slane %v2490, 2
        %v2506 = vsel %vm778, %v2501, %v2505
        %2507 = vrot.lane.b32.xlu0 %v2499, 127
        %v2508 = vpop.permute.xlu0 %2507
        %2509 = vrot.lane.b32.xlu0 %v2502, 127
        %v2510 = vpop.permute.xlu0 %2509
        %2511 = vrot.lane.b32.xlu0 %v2504, 127
        %v2512 = vpop.permute.xlu0 %2511
        %2513 = vrot.lane.b32.xlu0 %v2506, 127
        %v2514 = vpop.permute.xlu0 %2513
        %2515 = vrot.lane.b32.xlu0 %v2503, 127
        %v2516 = vpop.permute.xlu0 %2515
        %2517 = vrot.lane.b32.xlu0 %v2505, 127
        %v2518 = vpop.permute.xlu0 %2517
        %v2519 = vsel %vm355, %v2508, %v2510
        %v2520 = vsel %vm355, %v2512, %v2514
        %v2521 = vsel %vm355, %v2516, %v2518
        %v2528 = vadd.f32 %v2477, %v2519
        %v2529 = vadd.f32 %v2478, %v2510
        %v2530 = vadd.f32 %v2479, %v2520
        %v2531 = vadd.f32 %v2480, %v2514
        %v2532 = vadd.f32 %v2481, %v2521
        %v2533 = vadd.f32 %v2482, %v2518
        %s2534 = sld [smem:[#allocation4 + $0x41]]
        %v2535 = vstv %s2534
        %v2536 = vmul.f32 %v2535, %v2443
        %v2537 = vmul.f32 %v2535, %v2444
        %v2538 = vmul.f32 %v2535, %v1997
        %v2539 = vmul.f32 %v2535, %v1998
        %v2540 = vmul.f32 %v2535, %v2445
        %v2541 = vmul.f32 %v2535, %v2446
        %v2548 = vrot.slane %v2536, 2
        %v2549 = vrot.slane %v2538, 2
        %v2550 = vsel %vm778, %v2548, %v2549
        %v2551 = vrot.slane %v2537, 2
        %v2552 = vrot.slane %v2539, 2
        %v2553 = vsel %vm778, %v2551, %v2552
        %v2554 = vrot.slane %v2540, 2
        %v2555 = vsel %vm778, %v2549, %v2554
        %v2556 = vrot.slane %v2541, 2
        %v2557 = vsel %vm778, %v2552, %v2556
        %2558 = vrot.lane.b32.xlu0 %v2550, 126
        %v2559 = vpop.permute.xlu0 %2558
        %2560 = vrot.lane.b32.xlu0 %v2553, 126
        %v2561 = vpop.permute.xlu0 %2560
        %2562 = vrot.lane.b32.xlu0 %v2555, 126
        %v2563 = vpop.permute.xlu0 %2562
        %2564 = vrot.lane.b32.xlu0 %v2557, 126
        %v2565 = vpop.permute.xlu0 %2564
        %2566 = vrot.lane.b32.xlu0 %v2554, 126
        %v2567 = vpop.permute.xlu0 %2566
        %2568 = vrot.lane.b32.xlu0 %v2556, 126
        %v2569 = vpop.permute.xlu0 %2568
        %v2570 = vsel %vm397, %v2559, %v2561
        %v2571 = vsel %vm397, %v2563, %v2565
        %v2572 = vsel %vm397, %v2567, %v2569
        %v2579 = vadd.f32 %v2528, %v2570
        %v2580 = vadd.f32 %v2529, %v2561
        %v2581 = vadd.f32 %v2530, %v2571
        %v2582 = vadd.f32 %v2531, %v2565
        %v2583 = vadd.f32 %v2532, %v2572
        %v2584 = vadd.f32 %v2533, %v2569
        %s2585 = sld [smem:[#allocation4 + $0x42]]
        %v2586 = vstv %s2585
        %v2587 = vmul.f32 %v2586, %v2444
        %v2588 = vmul.f32 %v2586, %v1998
        %v2589 = vmul.f32 %v2586, %v2446
        %v2593 = vrot.slane %v2587, 2
        %v2594 = vrot.slane %v2588, 2
        %v2595 = vsel %vm778, %v2593, %v2594
        %v2596 = vrot.slane %v2589, 2
        %v2597 = vsel %vm778, %v2594, %v2596
        %2598 = vrot.lane.b32.xlu0 %v2595, 125
        %v2599 = vpop.permute.xlu0 %2598
        %2600 = vrot.lane.b32.xlu0 %v2597, 125
        %v2601 = vpop.permute.xlu0 %2600
        %2602 = vrot.lane.b32.xlu0 %v2596, 125
        %v2603 = vpop.permute.xlu0 %2602
        %v2607 = vadd.f32 %v2579, %v2599
        %v2608 = vadd.f32 %v2580, %v2599
        %v2609 = vadd.f32 %v2581, %v2601
        %v2610 = vadd.f32 %v2582, %v2601
        %v2611 = vadd.f32 %v2583, %v2603
        %v2612 = vadd.f32 %v2584, %v2603
        %s2613 = sld [smem:[#allocation4 + $0x43]]
        %v2614 = vstv %s2613
        %v2615 = vmul.f32 %v2614, %v2444
        %v2616 = vmul.f32 %v2614, %v1998
        %v2617 = vmul.f32 %v2614, %v2446
        %v2621 = vrot.slane %v2615, 2
        %v2622 = vrot.slane %v2616, 2
        %v2623 = vsel %vm778, %v2621, %v2622
        %v2624 = vrot.slane %v2617, 2
        %v2625 = vsel %vm778, %v2622, %v2624
        %2626 = vrot.lane.b32.xlu0 %v2623, 124
        %v2627 = vpop.permute.xlu0 %2626
        %2628 = vrot.lane.b32.xlu0 %v2625, 124
        %v2629 = vpop.permute.xlu0 %2628
        %2630 = vrot.lane.b32.xlu0 %v2624, 124
        %v2631 = vpop.permute.xlu0 %2630
        %v2635 = vadd.f32 %v2607, %v2627
        %v2636 = vadd.f32 %v2608, %v2627
        %v2637 = vadd.f32 %v2609, %v2629
        %v2638 = vadd.f32 %v2610, %v2629
        %v2639 = vadd.f32 %v2611, %v2631
        %v2640 = vadd.f32 %v2612, %v2631
        %s2641 = sld [smem:[#allocation4 + $0x44]]
        %v2642 = vstv %s2641
        %v2643 = vmul.f32 %v2642, %v2444
        %v2644 = vmul.f32 %v2642, %v1998
        %v2645 = vmul.f32 %v2642, %v2446
        %v2649 = vrot.slane %v2643, 2
        %v2650 = vrot.slane %v2644, 2
        %v2651 = vsel %vm778, %v2649, %v2650
        %v2652 = vrot.slane %v2645, 2
        %v2653 = vsel %vm778, %v2650, %v2652
        %2654 = vrot.lane.b32.xlu0 %v2651, 123
        %v2655 = vpop.permute.xlu0 %2654
        %2656 = vrot.lane.b32.xlu0 %v2653, 123
        %v2657 = vpop.permute.xlu0 %2656
        %2658 = vrot.lane.b32.xlu0 %v2652, 123
        %v2659 = vpop.permute.xlu0 %2658
        %v2663 = vadd.f32 %v2635, %v2655
        %v2664 = vadd.f32 %v2636, %v2655
        %v2665 = vadd.f32 %v2637, %v2657
        %v2666 = vadd.f32 %v2638, %v2657
        %v2667 = vadd.f32 %v2639, %v2659
        %v2668 = vadd.f32 %v2640, %v2659
        %s2669 = sld [smem:[#allocation4 + $0x45]]
        %v2670 = vstv %s2669
        %v2671 = vmul.f32 %v2670, %v2444
        %v2672 = vmul.f32 %v2670, %v1998
        %v2673 = vmul.f32 %v2670, %v2446
        %v2677 = vrot.slane %v2671, 2
        %v2678 = vrot.slane %v2672, 2
        %v2679 = vsel %vm778, %v2677, %v2678
        %v2680 = vrot.slane %v2673, 2
        %v2681 = vsel %vm778, %v2678, %v2680
        %2682 = vrot.lane.b32.xlu0 %v2679, 122
        %v2683 = vpop.permute.xlu0 %2682
        %2684 = vrot.lane.b32.xlu0 %v2681, 122
        %v2685 = vpop.permute.xlu0 %2684
        %2686 = vrot.lane.b32.xlu0 %v2680, 122
        %v2687 = vpop.permute.xlu0 %2686
        %v2691 = vadd.f32 %v2663, %v2683
        %v2692 = vadd.f32 %v2664, %v2683
        %v2693 = vadd.f32 %v2665, %v2685
        %v2694 = vadd.f32 %v2666, %v2685
        %v2695 = vadd.f32 %v2667, %v2687
        %v2696 = vadd.f32 %v2668, %v2687
        %v2697 = vld [vmem:[%s303 + $0x20] sm:$0xff]
        %v2698 = vld [vmem:[%s303 + $0x28] sm:$0xff]
        %s2699 = sld [smem:[#allocation4 + $0x46]]
        %v2700 = vstv %s2699
        %v2701 = vmul.f32 %v2700, %v1997
        %v2702 = vmul.f32 %v2700, %v1998
        %v2703 = vmul.f32 %v2700, %v2697
        %v2704 = vmul.f32 %v2700, %v2698
        %v2709 = vrot.slane %v2701, 3
        %v2710 = vrot.slane %v2702, 3
        %v2711 = vrot.slane %v2703, 3
        %v2712 = vsel %vm1027, %v2709, %v2711
        %v2713 = vrot.slane %v2704, 3
        %v2714 = vsel %vm1027, %v2710, %v2713
        %v2721 = vadd.f32 %v2691, %v2709
        %v2722 = vadd.f32 %v2692, %v2710
        %v2723 = vadd.f32 %v2693, %v2712
        %v2724 = vadd.f32 %v2694, %v2714
        %v2725 = vadd.f32 %v2695, %v2711
        %v2726 = vadd.f32 %v2696, %v2713
        %s2727 = sld [smem:[#allocation4 + $0x47]]
        %v2728 = vstv %s2727
        %v2729 = vmul.f32 %v2728, %v1997
        %v2730 = vmul.f32 %v2728, %v1998
        %v2731 = vmul.f32 %v2728, %v2697
        %v2732 = vmul.f32 %v2728, %v2698
        %v2737 = vrot.slane %v2729, 3
        %v2738 = vrot.slane %v2730, 3
        %v2739 = vrot.slane %v2731, 3
        %v2740 = vsel %vm1027, %v2737, %v2739
        %v2741 = vrot.slane %v2732, 3
        %v2742 = vsel %vm1027, %v2738, %v2741
        %2743 = vrot.lane.b32.xlu0 %v2737, 127
        %v2744 = vpop.permute.xlu0 %2743
        %2745 = vrot.lane.b32.xlu0 %v2738, 127
        %v2746 = vpop.permute.xlu0 %2745
        %2747 = vrot.lane.b32.xlu0 %v2740, 127
        %v2748 = vpop.permute.xlu0 %2747
        %2749 = vrot.lane.b32.xlu0 %v2742, 127
        %v2750 = vpop.permute.xlu0 %2749
        %2751 = vrot.lane.b32.xlu0 %v2739, 127
        %v2752 = vpop.permute.xlu0 %2751
        %2753 = vrot.lane.b32.xlu0 %v2741, 127
        %v2754 = vpop.permute.xlu0 %2753
        %v2755 = vsel %vm355, %v2744, %v2746
        %v2756 = vsel %vm355, %v2748, %v2750
        %v2757 = vsel %vm355, %v2752, %v2754
        %v2764 = vadd.f32 %v2721, %v2755
        %v2765 = vadd.f32 %v2722, %v2746
        %v2766 = vadd.f32 %v2723, %v2756
        %v2767 = vadd.f32 %v2724, %v2750
        %v2768 = vadd.f32 %v2725, %v2757
        %v2769 = vadd.f32 %v2726, %v2754
        %s2770 = sld [smem:[#allocation4 + $0x48]]
        %v2771 = vstv %s2770
        %v2772 = vmul.f32 %v2771, %v1997
        %v2773 = vmul.f32 %v2771, %v1998
        %v2774 = vmul.f32 %v2771, %v2697
        %v2775 = vmul.f32 %v2771, %v2698
        %v2780 = vrot.slane %v2772, 3
        %v2781 = vrot.slane %v2773, 3
        %v2782 = vrot.slane %v2774, 3
        %v2783 = vsel %vm1027, %v2780, %v2782
        %v2784 = vrot.slane %v2775, 3
        %v2785 = vsel %vm1027, %v2781, %v2784
        %2786 = vrot.lane.b32.xlu0 %v2780, 126
        %v2787 = vpop.permute.xlu0 %2786
        %2788 = vrot.lane.b32.xlu0 %v2781, 126
        %v2789 = vpop.permute.xlu0 %2788
        %2790 = vrot.lane.b32.xlu0 %v2783, 126
        %v2791 = vpop.permute.xlu0 %2790
        %2792 = vrot.lane.b32.xlu0 %v2785, 126
        %v2793 = vpop.permute.xlu0 %2792
        %2794 = vrot.lane.b32.xlu0 %v2782, 126
        %v2795 = vpop.permute.xlu0 %2794
        %2796 = vrot.lane.b32.xlu0 %v2784, 126
        %v2797 = vpop.permute.xlu0 %2796
        %v2798 = vsel %vm397, %v2787, %v2789
        %v2799 = vsel %vm397, %v2791, %v2793
        %v2800 = vsel %vm397, %v2795, %v2797
        %v2807 = vadd.f32 %v2764, %v2798
        %v2808 = vadd.f32 %v2765, %v2789
        %v2809 = vadd.f32 %v2766, %v2799
        %v2810 = vadd.f32 %v2767, %v2793
        %v2811 = vadd.f32 %v2768, %v2800
        %v2812 = vadd.f32 %v2769, %v2797
        %s2813 = sld [smem:[#allocation4 + $0x49]]
        %v2814 = vstv %s2813
        %v2815 = vmul.f32 %v2814, %v1998
        %v2816 = vmul.f32 %v2814, %v2698
        %v2819 = vrot.slane %v2815, 3
        %v2820 = vrot.slane %v2816, 3
        %v2821 = vsel %vm1027, %v2819, %v2820
        %2822 = vrot.lane.b32.xlu0 %v2819, 125
        %v2823 = vpop.permute.xlu0 %2822
        %2824 = vrot.lane.b32.xlu0 %v2821, 125
        %v2825 = vpop.permute.xlu0 %2824
        %2826 = vrot.lane.b32.xlu0 %v2820, 125
        %v2827 = vpop.permute.xlu0 %2826
        %v2831 = vadd.f32 %v2807, %v2823
        %v2832 = vadd.f32 %v2808, %v2823
        %v2833 = vadd.f32 %v2809, %v2825
        %v2834 = vadd.f32 %v2810, %v2825
        %v2835 = vadd.f32 %v2811, %v2827
        %v2836 = vadd.f32 %v2812, %v2827
        %s2837 = sld [smem:[#allocation4 + $0x4a]]
        %v2838 = vstv %s2837
        %v2839 = vmul.f32 %v2838, %v1998
        %v2840 = vmul.f32 %v2838, %v2698
        %v2843 = vrot.slane %v2839, 3
        %v2844 = vrot.slane %v2840, 3
        %v2845 = vsel %vm1027, %v2843, %v2844
        %2846 = vrot.lane.b32.xlu0 %v2843, 124
        %v2847 = vpop.permute.xlu0 %2846
        %2848 = vrot.lane.b32.xlu0 %v2845, 124
        %v2849 = vpop.permute.xlu0 %2848
        %2850 = vrot.lane.b32.xlu0 %v2844, 124
        %v2851 = vpop.permute.xlu0 %2850
        %v2855 = vadd.f32 %v2831, %v2847
        %v2856 = vadd.f32 %v2832, %v2847
        %v2857 = vadd.f32 %v2833, %v2849
        %v2858 = vadd.f32 %v2834, %v2849
        %v2859 = vadd.f32 %v2835, %v2851
        %v2860 = vadd.f32 %v2836, %v2851
        %s2861 = sld [smem:[#allocation4 + $0x4b]]
        %v2862 = vstv %s2861
        %v2863 = vmul.f32 %v2862, %v1998
        %v2864 = vmul.f32 %v2862, %v2698
        %v2867 = vrot.slane %v2863, 3
        %v2868 = vrot.slane %v2864, 3
        %v2869 = vsel %vm1027, %v2867, %v2868
        %2870 = vrot.lane.b32.xlu0 %v2867, 123
        %v2871 = vpop.permute.xlu0 %2870
        %2872 = vrot.lane.b32.xlu0 %v2869, 123
        %v2873 = vpop.permute.xlu0 %2872
        %2874 = vrot.lane.b32.xlu0 %v2868, 123
        %v2875 = vpop.permute.xlu0 %2874
        %v2879 = vadd.f32 %v2855, %v2871
        %v2880 = vadd.f32 %v2856, %v2871
        %v2881 = vadd.f32 %v2857, %v2873
        %v2882 = vadd.f32 %v2858, %v2873
        %v2883 = vadd.f32 %v2859, %v2875
        %v2884 = vadd.f32 %v2860, %v2875
        %s2885 = sld [smem:[#allocation4 + $0x4c]]
        %v2886 = vstv %s2885
        %v2887 = vmul.f32 %v2886, %v1998
        %v2888 = vmul.f32 %v2886, %v2698
        %v2891 = vrot.slane %v2887, 3
        %v2892 = vrot.slane %v2888, 3
        %v2893 = vsel %vm1027, %v2891, %v2892
        %2894 = vrot.lane.b32.xlu0 %v2891, 122
        %v2895 = vpop.permute.xlu0 %2894
        %2896 = vrot.lane.b32.xlu0 %v2893, 122
        %v2897 = vpop.permute.xlu0 %2896
        %2898 = vrot.lane.b32.xlu0 %v2892, 122
        %v2899 = vpop.permute.xlu0 %2898
        %v2903 = vadd.f32 %v2879, %v2895
        %v2904 = vadd.f32 %v2880, %v2895
        %v2905 = vadd.f32 %v2881, %v2897
        %v2906 = vadd.f32 %v2882, %v2897
        %v2907 = vadd.f32 %v2883, %v2899
        %v2908 = vadd.f32 %v2884, %v2899
        %v2909 = vld [vmem:[%s303 + $0x10] sm:$0xfe]
        %v2910 = vld [vmem:[%s303 + $0x18] sm:$0xfe]
        %v2911 = vld [vmem:[%s303 + $0x20] sm:$0xff]
        %v2912 = vld [vmem:[%s303 + $0x28] sm:$0xff]
        %v2913 = vld [vmem:[%s303 + $0x30] sm:$0x1]
        %v2914 = vld [vmem:[%s303 + $0x38] sm:$0x1]
        %s2915 = sld [smem:[#allocation4 + $0x4d]]
        %v2916 = vstv %s2915
        %v2917 = vmul.f32 %v2916, %v2909
        %v2918 = vmul.f32 %v2916, %v2910
        %v2919 = vmul.f32 %v2916, %v2911
        %v2920 = vmul.f32 %v2916, %v2912
        %v2921 = vmul.f32 %v2916, %v2913
        %v2922 = vmul.f32 %v2916, %v2914
        %v2929 = vrot.slane %v2917, 4
        %v2930 = vrot.slane %v2918, 4
        %v2931 = vrot.slane %v2919, 4
        %v2932 = vsel %vm1248, %v2929, %v2931
        %v2933 = vrot.slane %v2920, 4
        %v2934 = vsel %vm1248, %v2930, %v2933
        %v2935 = vrot.slane %v2921, 4
        %v2936 = vsel %vm1248, %v2931, %v2935
        %v2937 = vrot.slane %v2922, 4
        %v2938 = vsel %vm1248, %v2933, %v2937
        %v2945 = vadd.f32 %v2903, %v2929
        %v2946 = vadd.f32 %v2904, %v2930
        %v2947 = vadd.f32 %v2905, %v2932
        %v2948 = vadd.f32 %v2906, %v2934
        %v2949 = vadd.f32 %v2907, %v2936
        %v2950 = vadd.f32 %v2908, %v2938
        %s2951 = sld [smem:[#allocation4 + $0x4e]]
        %v2952 = vstv %s2951
        %v2953 = vmul.f32 %v2952, %v2909
        %v2954 = vmul.f32 %v2952, %v2910
        %v2955 = vmul.f32 %v2952, %v2911
        %v2956 = vmul.f32 %v2952, %v2912
        %v2957 = vmul.f32 %v2952, %v2913
        %v2958 = vmul.f32 %v2952, %v2914
        %v2965 = vrot.slane %v2953, 4
        %v2966 = vrot.slane %v2954, 4
        %v2967 = vrot.slane %v2955, 4
        %v2968 = vsel %vm1248, %v2965, %v2967
        %v2969 = vrot.slane %v2956, 4
        %v2970 = vsel %vm1248, %v2966, %v2969
        %v2971 = vrot.slane %v2957, 4
        %v2972 = vsel %vm1248, %v2967, %v2971
        %v2973 = vrot.slane %v2958, 4
        %v2974 = vsel %vm1248, %v2969, %v2973
        %2975 = vrot.lane.b32.xlu0 %v2965, 127
        %v2976 = vpop.permute.xlu0 %2975
        %2977 = vrot.lane.b32.xlu0 %v2966, 127
        %v2978 = vpop.permute.xlu0 %2977
        %2979 = vrot.lane.b32.xlu0 %v2968, 127
        %v2980 = vpop.permute.xlu0 %2979
        %2981 = vrot.lane.b32.xlu0 %v2970, 127
        %v2982 = vpop.permute.xlu0 %2981
        %2983 = vrot.lane.b32.xlu0 %v2972, 127
        %v2984 = vpop.permute.xlu0 %2983
        %2985 = vrot.lane.b32.xlu0 %v2974, 127
        %v2986 = vpop.permute.xlu0 %2985
        %v2987 = vsel %vm355, %v2976, %v2978
        %v2988 = vsel %vm355, %v2980, %v2982
        %v2989 = vsel %vm355, %v2984, %v2986
        %v2996 = vadd.f32 %v2945, %v2987
        %v2997 = vadd.f32 %v2946, %v2978
        %v2998 = vadd.f32 %v2947, %v2988
        %v2999 = vadd.f32 %v2948, %v2982
        %v3000 = vadd.f32 %v2949, %v2989
        %v3001 = vadd.f32 %v2950, %v2986
        %s3002 = sld [smem:[#allocation4 + $0x4f]]
        %v3003 = vstv %s3002
        %v3004 = vmul.f32 %v3003, %v2909
        %v3005 = vmul.f32 %v3003, %v2910
        %v3006 = vmul.f32 %v3003, %v2911
        %v3007 = vmul.f32 %v3003, %v2912
        %v3008 = vmul.f32 %v3003, %v2913
        %v3009 = vmul.f32 %v3003, %v2914
        %v3016 = vrot.slane %v3004, 4
        %v3017 = vrot.slane %v3005, 4
        %v3018 = vrot.slane %v3006, 4
        %v3019 = vsel %vm1248, %v3016, %v3018
        %v3020 = vrot.slane %v3007, 4
        %v3021 = vsel %vm1248, %v3017, %v3020
        %v3022 = vrot.slane %v3008, 4
        %v3023 = vsel %vm1248, %v3018, %v3022
        %v3024 = vrot.slane %v3009, 4
        %v3025 = vsel %vm1248, %v3020, %v3024
        %3026 = vrot.lane.b32.xlu0 %v3016, 126
        %v3027 = vpop.permute.xlu0 %3026
        %3028 = vrot.lane.b32.xlu0 %v3017, 126
        %v3029 = vpop.permute.xlu0 %3028
        %3030 = vrot.lane.b32.xlu0 %v3019, 126
        %v3031 = vpop.permute.xlu0 %3030
        %3032 = vrot.lane.b32.xlu0 %v3021, 126
        %v3033 = vpop.permute.xlu0 %3032
        %3034 = vrot.lane.b32.xlu0 %v3023, 126
        %v3035 = vpop.permute.xlu0 %3034
        %3036 = vrot.lane.b32.xlu0 %v3025, 126
        %v3037 = vpop.permute.xlu0 %3036
        %v3038 = vsel %vm397, %v3027, %v3029
        %v3039 = vsel %vm397, %v3031, %v3033
        %v3040 = vsel %vm397, %v3035, %v3037
        %v3047 = vadd.f32 %v2996, %v3038
        %v3048 = vadd.f32 %v2997, %v3029
        %v3049 = vadd.f32 %v2998, %v3039
        %v3050 = vadd.f32 %v2999, %v3033
        %v3051 = vadd.f32 %v3000, %v3040
        %v3052 = vadd.f32 %v3001, %v3037
        %s3053 = sld [smem:[#allocation4 + $0x50]]
        %v3054 = vstv %s3053
        %v3055 = vmul.f32 %v3054, %v2910
        %v3056 = vmul.f32 %v3054, %v2912
        %v3057 = vmul.f32 %v3054, %v2914
        %v3061 = vrot.slane %v3055, 4
        %v3062 = vrot.slane %v3056, 4
        %v3063 = vsel %vm1248, %v3061, %v3062
        %v3064 = vrot.slane %v3057, 4
        %v3065 = vsel %vm1248, %v3062, %v3064
        %3066 = vrot.lane.b32.xlu0 %v3061, 125
        %v3067 = vpop.permute.xlu0 %3066
        %3068 = vrot.lane.b32.xlu0 %v3063, 125
        %v3069 = vpop.permute.xlu0 %3068
        %3070 = vrot.lane.b32.xlu0 %v3065, 125
        %v3071 = vpop.permute.xlu0 %3070
        %v3075 = vadd.f32 %v3047, %v3067
        %v3076 = vadd.f32 %v3048, %v3067
        %v3077 = vadd.f32 %v3049, %v3069
        %v3078 = vadd.f32 %v3050, %v3069
        %v3079 = vadd.f32 %v3051, %v3071
        %v3080 = vadd.f32 %v3052, %v3071
        %s3081 = sld [smem:[#allocation4 + $0x51]]
        %v3082 = vstv %s3081
        %v3083 = vmul.f32 %v3082, %v2910
        %v3084 = vmul.f32 %v3082, %v2912
        %v3085 = vmul.f32 %v3082, %v2914
        %v3089 = vrot.slane %v3083, 4
        %v3090 = vrot.slane %v3084, 4
        %v3091 = vsel %vm1248, %v3089, %v3090
        %v3092 = vrot.slane %v3085, 4
        %v3093 = vsel %vm1248, %v3090, %v3092
        %3094 = vrot.lane.b32.xlu0 %v3089, 124
        %v3095 = vpop.permute.xlu0 %3094
        %3096 = vrot.lane.b32.xlu0 %v3091, 124
        %v3097 = vpop.permute.xlu0 %3096
        %3098 = vrot.lane.b32.xlu0 %v3093, 124
        %v3099 = vpop.permute.xlu0 %3098
        %v3103 = vadd.f32 %v3075, %v3095
        %v3104 = vadd.f32 %v3076, %v3095
        %v3105 = vadd.f32 %v3077, %v3097
        %v3106 = vadd.f32 %v3078, %v3097
        %v3107 = vadd.f32 %v3079, %v3099
        %v3108 = vadd.f32 %v3080, %v3099
        %s3109 = sld [smem:[#allocation4 + $0x52]]
        %v3110 = vstv %s3109
        %v3111 = vmul.f32 %v3110, %v2910
        %v3112 = vmul.f32 %v3110, %v2912
        %v3113 = vmul.f32 %v3110, %v2914
        %v3117 = vrot.slane %v3111, 4
        %v3118 = vrot.slane %v3112, 4
        %v3119 = vsel %vm1248, %v3117, %v3118
        %v3120 = vrot.slane %v3113, 4
        %v3121 = vsel %vm1248, %v3118, %v3120
        %3122 = vrot.lane.b32.xlu0 %v3117, 123
        %v3123 = vpop.permute.xlu0 %3122
        %3124 = vrot.lane.b32.xlu0 %v3119, 123
        %v3125 = vpop.permute.xlu0 %3124
        %3126 = vrot.lane.b32.xlu0 %v3121, 123
        %v3127 = vpop.permute.xlu0 %3126
        %v3131 = vadd.f32 %v3103, %v3123
        %v3132 = vadd.f32 %v3104, %v3123
        %v3133 = vadd.f32 %v3105, %v3125
        %v3134 = vadd.f32 %v3106, %v3125
        %v3135 = vadd.f32 %v3107, %v3127
        %v3136 = vadd.f32 %v3108, %v3127
        %s3137 = sld [smem:[#allocation4 + $0x53]]
        %v3138 = vstv %s3137
        %v3139 = vmul.f32 %v3138, %v2910
        %v3140 = vmul.f32 %v3138, %v2912
        %v3141 = vmul.f32 %v3138, %v2914
        %v3145 = vrot.slane %v3139, 4
        %v3146 = vrot.slane %v3140, 4
        %v3147 = vsel %vm1248, %v3145, %v3146
        %v3148 = vrot.slane %v3141, 4
        %v3149 = vsel %vm1248, %v3146, %v3148
        %3150 = vrot.lane.b32.xlu0 %v3145, 122
        %v3151 = vpop.permute.xlu0 %3150
        %3152 = vrot.lane.b32.xlu0 %v3147, 122
        %v3153 = vpop.permute.xlu0 %3152
        %3154 = vrot.lane.b32.xlu0 %v3149, 122
        %v3155 = vpop.permute.xlu0 %3154
        %v3159 = vadd.f32 %v3131, %v3151
        %v3160 = vadd.f32 %v3132, %v3151
        %v3161 = vadd.f32 %v3133, %v3153
        %v3162 = vadd.f32 %v3134, %v3153
        %v3163 = vadd.f32 %v3135, %v3155
        %v3164 = vadd.f32 %v3136, %v3155
        %v3165 = vld [vmem:[%s303 + $0x10] sm:$0xfc]
        %v3166 = vld [vmem:[%s303 + $0x18] sm:$0xfc]
        %v3167 = vld [vmem:[%s303 + $0x30] sm:$0x3]
        %v3168 = vld [vmem:[%s303 + $0x38] sm:$0x3]
        %s3169 = sld [smem:[#allocation4 + $0x54]]
        %v3170 = vstv %s3169
        %v3171 = vmul.f32 %v3170, %v3165
        %v3172 = vmul.f32 %v3170, %v3166
        %v3173 = vmul.f32 %v3170, %v2911
        %v3174 = vmul.f32 %v3170, %v2912
        %v3175 = vmul.f32 %v3170, %v3167
        %v3176 = vmul.f32 %v3170, %v3168
        %v3183 = vrot.slane %v3171, 5
        %v3184 = vrot.slane %v3172, 5
        %v3185 = vrot.slane %v3173, 5
        %v3186 = vsel %vm1503, %v3183, %v3185
        %v3187 = vrot.slane %v3174, 5
        %v3188 = vsel %vm1503, %v3184, %v3187
        %v3189 = vrot.slane %v3175, 5
        %v3190 = vsel %vm1503, %v3185, %v3189
        %v3191 = vrot.slane %v3176, 5
        %v3192 = vsel %vm1503, %v3187, %v3191
        %v3199 = vadd.f32 %v3159, %v3183
        %v3200 = vadd.f32 %v3160, %v3184
        %v3201 = vadd.f32 %v3161, %v3186
        %v3202 = vadd.f32 %v3162, %v3188
        %v3203 = vadd.f32 %v3163, %v3190
        %v3204 = vadd.f32 %v3164, %v3192
        %s3205 = sld [smem:[#allocation4 + $0x55]]
        %v3206 = vstv %s3205
        %v3207 = vmul.f32 %v3206, %v3165
        %v3208 = vmul.f32 %v3206, %v3166
        %v3209 = vmul.f32 %v3206, %v2911
        %v3210 = vmul.f32 %v3206, %v2912
        %v3211 = vmul.f32 %v3206, %v3167
        %v3212 = vmul.f32 %v3206, %v3168
        %v3219 = vrot.slane %v3207, 5
        %v3220 = vrot.slane %v3208, 5
        %v3221 = vrot.slane %v3209, 5
        %v3222 = vsel %vm1503, %v3219, %v3221
        %v3223 = vrot.slane %v3210, 5
        %v3224 = vsel %vm1503, %v3220, %v3223
        %v3225 = vrot.slane %v3211, 5
        %v3226 = vsel %vm1503, %v3221, %v3225
        %v3227 = vrot.slane %v3212, 5
        %v3228 = vsel %vm1503, %v3223, %v3227
        %3229 = vrot.lane.b32.xlu0 %v3219, 127
        %v3230 = vpop.permute.xlu0 %3229
        %3231 = vrot.lane.b32.xlu0 %v3220, 127
        %v3232 = vpop.permute.xlu0 %3231
        %3233 = vrot.lane.b32.xlu0 %v3222, 127
        %v3234 = vpop.permute.xlu0 %3233
        %3235 = vrot.lane.b32.xlu0 %v3224, 127
        %v3236 = vpop.permute.xlu0 %3235
        %3237 = vrot.lane.b32.xlu0 %v3226, 127
        %v3238 = vpop.permute.xlu0 %3237
        %3239 = vrot.lane.b32.xlu0 %v3228, 127
        %v3240 = vpop.permute.xlu0 %3239
        %v3241 = vsel %vm355, %v3230, %v3232
        %v3242 = vsel %vm355, %v3234, %v3236
        %v3243 = vsel %vm355, %v3238, %v3240
        %v3250 = vadd.f32 %v3199, %v3241
        %v3251 = vadd.f32 %v3200, %v3232
        %v3252 = vadd.f32 %v3201, %v3242
        %v3253 = vadd.f32 %v3202, %v3236
        %v3254 = vadd.f32 %v3203, %v3243
        %v3255 = vadd.f32 %v3204, %v3240
        %s3256 = sld [smem:[#allocation4 + $0x56]]
        %v3257 = vstv %s3256
        %v3258 = vmul.f32 %v3257, %v3165
        %v3259 = vmul.f32 %v3257, %v3166
        %v3260 = vmul.f32 %v3257, %v2911
        %v3261 = vmul.f32 %v3257, %v2912
        %v3262 = vmul.f32 %v3257, %v3167
        %v3263 = vmul.f32 %v3257, %v3168
        %v3270 = vrot.slane %v3258, 5
        %v3271 = vrot.slane %v3259, 5
        %v3272 = vrot.slane %v3260, 5
        %v3273 = vsel %vm1503, %v3270, %v3272
        %v3274 = vrot.slane %v3261, 5
        %v3275 = vsel %vm1503, %v3271, %v3274
        %v3276 = vrot.slane %v3262, 5
        %v3277 = vsel %vm1503, %v3272, %v3276
        %v3278 = vrot.slane %v3263, 5
        %v3279 = vsel %vm1503, %v3274, %v3278
        %3280 = vrot.lane.b32.xlu0 %v3270, 126
        %v3281 = vpop.permute.xlu0 %3280
        %3282 = vrot.lane.b32.xlu0 %v3271, 126
        %v3283 = vpop.permute.xlu0 %3282
        %3284 = vrot.lane.b32.xlu0 %v3273, 126
        %v3285 = vpop.permute.xlu0 %3284
        %3286 = vrot.lane.b32.xlu0 %v3275, 126
        %v3287 = vpop.permute.xlu0 %3286
        %3288 = vrot.lane.b32.xlu0 %v3277, 126
        %v3289 = vpop.permute.xlu0 %3288
        %3290 = vrot.lane.b32.xlu0 %v3279, 126
        %v3291 = vpop.permute.xlu0 %3290
        %v3292 = vsel %vm397, %v3281, %v3283
        %v3293 = vsel %vm397, %v3285, %v3287
        %v3294 = vsel %vm397, %v3289, %v3291
        %v3301 = vadd.f32 %v3250, %v3292
        %v3302 = vadd.f32 %v3251, %v3283
        %v3303 = vadd.f32 %v3252, %v3293
        %v3304 = vadd.f32 %v3253, %v3287
        %v3305 = vadd.f32 %v3254, %v3294
        %v3306 = vadd.f32 %v3255, %v3291
        %s3307 = sld [smem:[#allocation4 + $0x57]]
        %v3308 = vstv %s3307
        %v3309 = vmul.f32 %v3308, %v3166
        %v3310 = vmul.f32 %v3308, %v2912
        %v3311 = vmul.f32 %v3308, %v3168
        %v3315 = vrot.slane %v3309, 5
        %v3316 = vrot.slane %v3310, 5
        %v3317 = vsel %vm1503, %v3315, %v3316
        %v3318 = vrot.slane %v3311, 5
        %v3319 = vsel %vm1503, %v3316, %v3318
        %3320 = vrot.lane.b32.xlu0 %v3315, 125
        %v3321 = vpop.permute.xlu0 %3320
        %3322 = vrot.lane.b32.xlu0 %v3317, 125
        %v3323 = vpop.permute.xlu0 %3322
        %3324 = vrot.lane.b32.xlu0 %v3319, 125
        %v3325 = vpop.permute.xlu0 %3324
        %v3329 = vadd.f32 %v3301, %v3321
        %v3330 = vadd.f32 %v3302, %v3321
        %v3331 = vadd.f32 %v3303, %v3323
        %v3332 = vadd.f32 %v3304, %v3323
        %v3333 = vadd.f32 %v3305, %v3325
        %v3334 = vadd.f32 %v3306, %v3325
        %s3335 = sld [smem:[#allocation4 + $0x58]]
        %v3336 = vstv %s3335
        %v3337 = vmul.f32 %v3336, %v3166
        %v3338 = vmul.f32 %v3336, %v2912
        %v3339 = vmul.f32 %v3336, %v3168
        %v3343 = vrot.slane %v3337, 5
        %v3344 = vrot.slane %v3338, 5
        %v3345 = vsel %vm1503, %v3343, %v3344
        %v3346 = vrot.slane %v3339, 5
        %v3347 = vsel %vm1503, %v3344, %v3346
        %3348 = vrot.lane.b32.xlu0 %v3343, 124
        %v3349 = vpop.permute.xlu0 %3348
        %3350 = vrot.lane.b32.xlu0 %v3345, 124
        %v3351 = vpop.permute.xlu0 %3350
        %3352 = vrot.lane.b32.xlu0 %v3347, 124
        %v3353 = vpop.permute.xlu0 %3352
        %v3357 = vadd.f32 %v3329, %v3349
        %v3358 = vadd.f32 %v3330, %v3349
        %v3359 = vadd.f32 %v3331, %v3351
        %v3360 = vadd.f32 %v3332, %v3351
        %v3361 = vadd.f32 %v3333, %v3353
        %v3362 = vadd.f32 %v3334, %v3353
        %s3363 = sld [smem:[#allocation4 + $0x59]]
        %v3364 = vstv %s3363
        %v3365 = vmul.f32 %v3364, %v3166
        %v3366 = vmul.f32 %v3364, %v2912
        %v3367 = vmul.f32 %v3364, %v3168
        %v3371 = vrot.slane %v3365, 5
        %v3372 = vrot.slane %v3366, 5
        %v3373 = vsel %vm1503, %v3371, %v3372
        %v3374 = vrot.slane %v3367, 5
        %v3375 = vsel %vm1503, %v3372, %v3374
        %3376 = vrot.lane.b32.xlu0 %v3371, 123
        %v3377 = vpop.permute.xlu0 %3376
        %3378 = vrot.lane.b32.xlu0 %v3373, 123
        %v3379 = vpop.permute.xlu0 %3378
        %3380 = vrot.lane.b32.xlu0 %v3375, 123
        %v3381 = vpop.permute.xlu0 %3380
        %v3385 = vadd.f32 %v3357, %v3377
        %v3386 = vadd.f32 %v3358, %v3377
        %v3387 = vadd.f32 %v3359, %v3379
        %v3388 = vadd.f32 %v3360, %v3379
        %v3389 = vadd.f32 %v3361, %v3381
        %v3390 = vadd.f32 %v3362, %v3381
        %s3391 = sld [smem:[#allocation4 + $0x5a]]
        %v3392 = vstv %s3391
        %v3393 = vmul.f32 %v3392, %v3166
        %v3394 = vmul.f32 %v3392, %v2912
        %v3395 = vmul.f32 %v3392, %v3168
        %v3399 = vrot.slane %v3393, 5
        %v3400 = vrot.slane %v3394, 5
        %v3401 = vsel %vm1503, %v3399, %v3400
        %v3402 = vrot.slane %v3395, 5
        %v3403 = vsel %vm1503, %v3400, %v3402
        %3404 = vrot.lane.b32.xlu0 %v3399, 122
        %v3405 = vpop.permute.xlu0 %3404
        %3406 = vrot.lane.b32.xlu0 %v3401, 122
        %v3407 = vpop.permute.xlu0 %3406
        %3408 = vrot.lane.b32.xlu0 %v3403, 122
        %v3409 = vpop.permute.xlu0 %3408
        %v3413 = vadd.f32 %v3385, %v3405
        %v3414 = vadd.f32 %v3386, %v3405
        %v3415 = vadd.f32 %v3387, %v3407
        %v3416 = vadd.f32 %v3388, %v3407
        %v3417 = vadd.f32 %v3389, %v3409
        %v3418 = vadd.f32 %v3390, %v3409
        %v3419 = vld [vmem:[%s303 + $0x10] sm:$0xf8]
        %v3420 = vld [vmem:[%s303 + $0x18] sm:$0xf8]
        %v3421 = vld [vmem:[%s303 + $0x30] sm:$0x7]
        %v3422 = vld [vmem:[%s303 + $0x38] sm:$0x7]
        %s3423 = sld [smem:[#allocation4 + $0x5b]]
        %v3424 = vstv %s3423
        %v3425 = vmul.f32 %v3424, %v3419
        %v3426 = vmul.f32 %v3424, %v3420
        %v3427 = vmul.f32 %v3424, %v2911
        %v3428 = vmul.f32 %v3424, %v2912
        %v3429 = vmul.f32 %v3424, %v3421
        %v3430 = vmul.f32 %v3424, %v3422
        %v3437 = vrot.slane %v3425, 6
        %v3438 = vrot.slane %v3426, 6
        %v3439 = vrot.slane %v3427, 6
        %v3440 = vsel %vm1758, %v3437, %v3439
        %v3441 = vrot.slane %v3428, 6
        %v3442 = vsel %vm1758, %v3438, %v3441
        %v3443 = vrot.slane %v3429, 6
        %v3444 = vsel %vm1758, %v3439, %v3443
        %v3445 = vrot.slane %v3430, 6
        %v3446 = vsel %vm1758, %v3441, %v3445
        %v3453 = vadd.f32 %v3413, %v3437
        %v3454 = vadd.f32 %v3414, %v3438
        %v3455 = vadd.f32 %v3415, %v3440
        %v3456 = vadd.f32 %v3416, %v3442
        %v3457 = vadd.f32 %v3417, %v3444
        %v3458 = vadd.f32 %v3418, %v3446
        %s3459 = sld [smem:[#allocation4 + $0x5c]]
        %v3460 = vstv %s3459
        %v3461 = vmul.f32 %v3460, %v3419
        %v3462 = vmul.f32 %v3460, %v3420
        %v3463 = vmul.f32 %v3460, %v2911
        %v3464 = vmul.f32 %v3460, %v2912
        %v3465 = vmul.f32 %v3460, %v3421
        %v3466 = vmul.f32 %v3460, %v3422
        %v3473 = vrot.slane %v3461, 6
        %v3474 = vrot.slane %v3462, 6
        %v3475 = vrot.slane %v3463, 6
        %v3476 = vsel %vm1758, %v3473, %v3475
        %v3477 = vrot.slane %v3464, 6
        %v3478 = vsel %vm1758, %v3474, %v3477
        %v3479 = vrot.slane %v3465, 6
        %v3480 = vsel %vm1758, %v3475, %v3479
        %v3481 = vrot.slane %v3466, 6
        %v3482 = vsel %vm1758, %v3477, %v3481
        %3483 = vrot.lane.b32.xlu0 %v3473, 127
        %v3484 = vpop.permute.xlu0 %3483
        %3485 = vrot.lane.b32.xlu0 %v3474, 127
        %v3486 = vpop.permute.xlu0 %3485
        %3487 = vrot.lane.b32.xlu0 %v3476, 127
        %v3488 = vpop.permute.xlu0 %3487
        %3489 = vrot.lane.b32.xlu0 %v3478, 127
        %v3490 = vpop.permute.xlu0 %3489
        %3491 = vrot.lane.b32.xlu0 %v3480, 127
        %v3492 = vpop.permute.xlu0 %3491
        %3493 = vrot.lane.b32.xlu0 %v3482, 127
        %v3494 = vpop.permute.xlu0 %3493
        %v3495 = vsel %vm355, %v3484, %v3486
        %v3496 = vsel %vm355, %v3488, %v3490
        %v3497 = vsel %vm355, %v3492, %v3494
        %v3504 = vadd.f32 %v3453, %v3495
        %v3505 = vadd.f32 %v3454, %v3486
        %v3506 = vadd.f32 %v3455, %v3496
        %v3507 = vadd.f32 %v3456, %v3490
        %v3508 = vadd.f32 %v3457, %v3497
        %v3509 = vadd.f32 %v3458, %v3494
        %s3510 = sld [smem:[#allocation4 + $0x5d]]
        %v3511 = vstv %s3510
        %v3512 = vmul.f32 %v3511, %v3419
        %v3513 = vmul.f32 %v3511, %v3420
        %v3514 = vmul.f32 %v3511, %v2911
        %v3515 = vmul.f32 %v3511, %v2912
        %v3516 = vmul.f32 %v3511, %v3421
        %v3517 = vmul.f32 %v3511, %v3422
        %v3524 = vrot.slane %v3512, 6
        %v3525 = vrot.slane %v3513, 6
        %v3526 = vrot.slane %v3514, 6
        %v3527 = vsel %vm1758, %v3524, %v3526
        %v3528 = vrot.slane %v3515, 6
        %v3529 = vsel %vm1758, %v3525, %v3528
        %v3530 = vrot.slane %v3516, 6
        %v3531 = vsel %vm1758, %v3526, %v3530
        %v3532 = vrot.slane %v3517, 6
        %v3533 = vsel %vm1758, %v3528, %v3532
        %3534 = vrot.lane.b32.xlu0 %v3524, 126
        %v3535 = vpop.permute.xlu0 %3534
        %3536 = vrot.lane.b32.xlu0 %v3525, 126
        %v3537 = vpop.permute.xlu0 %3536
        %3538 = vrot.lane.b32.xlu0 %v3527, 126
        %v3539 = vpop.permute.xlu0 %3538
        %3540 = vrot.lane.b32.xlu0 %v3529, 126
        %v3541 = vpop.permute.xlu0 %3540
        %3542 = vrot.lane.b32.xlu0 %v3531, 126
        %v3543 = vpop.permute.xlu0 %3542
        %3544 = vrot.lane.b32.xlu0 %v3533, 126
        %v3545 = vpop.permute.xlu0 %3544
        %v3546 = vsel %vm397, %v3535, %v3537
        %v3547 = vsel %vm397, %v3539, %v3541
        %v3548 = vsel %vm397, %v3543, %v3545
        %v3555 = vadd.f32 %v3504, %v3546
        %v3556 = vadd.f32 %v3505, %v3537
        %v3557 = vadd.f32 %v3506, %v3547
        %v3558 = vadd.f32 %v3507, %v3541
        %v3559 = vadd.f32 %v3508, %v3548
        %v3560 = vadd.f32 %v3509, %v3545
        %s3561 = sld [smem:[#allocation4 + $0x5e]]
        %v3562 = vstv %s3561
        %v3563 = vmul.f32 %v3562, %v3420
        %v3564 = vmul.f32 %v3562, %v2912
        %v3565 = vmul.f32 %v3562, %v3422
        %v3569 = vrot.slane %v3563, 6
        %v3570 = vrot.slane %v3564, 6
        %v3571 = vsel %vm1758, %v3569, %v3570
        %v3572 = vrot.slane %v3565, 6
        %v3573 = vsel %vm1758, %v3570, %v3572
        %3574 = vrot.lane.b32.xlu0 %v3569, 125
        %v3575 = vpop.permute.xlu0 %3574
        %3576 = vrot.lane.b32.xlu0 %v3571, 125
        %v3577 = vpop.permute.xlu0 %3576
        %3578 = vrot.lane.b32.xlu0 %v3573, 125
        %v3579 = vpop.permute.xlu0 %3578
        %v3583 = vadd.f32 %v3555, %v3575
        %v3584 = vadd.f32 %v3556, %v3575
        %v3585 = vadd.f32 %v3557, %v3577
        %v3586 = vadd.f32 %v3558, %v3577
        %v3587 = vadd.f32 %v3559, %v3579
        %v3588 = vadd.f32 %v3560, %v3579
        %s3589 = sld [smem:[#allocation4 + $0x5f]]
        %v3590 = vstv %s3589
        %v3591 = vmul.f32 %v3590, %v3420
        %v3592 = vmul.f32 %v3590, %v2912
        %v3593 = vmul.f32 %v3590, %v3422
        %v3597 = vrot.slane %v3591, 6
        %v3598 = vrot.slane %v3592, 6
        %v3599 = vsel %vm1758, %v3597, %v3598
        %v3600 = vrot.slane %v3593, 6
        %v3601 = vsel %vm1758, %v3598, %v3600
        %3602 = vrot.lane.b32.xlu0 %v3597, 124
        %v3603 = vpop.permute.xlu0 %3602
        %3604 = vrot.lane.b32.xlu0 %v3599, 124
        %v3605 = vpop.permute.xlu0 %3604
        %3606 = vrot.lane.b32.xlu0 %v3601, 124
        %v3607 = vpop.permute.xlu0 %3606
        %v3611 = vadd.f32 %v3583, %v3603
        %v3612 = vadd.f32 %v3584, %v3603
        %v3613 = vadd.f32 %v3585, %v3605
        %v3614 = vadd.f32 %v3586, %v3605
        %v3615 = vadd.f32 %v3587, %v3607
        %v3616 = vadd.f32 %v3588, %v3607
        %s3617 = sld [smem:[#allocation4 + $0x60]]
        %v3618 = vstv %s3617
        %v3619 = vmul.f32 %v3618, %v3420
        %v3620 = vmul.f32 %v3618, %v2912
        %v3621 = vmul.f32 %v3618, %v3422
        %v3625 = vrot.slane %v3619, 6
        %v3626 = vrot.slane %v3620, 6
        %v3627 = vsel %vm1758, %v3625, %v3626
        %v3628 = vrot.slane %v3621, 6
        %v3629 = vsel %vm1758, %v3626, %v3628
        %3630 = vrot.lane.b32.xlu0 %v3625, 123
        %v3631 = vpop.permute.xlu0 %3630
        %3632 = vrot.lane.b32.xlu0 %v3627, 123
        %v3633 = vpop.permute.xlu0 %3632
        %3634 = vrot.lane.b32.xlu0 %v3629, 123
        %v3635 = vpop.permute.xlu0 %3634
        %v3639 = vadd.f32 %v3611, %v3631
        %v3640 = vadd.f32 %v3612, %v3631
        %v3641 = vadd.f32 %v3613, %v3633
        %v3642 = vadd.f32 %v3614, %v3633
        %v3643 = vadd.f32 %v3615, %v3635
        %v3644 = vadd.f32 %v3616, %v3635
        %s3645 = sld [smem:[#allocation4 + $0x61]]
        %v3646 = vstv %s3645
        %v3647 = vmul.f32 %v3646, %v3420
        %v3648 = vmul.f32 %v3646, %v2912
        %v3649 = vmul.f32 %v3646, %v3422
        %v3653 = vrot.slane %v3647, 6
        %v3654 = vrot.slane %v3648, 6
        %v3655 = vsel %vm1758, %v3653, %v3654
        %v3656 = vrot.slane %v3649, 6
        %v3657 = vsel %vm1758, %v3654, %v3656
        %3658 = vrot.lane.b32.xlu0 %v3653, 122
        %v3659 = vpop.permute.xlu0 %3658
        %3660 = vrot.lane.b32.xlu0 %v3655, 122
        %v3661 = vpop.permute.xlu0 %3660
        %3662 = vrot.lane.b32.xlu0 %v3657, 122
        %v3663 = vpop.permute.xlu0 %3662
        %v3667 = vadd.f32 %v3639, %v3659
        %v3668 = vadd.f32 %v3640, %v3659
        %v3669 = vadd.f32 %v3641, %v3661
        %v3670 = vadd.f32 %v3642, %v3661
        %v3671 = vadd.f32 %v3643, %v3663
        %v3672 = vadd.f32 %v3644, %v3663
        %v3673 = vxor.u32 %v3667, 2147483648
        %v3674 = vxor.u32 %v3668, 2147483648
        %v3675 = vxor.u32 %v3669, 2147483648
        %v3676 = vxor.u32 %v3670, 2147483648
        %v3677 = vxor.u32 %v3671, 2147483648
        %v3678 = vxor.u32 %v3672, 2147483648
        %v3679 = vmul.f32 %v3673, 1.442695
        %v3680 = vpow.pop %v3679
        %v3681 = vmul.f32 %v3674, 1.442695
        %v3682 = vpow.pop %v3681
        %v3683 = vmul.f32 %v3675, 1.442695
        %v3684 = vpow.pop %v3683
        %v3685 = vmul.f32 %v3676, 1.442695
        %v3686 = vpow.pop %v3685
        %v3687 = vmul.f32 %v3677, 1.442695
        %v3688 = vpow.pop %v3687
        %v3689 = vmul.f32 %v3678, 1.442695
        %v3690 = vpow.pop %v3689
        %v3691 = vadd.f32 %v3680, 1.0
        %v3692 = vadd.f32 %v3682, 1.0
        %v3693 = vadd.f32 %v3684, 1.0
        %v3694 = vadd.f32 %v3686, 1.0
        %v3695 = vadd.f32 %v3688, 1.0
        %v3696 = vadd.f32 %v3690, 1.0
        %v3697 = vrcp.pop %v3691
        %v3698 = vmul.f32 1.0, %v3697
        %v3699 = vrcp.pop %v3692
        %v3700 = vmul.f32 1.0, %v3699
        %v3701 = vrcp.pop %v3693
        %v3702 = vmul.f32 1.0, %v3701
        %v3703 = vrcp.pop %v3694
        %v3704 = vmul.f32 1.0, %v3703
        %v3705 = vrcp.pop %v3695
        %v3706 = vmul.f32 1.0, %v3705
        %v3707 = vrcp.pop %v3696
        %v3708 = vmul.f32 1.0, %v3707
        %v3715 = vrot.slane %v3698, 5
        %v3716 = vrot.slane %v3702, 5
        %v3717 = vsel %vm1503, %v3715, %v3716
        %v3718 = vrot.slane %v3700, 5
        %v3719 = vrot.slane %v3704, 5
        %v3720 = vsel %vm1503, %v3718, %v3719
        %v3721 = vrot.slane %v3706, 5
        %v3722 = vsel %vm1503, %v3716, %v3721
        %v3723 = vrot.slane %v3708, 5
        %v3724 = vsel %vm1503, %v3719, %v3723
        %3725 = vrot.lane.b32.xlu0 %v3717, 3
        %v3726 = vpop.permute.xlu0 %3725
        %3727 = vrot.lane.b32.xlu0 %v3720, 3
        %v3728 = vpop.permute.xlu0 %3727
        %3729 = vrot.lane.b32.xlu0 %v3722, 3
        %v3730 = vpop.permute.xlu0 %3729
        %3731 = vrot.lane.b32.xlu0 %v3724, 3
        %v3732 = vpop.permute.xlu0 %3731
        %vm3733 = vcmask 23552
        %v3734 = vsel %vm3733, %v3726, %v3728
        %v3735 = vsel %vm3733, %v3730, %v3732
        %v3738 = vmul.f32 %v204, %v3734
        %v3739 = vmul.f32 %v205, %v3735
        %v3740 = vmul.f32 %v206, %v3734
        %v3741 = vmul.f32 %v207, %v3735
        %v3742 = vmul.f32 %v208, %v3734
        %v3743 = vmul.f32 %v209, %v3735
        %v3744 = vmul.f32 %v210, %v3734
        %v3745 = vmul.f32 %v211, %v3735
        %v3746 = vmul.f32 %v212, %v3734
        %v3747 = vmul.f32 %v213, %v3735
        %v3748 = vmul.f32 %v214, %v3734
        %v3749 = vmul.f32 %v215, %v3735
        %v3750 = vmul.f32 %v216, %v3734
        %v3751 = vmul.f32 %v217, %v3735
        %v3752 = vmul.f32 %v218, %v3734
        %v3753 = vmul.f32 %v219, %v3735
        %3754 = vst.msk [vmem:[%s203] sm:$0xff] %vm220, %v3738
        %3755 = vst.msk [vmem:[%s203 + $0x8] sm:$0xff] %vm220, %v3739
        %3756 = vst.msk [vmem:[%s203 + $0x10] sm:$0xff] %vm220, %v3740
        %3757 = vst.msk [vmem:[%s203 + $0x18] sm:$0xff] %vm220, %v3741
        %3758 = vst.msk [vmem:[%s203 + $0x20] sm:$0xff] %vm220, %v3742
        %3759 = vst.msk [vmem:[%s203 + $0x28] sm:$0xff] %vm220, %v3743
        %3760 = vst.msk [vmem:[%s203 + $0x30] sm:$0xff] %vm220, %v3744
        %3761 = vst.msk [vmem:[%s203 + $0x38] sm:$0xff] %vm220, %v3745
        %3762 = vst.msk [vmem:[%s203 + $0x40] sm:$0xff] %vm220, %v3746
        %3763 = vst.msk [vmem:[%s203 + $0x48] sm:$0xff] %vm220, %v3747
        %3764 = vst.msk [vmem:[%s203 + $0x50] sm:$0xff] %vm220, %v3748
        %3765 = vst.msk [vmem:[%s203 + $0x58] sm:$0xff] %vm220, %v3749
        %3766 = vst.msk [vmem:[%s203 + $0x60] sm:$0xff] %vm220, %v3750
        %3767 = vst.msk [vmem:[%s203 + $0x68] sm:$0xff] %vm220, %v3751
        %3768 = vst.msk [vmem:[%s203 + $0x70] sm:$0xff] %vm220, %v3752
        %3769 = vst.msk [vmem:[%s203 + $0x78] sm:$0xff] %vm220, %v3753
        %s3770 = sand.u32 %s98, 1
        %s3771 = scalar_lea.sflag [#allocation6], %s3770
        %s3772 = sand.u32 %s98, 1
        %s3773 = smul.addr %s3772, 128
        %s3774 = scalar_lea.vmem [#allocation9], %s3773
        // Predicated region
        $region41: #{spatial_gate.1} parent=31 // pred_check
          %p3775 = pneg %p108
        $region42: #{spatial_gate.1} parent=31 // pred_check_branch
          %3777 = sbr.rel (%p3775) target = $region44
        $region43: #{spatial_gate.1} parent=31 // pred_region
          %s3779 = ssub.s32 2048, 2048
          %3780 = vsyncadd %s3771, %s3779
          %s3781 = smul.addr %s22, 16
          %s3782 = smul.addr %s3781, 128
          %s3783 = scalar_lea.hbm %s3, %s3782
          %s3784 = sshll.u32 %s3774, 4
          %s3785 = int_to_ptr.vmem [resolvable:$true] %s3784
          %3790 = dma.vmem_to_hbm [thread:$0]  %s3785, 2048, %s3783, %s3771, 128, 128, 8
        $region44: #{spatial_gate.1} parent=31 // pred_fallthru
          _
      $region32: #{spatial_gate.1} parent=5 // pred_fallthru
        _
      %p3791 = scmp.le.s32.totalorder 2, %s17
      // Predicated region
      $region45: #{spatial_gate.1} parent=5 // pred_check
        %p3792 = pneg %p3791
      $region46: #{spatial_gate.1} parent=5 // pred_check_branch
        %3794 = sbr.rel (%p3792) target = $region48
      $region47: #{spatial_gate.1} parent=5 // pred_region
        %s3795 = ssub.s32 %s17, 2
        // Predicated region
        $region49: #{spatial_gate.1} parent=47 // pred_check
          %p3796 = pneg %p114
        $region50: #{spatial_gate.1} parent=47 // pred_check_branch
          %3798 = sbr.rel (%p3796) target = $region52
        $region51: #{spatial_gate.1} parent=47 // pred_region
          %s3799 = sand.u32 %s99, 1
          %s3800 = scalar_lea.sflag [#allocation6], %s3799
          %s3801 = sand.u32 %s99, 1
          %s3802 = smul.addr %s3801, 128
          %s3803 = scalar_lea.vmem [#allocation9], %s3802
          %3804 = dma.done %s3800, 2048
        $region52: #{spatial_gate.1} parent=47 // pred_fallthru
          _
      $region48: #{spatial_gate.1} parent=5 // pred_fallthru
        _
    $region6: #{spatial_gate.1} parent=1 // loop_footer
      %s21 = sadd.s32 1, %s17
    $region7: #{spatial_gate.1} parent=1 // loop_footer_branch
      %16 = sbr.rel target = $region3
    $region8: #{spatial_gate.1} parent=1 // loop_exit
      _
    %3805 = vsyncpa [#allocation5], 1
    %s3806 = scalar_lea.sflag [#allocation5], 1
    %3807 = vsyncpa %s3806, 1
    %3808 = vsyncpa [#allocation6], 1
    %s3809 = scalar_lea.sflag [#allocation6], 1
    %3810 = vsyncpa %s3809, 1
    %3811 = vsyncpa [#allocation7], 1
    %s3812 = scalar_lea.sflag [#allocation7], 1
    %3813 = vsyncpa %s3812, 1

</llo_original>
